<compile_context>
chip_gen: v7x
topology: tpu7x:2x2x1
jax: 0.10.0
libtpu: 0.0.40
codegen_flags: <defaults>
</compile_context>

<pallas_src>
import math

import jax
import jax.numpy as jnp
from jax.experimental import pallas as pl
from jax.experimental.pallas import tpu as pltpu


def _round_up(n, m):
    return ((n + m - 1) // m) * m


# ---------------------------------------------------------------------------
# Fused kernel
# ---------------------------------------------------------------------------

def make_fused_gru_kernel(num_layers, T, B, Bp, H, O, compute_dtype=jnp.bfloat16):
    """Builds the fused GRU(+FC) kernel.

    Ref layout (inputs, in order):
      x2      : (T*Bp, F0)        time-major, batch padded to Bp, flattened
      per layer l:
        wih_l : (3, F_in, H)      bf16, gate-major, pre-transposed
        whh_l : (3, H, H)         bf16, gate-major, pre-transposed
        bi_l  : (3, 1, H)         f32, [b_ih_r+b_hh_r, b_ih_z+b_hh_z, b_ih_n]
        bhn_l : (1, H)            f32, b_hh_n (sits inside the r-gated term)
      fc_w    : (H, O)            bf16, pre-transposed
      fc_b    : (1, O)            f32
    Output:
      out     : (B, O)            f32
    Scratch:
      gi0_scr : (3, T*Bp, H)      f32, hoisted layer-0 input projection
    """

    def kernel(*refs):
        x_ref = refs[0]
        layer_refs = [refs[1 + 4 * l: 1 + 4 * (l + 1)] for l in range(num_layers)]
        fcw_ref = refs[1 + 4 * num_layers]
        fcb_ref = refs[2 + 4 * num_layers]
        out_ref = refs[3 + 4 * num_layers]
        gi0_scr = refs[4 + 4 * num_layers]

        # ---- prologue: hoisted layer-0 input projection (one big matmul per gate) ----
        x2 = x_ref[...].astype(compute_dtype)                 # (T*Bp, F0)
        wih0, _, bi0, _ = layer_refs[0]
        for g in range(3):
            gi0_scr[g] = (
                jnp.dot(x2, wih0[g], preferred_element_type=jnp.float32) + bi0[g]
            )

        # Hoist bias broadcasts out of the recurrence (no per-step broadcast_in_dim).
        bias_i = []
        bias_hn = []
        for l in range(num_layers):
            _, _, bi, bhn = layer_refs[l]
            if l == 0:
                bias_i.append(None)  # already folded into gi0_scr
            else:
                bias_i.append(tuple(jnp.broadcast_to(bi[g], (Bp, H)) for g in range(3)))
            bias_hn.append(jnp.broadcast_to(bhn[...], (Bp, H)))

        def step(t, hs):
            row = pl.multiple_of(t * Bp, Bp)   # Bp is a multiple of 8 -> aligned slice
            new_hs = []
            for l in range(num_layers):
                wih, whh, _, _ = layer_refs[l]
                h_prev = hs[l]                                  # (Bp, H) f32
                h_c = h_prev.astype(compute_dtype)

                if l == 0:
                    gi_r = gi0_scr[0, pl.ds(row, Bp), :]
                    gi_z = gi0_scr[1, pl.ds(row, Bp), :]
                    gi_n = gi0_scr[2, pl.ds(row, Bp), :]
                else:
                    x_in = new_hs[l - 1].astype(compute_dtype)
                    gi_r = jnp.dot(x_in, wih[0], preferred_element_type=jnp.float32) + bias_i[l][0]
                    gi_z = jnp.dot(x_in, wih[1], preferred_element_type=jnp.float32) + bias_i[l][1]
                    gi_n = jnp.dot(x_in, wih[2], preferred_element_type=jnp.float32) + bias_i[l][2]

                gh_r = jnp.dot(h_c, whh[0], preferred_element_type=jnp.float32)
                gh_z = jnp.dot(h_c, whh[1], preferred_element_type=jnp.float32)
                gh_n = jnp.dot(h_c, whh[2], preferred_element_type=jnp.float32)

                # PyTorch GRU: r, z, n gates; b_hh_n lives inside the r-gated term.
                r = jax.nn.sigmoid(gi_r + gh_r)
                z = jax.nn.sigmoid(gi_z + gh_z)
                n = jnp.tanh(gi_n + r * (gh_n + bias_hn[l]))
                new_hs.append((1.0 - z) * n + z * h_prev)
            return tuple(new_hs)

        hs0 = tuple(jnp.zeros((Bp, H), jnp.float32) for _ in range(num_layers))
        hs = jax.lax.fori_loop(0, T, step, hs0, unroll=(T <= 16))

        # ---- epilogue: fused final Linear on the last timestep's hidden state ----
        # (self.dropout is identity in eval mode)
        h_last = hs[num_layers - 1].astype(compute_dtype)
        fc = jnp.dot(h_last, fcw_ref[...], preferred_element_type=jnp.float32) + fcb_ref[...]
        out_ref[...] = fc[:B, :].astype(out_ref.dtype)

    return kernel


# ---------------------------------------------------------------------------
# Wrapper
# ---------------------------------------------------------------------------

@jax.jit
def gru_forward(x_btf, packed):
    """x_btf: (B, T, input_size) in PyTorch batch_first layout -> (B, output_size)."""
    B, T, F = x_btf.shape
    num_layers = len(packed["layers"])
    H = packed["layers"][0][1].shape[-1]
    O = packed["fc_w_t"].shape[-1]
    Bp = _round_up(B, 8)

    # Time-major + pad batch to the 8-sublane granule, then flatten to 2D so the
    # hoisted input projection is a single natural (T*Bp, F) @ (F, H) matmul.
    # TODO(synk): this tiny (B,T,F)->(T,B,F) transpose could be folded into the
    # hoisted projection to save one HBM pass over the input.
    x = jnp.transpose(x_btf, (1, 0, 2)).astype(jnp.float32)   # (T, B, F)
    if Bp != B:
        x = jnp.pad(x, ((0, 0), (0, Bp - B), (0, 0)))
    x2 = x.reshape(T * Bp, F)

    kernel = make_fused_gru_kernel(num_layers, T, B, Bp, H, O)

    inputs = [x2]
    for layer in packed["layers"]:
        inputs.extend(layer)
    inputs.extend([packed["fc_w_t"], packed["fc_b"]])

    return pl.pallas_call(
        kernel,
        out_shape=jax.ShapeDtypeStruct((B, O), jnp.float32),
        scratch_shapes=[pltpu.VMEM((3, T * Bp, H), jnp.float32)],
    )(*inputs)


# ---------------------------------------------------------------------------
# Parameter init (mirrors the PyTorch init scheme) and one-time packing
# ---------------------------------------------------------------------------

def xavier_uniform(key, shape, gain=1.0):
    fan_out, fan_in = shape
    bound = gain * math.sqrt(6.0 / (fan_in + fan_out))
    return jax.random.uniform(key, shape, jnp.float32, -bound, bound)


def kaiming_uniform(key, shape):
    # nonlinearity='relu' -> gain = sqrt(2); bound = gain * sqrt(3 / fan_in)
    _, fan_in = shape
    bound = math.sqrt(2.0) * math.sqrt(3.0 / fan_in)
    return jax.random.uniform(key, shape, jnp.float32, -bound, bound)


def init_params(key, input_size, hidden_size, num_layers, output_size):
    params = {"layers": []}
    for layer in range(num_layers):
        in_f = input_size if layer == 0 else hidden_size
        key, k1, k2 = jax.random.split(key, 3)
        w_ih = xavier_uniform(k1, (3 * hidden_size, in_f))           # (3H, F_in)
        w_hh = kaiming_uniform(k2, (3 * hidden_size, hidden_size))   # (3H, H)
        b_ih = jnp.zeros((3 * hidden_size,), jnp.float32)
        b_hh = jnp.zeros((3 * hidden_size,), jnp.float32)
        params["layers"].append((w_ih, w_hh, b_ih, b_hh))
    key, k1, k2 = jax.random.split(key, 3)
    fc_bound = 1.0 / math.sqrt(hidden_size)   # PyTorch default Linear init
    params["fc_w"] = jax.random.uniform(
        k1, (output_size, hidden_size), jnp.float32, -fc_bound, fc_bound)
    params["fc_b"] = jax.random.uniform(
        k2, (output_size,), jnp.float32, -fc_bound, fc_bound)
    return params


def pack_params(params, compute_dtype=jnp.bfloat16):
    """One-time pre-transpose / gate-major packing / bias folding / bf16 cast."""
    H = params["layers"][0][1].shape[1]
    layers = []
    for (w_ih, w_hh, b_ih, b_hh) in params["layers"]:
        f_in = w_ih.shape[1]
        wih = jnp.transpose(w_ih.reshape(3, H, f_in), (0, 2, 1)).astype(compute_dtype)  # (3,F,H)
        whh = jnp.transpose(w_hh.reshape(3, H, H), (0, 2, 1)).astype(compute_dtype)     # (3,H,H)
        bi3 = b_ih.reshape(3, 1, H)
        bh3 = b_hh.reshape(3, 1, H)
        # Fold b_hh_{r,z} into the input-side bias; keep b_hh_n separate (inside r*(...)).
        bi = jnp.concatenate(
            [bi3[0:1] + bh3[0:1], bi3[1:2] + bh3[1:2], bi3[2:3]], axis=0
        ).astype(jnp.float32)                                                            # (3,1,H)
        bhn = bh3[2].astype(jnp.float32)                                                 # (1,H)
        layers.append((wih, whh, bi, bhn))
    return {
        "layers": layers,
        "fc_w_t": jnp.transpose(params["fc_w"]).astype(compute_dtype),                  # (H,O)
        "fc_b": params["fc_b"].reshape(1, -1).astype(jnp.float32),                      # (1,O)
    }


# ---------------------------------------------------------------------------
# Pure-JAX reference (PyTorch GRU semantics) for a correctness check
# ---------------------------------------------------------------------------

def gru_forward_ref(x_btf, params):
    x = x_btf.astype(jnp.float32)
    B, T, _ = x.shape
    H = params["layers"][0][1].shape[1]
    h_seq = x
    for (w_ih, w_hh, b_ih, b_hh) in params["layers"]:
        h = jnp.zeros((B, H), jnp.float32)
        outs = []
        for t in range(T):
            xt = h_seq[:, t, :]
            gi = xt @ w_ih.T + b_ih
            gh = h @ w_hh.T + b_hh
            i_r, i_z, i_n = jnp.split(gi, 3, axis=1)
            h_r, h_z, h_n = jnp.split(gh, 3, axis=1)
            r = jax.nn.sigmoid(i_r + h_r)
            z = jax.nn.sigmoid(i_z + h_z)
            n = jnp.tanh(i_n + r * h_n)
            h = (1.0 - z) * n + z * h
            outs.append(h)
        h_seq = jnp.stack(outs, axis=1)
    last = h_seq[:, -1, :]
    return last @ params["fc_w"].T + params["fc_b"]


if __name__ == "__main__":
    input_size = 4
    hidden_size = 32
    num_layers = 2
    output_size = 3
    batch = 2
    seq = 8

    key = jax.random.PRNGKey(0)
    kx, kp = jax.random.split(key)
    x = jax.random.normal(kx, (batch, seq, input_size), jnp.float32)
    params = init_params(kp, input_size, hidden_size, num_layers, output_size)
    packed = pack_params(params)

    out = gru_forward(x, packed)
    jax.block_until_ready(out)
    assert out.shape == (batch, output_size)

    ref = gru_forward_ref(x, params)
    max_err = float(jnp.max(jnp.abs(out - ref)))
    assert max_err < 5e-2, f"max abs error vs reference too large: {max_err}"

    print("KERNEL_OK")
</pallas_src>

<mosaic_0001>
module attributes {stable_mosaic.version = 11 : i64} {
  func.func @kernel(%arg0: memref<64x4xf32, #tpu.memory_space<vmem>>, %arg1: memref<3x4x32xbf16, #tpu.memory_space<vmem>>, %arg2: memref<3x32x32xbf16, #tpu.memory_space<vmem>>, %arg3: memref<3x1x32xf32, #tpu.memory_space<vmem>>, %arg4: memref<1x32xf32, #tpu.memory_space<vmem>>, %arg5: memref<3x32x32xbf16, #tpu.memory_space<vmem>>, %arg6: memref<3x32x32xbf16, #tpu.memory_space<vmem>>, %arg7: memref<3x1x32xf32, #tpu.memory_space<vmem>>, %arg8: memref<1x32xf32, #tpu.memory_space<vmem>>, %arg9: memref<32x3xbf16, #tpu.memory_space<vmem>>, %arg10: memref<1x3xf32, #tpu.memory_space<vmem>>, %arg11: memref<2x3xf32, #tpu.memory_space<vmem>>, %arg12: memref<3x64x32xf32, #tpu.memory_space<vmem>>) attributes {dimension_semantics = [], scalar_prefetch = 0 : i64, scratch_operands = 1 : i64, tpu.core_type = #tpu.core_type<tc>} {
    %c0 = arith.constant 0 : index
    %c0_0 = arith.constant 0 : index
    %0 = vector.load %arg0[%c0, %c0_0] : memref<64x4xf32, #tpu.memory_space<vmem>>, vector<64x4xf32>
    %1 = arith.truncf %0 : vector<64x4xf32> to vector<64x4xbf16>
    %c0_1 = arith.constant 0 : index
    %c0_2 = arith.constant 0 : index
    %c0_3 = arith.constant 0 : index
    %2 = vector.load %arg1[%c0_1, %c0_2, %c0_3] : memref<3x4x32xbf16, #tpu.memory_space<vmem>>, vector<1x4x32xbf16>
    %3 = vector.shape_cast %2 : vector<1x4x32xbf16> to vector<4x32xbf16>
    %cst = arith.constant dense<0.000000e+00> : vector<64x32xf32>
    %4 = tpu.matmul %1, %3, %cst {dimension_numbers = #tpu.dot_dimension_numbers<[1], [0], [0], [1], [0, 0, 1, 1], [], []>} : vector<64x4xbf16>, vector<4x32xbf16>, vector<64x32xf32> -> vector<64x32xf32>
    %c0_4 = arith.constant 0 : index
    %c0_5 = arith.constant 0 : index
    %c0_6 = arith.constant 0 : index
    %5 = vector.load %arg3[%c0_4, %c0_5, %c0_6] : memref<3x1x32xf32, #tpu.memory_space<vmem>>, vector<1x1x32xf32>
    %6 = vector.shape_cast %5 : vector<1x1x32xf32> to vector<1x32xf32>
    %7 = vector.broadcast %6 : vector<1x32xf32> to vector<64x32xf32>
    %8 = arith.addf %4, %7 : vector<64x32xf32>
    %c0_7 = arith.constant 0 : index
    %c0_8 = arith.constant 0 : index
    %c0_9 = arith.constant 0 : index
    %9 = vector.load %arg12[%c0_7, %c0_8, %c0_9] : memref<3x64x32xf32, #tpu.memory_space<vmem>>, vector<1x64x32xf32>
    %10 = vector.shape_cast %9 : vector<1x64x32xf32> to vector<64x32xf32>
    %11 = vector.shape_cast %8 : vector<64x32xf32> to vector<1x64x32xf32>
    tpu.vector_store %arg12[%c0_7, %c0_8, %c0_9], %11 {strides = array<i32>} : memref<3x64x32xf32, #tpu.memory_space<vmem>>, vector<1x64x32xf32>,
    %c1 = arith.constant 1 : index
    %c0_10 = arith.constant 0 : index
    %c0_11 = arith.constant 0 : index
    %12 = vector.load %arg1[%c1, %c0_10, %c0_11] : memref<3x4x32xbf16, #tpu.memory_space<vmem>>, vector<1x4x32xbf16>
    %13 = vector.shape_cast %12 : vector<1x4x32xbf16> to vector<4x32xbf16>
    %cst_12 = arith.constant dense<0.000000e+00> : vector<64x32xf32>
    %14 = tpu.matmul %1, %13, %cst_12 {dimension_numbers = #tpu.dot_dimension_numbers<[1], [0], [0], [1], [0, 0, 1, 1], [], []>} : vector<64x4xbf16>, vector<4x32xbf16>, vector<64x32xf32> -> vector<64x32xf32>
    %c1_13 = arith.constant 1 : index
    %c0_14 = arith.constant 0 : index
    %c0_15 = arith.constant 0 : index
    %15 = vector.load %arg3[%c1_13, %c0_14, %c0_15] : memref<3x1x32xf32, #tpu.memory_space<vmem>>, vector<1x1x32xf32>
    %16 = vector.shape_cast %15 : vector<1x1x32xf32> to vector<1x32xf32>
    %17 = vector.broadcast %16 : vector<1x32xf32> to vector<64x32xf32>
    %18 = arith.addf %14, %17 : vector<64x32xf32>
    %c1_16 = arith.constant 1 : index
    %c0_17 = arith.constant 0 : index
    %c0_18 = arith.constant 0 : index
    %19 = vector.load %arg12[%c1_16, %c0_17, %c0_18] : memref<3x64x32xf32, #tpu.memory_space<vmem>>, vector<1x64x32xf32>
    %20 = vector.shape_cast %19 : vector<1x64x32xf32> to vector<64x32xf32>
    %21 = vector.shape_cast %18 : vector<64x32xf32> to vector<1x64x32xf32>
    tpu.vector_store %arg12[%c1_16, %c0_17, %c0_18], %21 {strides = array<i32>} : memref<3x64x32xf32, #tpu.memory_space<vmem>>, vector<1x64x32xf32>,
    %c2 = arith.constant 2 : index
    %c0_19 = arith.constant 0 : index
    %c0_20 = arith.constant 0 : index
    %22 = vector.load %arg1[%c2, %c0_19, %c0_20] : memref<3x4x32xbf16, #tpu.memory_space<vmem>>, vector<1x4x32xbf16>
    %23 = vector.shape_cast %22 : vector<1x4x32xbf16> to vector<4x32xbf16>
    %cst_21 = arith.constant dense<0.000000e+00> : vector<64x32xf32>
    %24 = tpu.matmul %1, %23, %cst_21 {dimension_numbers = #tpu.dot_dimension_numbers<[1], [0], [0], [1], [0, 0, 1, 1], [], []>} : vector<64x4xbf16>, vector<4x32xbf16>, vector<64x32xf32> -> vector<64x32xf32>
    %c2_22 = arith.constant 2 : index
    %c0_23 = arith.constant 0 : index
    %c0_24 = arith.constant 0 : index
    %25 = vector.load %arg3[%c2_22, %c0_23, %c0_24] : memref<3x1x32xf32, #tpu.memory_space<vmem>>, vector<1x1x32xf32>
    %26 = vector.shape_cast %25 : vector<1x1x32xf32> to vector<1x32xf32>
    %27 = vector.broadcast %26 : vector<1x32xf32> to vector<64x32xf32>
    %28 = arith.addf %24, %27 : vector<64x32xf32>
    %c2_25 = arith.constant 2 : index
    %c0_26 = arith.constant 0 : index
    %c0_27 = arith.constant 0 : index
    %29 = vector.load %arg12[%c2_25, %c0_26, %c0_27] : memref<3x64x32xf32, #tpu.memory_space<vmem>>, vector<1x64x32xf32>
    %30 = vector.shape_cast %29 : vector<1x64x32xf32> to vector<64x32xf32>
    %31 = vector.shape_cast %28 : vector<64x32xf32> to vector<1x64x32xf32>
    tpu.vector_store %arg12[%c2_25, %c0_26, %c0_27], %31 {strides = array<i32>} : memref<3x64x32xf32, #tpu.memory_space<vmem>>, vector<1x64x32xf32>,
    %c0_28 = arith.constant 0 : index
    %c0_29 = arith.constant 0 : index
    %32 = vector.load %arg4[%c0_28, %c0_29] : memref<1x32xf32, #tpu.memory_space<vmem>>, vector<1x32xf32>
    %33 = vector.shape_cast %32 : vector<1x32xf32> to vector<1x32xf32>
    %34 = vector.broadcast %33 : vector<1x32xf32> to vector<8x32xf32>
    %c0_30 = arith.constant 0 : index
    %c0_31 = arith.constant 0 : index
    %c0_32 = arith.constant 0 : index
    %35 = vector.load %arg7[%c0_30, %c0_31, %c0_32] : memref<3x1x32xf32, #tpu.memory_space<vmem>>, vector<1x1x32xf32>
    %36 = vector.shape_cast %35 : vector<1x1x32xf32> to vector<1x32xf32>
    %37 = vector.shape_cast %36 : vector<1x32xf32> to vector<1x32xf32>
    %38 = vector.broadcast %37 : vector<1x32xf32> to vector<8x32xf32>
    %c1_33 = arith.constant 1 : index
    %c0_34 = arith.constant 0 : index
    %c0_35 = arith.constant 0 : index
    %39 = vector.load %arg7[%c1_33, %c0_34, %c0_35] : memref<3x1x32xf32, #tpu.memory_space<vmem>>, vector<1x1x32xf32>
    %40 = vector.shape_cast %39 : vector<1x1x32xf32> to vector<1x32xf32>
    %41 = vector.shape_cast %40 : vector<1x32xf32> to vector<1x32xf32>
    %42 = vector.broadcast %41 : vector<1x32xf32> to vector<8x32xf32>
    %c2_36 = arith.constant 2 : index
    %c0_37 = arith.constant 0 : index
    %c0_38 = arith.constant 0 : index
    %43 = vector.load %arg7[%c2_36, %c0_37, %c0_38] : memref<3x1x32xf32, #tpu.memory_space<vmem>>, vector<1x1x32xf32>
    %44 = vector.shape_cast %43 : vector<1x1x32xf32> to vector<1x32xf32>
    %45 = vector.shape_cast %44 : vector<1x32xf32> to vector<1x32xf32>
    %46 = vector.broadcast %45 : vector<1x32xf32> to vector<8x32xf32>
    %c0_39 = arith.constant 0 : index
    %c0_40 = arith.constant 0 : index
    %47 = vector.load %arg8[%c0_39, %c0_40] : memref<1x32xf32, #tpu.memory_space<vmem>>, vector<1x32xf32>
    %48 = vector.shape_cast %47 : vector<1x32xf32> to vector<1x32xf32>
    %49 = vector.broadcast %48 : vector<1x32xf32> to vector<8x32xf32>
    %cst_41 = arith.constant 0.000000e+00 : f32
    %50 = vector.broadcast %cst_41 : f32 to vector<8x32xf32>
    %cst_42 = arith.constant 0.000000e+00 : f32
    %51 = vector.broadcast %cst_42 : f32 to vector<8x32xf32>
    %c0_i32 = arith.constant 0 : i32
    %c8_i32 = arith.constant 8 : i32
    %52 = arith.muli %c0_i32, %c8_i32 : i32
    %53 = tpu.assume_multiple %52, 8 : i32
    %54 = arith.truncf %50 : vector<8x32xf32> to vector<8x32xbf16>
    %c0_43 = arith.constant 0 : index
    %55 = arith.index_cast %53 : i32 to index
    %c0_44 = arith.constant 0 : index
    %56 = vector.load %arg12[%c0_43, %55, %c0_44] : memref<3x64x32xf32, #tpu.memory_space<vmem>>, vector<1x8x32xf32>
    %57 = vector.shape_cast %56 : vector<1x8x32xf32> to vector<8x32xf32>
    %c1_45 = arith.constant 1 : index
    %58 = arith.index_cast %53 : i32 to index
    %c0_46 = arith.constant 0 : index
    %59 = vector.load %arg12[%c1_45, %58, %c0_46] : memref<3x64x32xf32, #tpu.memory_space<vmem>>, vector<1x8x32xf32>
    %60 = vector.shape_cast %59 : vector<1x8x32xf32> to vector<8x32xf32>
    %c2_47 = arith.constant 2 : index
    %61 = arith.index_cast %53 : i32 to index
    %c0_48 = arith.constant 0 : index
    %62 = vector.load %arg12[%c2_47, %61, %c0_48] : memref<3x64x32xf32, #tpu.memory_space<vmem>>, vector<1x8x32xf32>
    %63 = vector.shape_cast %62 : vector<1x8x32xf32> to vector<8x32xf32>
    %c0_49 = arith.constant 0 : index
    %c0_50 = arith.constant 0 : index
    %c0_51 = arith.constant 0 : index
    %64 = vector.load %arg2[%c0_49, %c0_50, %c0_51] : memref<3x32x32xbf16, #tpu.memory_space<vmem>>, vector<1x32x32xbf16>
    %65 = vector.shape_cast %64 : vector<1x32x32xbf16> to vector<32x32xbf16>
    %cst_52 = arith.constant dense<0.000000e+00> : vector<8x32xf32>
    %66 = tpu.matmul %54, %65, %cst_52 {dimension_numbers = #tpu.dot_dimension_numbers<[1], [0], [0], [1], [0, 0, 1, 1], [], []>} : vector<8x32xbf16>, vector<32x32xbf16>, vector<8x32xf32> -> vector<8x32xf32>
    %c1_53 = arith.constant 1 : index
    %c0_54 = arith.constant 0 : index
    %c0_55 = arith.constant 0 : index
    %67 = vector.load %arg2[%c1_53, %c0_54, %c0_55] : memref<3x32x32xbf16, #tpu.memory_space<vmem>>, vector<1x32x32xbf16>
    %68 = vector.shape_cast %67 : vector<1x32x32xbf16> to vector<32x32xbf16>
    %cst_56 = arith.constant dense<0.000000e+00> : vector<8x32xf32>
    %69 = tpu.matmul %54, %68, %cst_56 {dimension_numbers = #tpu.dot_dimension_numbers<[1], [0], [0], [1], [0, 0, 1, 1], [], []>} : vector<8x32xbf16>, vector<32x32xbf16>, vector<8x32xf32> -> vector<8x32xf32>
    %c2_57 = arith.constant 2 : index
    %c0_58 = arith.constant 0 : index
    %c0_59 = arith.constant 0 : index
    %70 = vector.load %arg2[%c2_57, %c0_58, %c0_59] : memref<3x32x32xbf16, #tpu.memory_space<vmem>>, vector<1x32x32xbf16>
    %71 = vector.shape_cast %70 : vector<1x32x32xbf16> to vector<32x32xbf16>
    %cst_60 = arith.constant dense<0.000000e+00> : vector<8x32xf32>
    %72 = tpu.matmul %54, %71, %cst_60 {dimension_numbers = #tpu.dot_dimension_numbers<[1], [0], [0], [1], [0, 0, 1, 1], [], []>} : vector<8x32xbf16>, vector<32x32xbf16>, vector<8x32xf32> -> vector<8x32xf32>
    %73 = arith.addf %57, %66 : vector<8x32xf32>
    %74 = arith.negf %73 : vector<8x32xf32>
    %75 = math.exp %74 : vector<8x32xf32>
    %cst_61 = arith.constant 1.000000e+00 : f32
    %76 = vector.broadcast %cst_61 : f32 to vector<8x32xf32>
    %77 = arith.addf %76, %75 : vector<8x32xf32>
    %78 = arith.divf %76, %77 : vector<8x32xf32>
    %79 = arith.addf %60, %69 : vector<8x32xf32>
    %80 = arith.negf %79 : vector<8x32xf32>
    %81 = math.exp %80 : vector<8x32xf32>
    %cst_62 = arith.constant 1.000000e+00 : f32
    %82 = vector.broadcast %cst_62 : f32 to vector<8x32xf32>
    %83 = arith.addf %82, %81 : vector<8x32xf32>
    %84 = arith.divf %82, %83 : vector<8x32xf32>
    %85 = arith.addf %72, %34 : vector<8x32xf32>
    %86 = arith.mulf %78, %85 : vector<8x32xf32>
    %87 = arith.addf %63, %86 : vector<8x32xf32>
    %88 = math.tanh %87 : vector<8x32xf32>
    %cst_63 = arith.constant 1.000000e+00 : f32
    %89 = vector.broadcast %cst_63 : f32 to vector<8x32xf32>
    %90 = arith.subf %89, %84 : vector<8x32xf32>
    %91 = arith.mulf %90, %88 : vector<8x32xf32>
    %92 = arith.mulf %84, %50 : vector<8x32xf32>
    %93 = arith.addf %91, %92 : vector<8x32xf32>
    %94 = arith.truncf %51 : vector<8x32xf32> to vector<8x32xbf16>
    %95 = arith.truncf %93 : vector<8x32xf32> to vector<8x32xbf16>
    %c0_64 = arith.constant 0 : index
    %c0_65 = arith.constant 0 : index
    %c0_66 = arith.constant 0 : index
    %96 = vector.load %arg5[%c0_64, %c0_65, %c0_66] : memref<3x32x32xbf16, #tpu.memory_space<vmem>>, vector<1x32x32xbf16>
    %97 = vector.shape_cast %96 : vector<1x32x32xbf16> to vector<32x32xbf16>
    %cst_67 = arith.constant dense<0.000000e+00> : vector<8x32xf32>
    %98 = tpu.matmul %95, %97, %cst_67 {dimension_numbers = #tpu.dot_dimension_numbers<[1], [0], [0], [1], [0, 0, 1, 1], [], []>} : vector<8x32xbf16>, vector<32x32xbf16>, vector<8x32xf32> -> vector<8x32xf32>
    %99 = arith.addf %98, %38 : vector<8x32xf32>
    %c1_68 = arith.constant 1 : index
    %c0_69 = arith.constant 0 : index
    %c0_70 = arith.constant 0 : index
    %100 = vector.load %arg5[%c1_68, %c0_69, %c0_70] : memref<3x32x32xbf16, #tpu.memory_space<vmem>>, vector<1x32x32xbf16>
    %101 = vector.shape_cast %100 : vector<1x32x32xbf16> to vector<32x32xbf16>
    %cst_71 = arith.constant dense<0.000000e+00> : vector<8x32xf32>
    %102 = tpu.matmul %95, %101, %cst_71 {dimension_numbers = #tpu.dot_dimension_numbers<[1], [0], [0], [1], [0, 0, 1, 1], [], []>} : vector<8x32xbf16>, vector<32x32xbf16>, vector<8x32xf32> -> vector<8x32xf32>
    %103 = arith.addf %102, %42 : vector<8x32xf32>
    %c2_72 = arith.constant 2 : index
    %c0_73 = arith.constant 0 : index
    %c0_74 = arith.constant 0 : index
    %104 = vector.load %arg5[%c2_72, %c0_73, %c0_74] : memref<3x32x32xbf16, #tpu.memory_space<vmem>>, vector<1x32x32xbf16>
    %105 = vector.shape_cast %104 : vector<1x32x32xbf16> to vector<32x32xbf16>
    %cst_75 = arith.constant dense<0.000000e+00> : vector<8x32xf32>
    %106 = tpu.matmul %95, %105, %cst_75 {dimension_numbers = #tpu.dot_dimension_numbers<[1], [0], [0], [1], [0, 0, 1, 1], [], []>} : vector<8x32xbf16>, vector<32x32xbf16>, vector<8x32xf32> -> vector<8x32xf32>
    %107 = arith.addf %106, %46 : vector<8x32xf32>
    %c0_76 = arith.constant 0 : index
    %c0_77 = arith.constant 0 : index
    %c0_78 = arith.constant 0 : index
    %108 = vector.load %arg6[%c0_76, %c0_77, %c0_78] : memref<3x32x32xbf16, #tpu.memory_space<vmem>>, vector<1x32x32xbf16>
    %109 = vector.shape_cast %108 : vector<1x32x32xbf16> to vector<32x32xbf16>
    %cst_79 = arith.constant dense<0.000000e+00> : vector<8x32xf32>
    %110 = tpu.matmul %94, %109, %cst_79 {dimension_numbers = #tpu.dot_dimension_numbers<[1], [0], [0], [1], [0, 0, 1, 1], [], []>} : vector<8x32xbf16>, vector<32x32xbf16>, vector<8x32xf32> -> vector<8x32xf32>
    %c1_80 = arith.constant 1 : index
    %c0_81 = arith.constant 0 : index
    %c0_82 = arith.constant 0 : index
    %111 = vector.load %arg6[%c1_80, %c0_81, %c0_82] : memref<3x32x32xbf16, #tpu.memory_space<vmem>>, vector<1x32x32xbf16>
    %112 = vector.shape_cast %111 : vector<1x32x32xbf16> to vector<32x32xbf16>
    %cst_83 = arith.constant dense<0.000000e+00> : vector<8x32xf32>
    %113 = tpu.matmul %94, %112, %cst_83 {dimension_numbers = #tpu.dot_dimension_numbers<[1], [0], [0], [1], [0, 0, 1, 1], [], []>} : vector<8x32xbf16>, vector<32x32xbf16>, vector<8x32xf32> -> vector<8x32xf32>
    %c2_84 = arith.constant 2 : index
    %c0_85 = arith.constant 0 : index
    %c0_86 = arith.constant 0 : index
    %114 = vector.load %arg6[%c2_84, %c0_85, %c0_86] : memref<3x32x32xbf16, #tpu.memory_space<vmem>>, vector<1x32x32xbf16>
    %115 = vector.shape_cast %114 : vector<1x32x32xbf16> to vector<32x32xbf16>
    %cst_87 = arith.constant dense<0.000000e+00> : vector<8x32xf32>
    %116 = tpu.matmul %94, %115, %cst_87 {dimension_numbers = #tpu.dot_dimension_numbers<[1], [0], [0], [1], [0, 0, 1, 1], [], []>} : vector<8x32xbf16>, vector<32x32xbf16>, vector<8x32xf32> -> vector<8x32xf32>
    %117 = arith.addf %99, %110 : vector<8x32xf32>
    %118 = arith.negf %117 : vector<8x32xf32>
    %119 = math.exp %118 : vector<8x32xf32>
    %cst_88 = arith.constant 1.000000e+00 : f32
    %120 = vector.broadcast %cst_88 : f32 to vector<8x32xf32>
    %121 = arith.addf %120, %119 : vector<8x32xf32>
    %122 = arith.divf %120, %121 : vector<8x32xf32>
    %123 = arith.addf %103, %113 : vector<8x32xf32>
    %124 = arith.negf %123 : vector<8x32xf32>
    %125 = math.exp %124 : vector<8x32xf32>
    %cst_89 = arith.constant 1.000000e+00 : f32
    %126 = vector.broadcast %cst_89 : f32 to vector<8x32xf32>
    %127 = arith.addf %126, %125 : vector<8x32xf32>
    %128 = arith.divf %126, %127 : vector<8x32xf32>
    %129 = arith.addf %116, %49 : vector<8x32xf32>
    %130 = arith.mulf %122, %129 : vector<8x32xf32>
    %131 = arith.addf %107, %130 : vector<8x32xf32>
    %132 = math.tanh %131 : vector<8x32xf32>
    %cst_90 = arith.constant 1.000000e+00 : f32
    %133 = vector.broadcast %cst_90 : f32 to vector<8x32xf32>
    %134 = arith.subf %133, %128 : vector<8x32xf32>
    %135 = arith.mulf %134, %132 : vector<8x32xf32>
    %136 = arith.mulf %128, %51 : vector<8x32xf32>
    %137 = arith.addf %135, %136 : vector<8x32xf32>
    %c1_i32 = arith.constant 1 : i32
    %c8_i32_91 = arith.constant 8 : i32
    %138 = arith.muli %c1_i32, %c8_i32_91 : i32
    %139 = tpu.assume_multiple %138, 8 : i32
    %140 = arith.truncf %93 : vector<8x32xf32> to vector<8x32xbf16>
    %c0_92 = arith.constant 0 : index
    %141 = arith.index_cast %139 : i32 to index
    %c0_93 = arith.constant 0 : index
    %142 = vector.load %arg12[%c0_92, %141, %c0_93] : memref<3x64x32xf32, #tpu.memory_space<vmem>>, vector<1x8x32xf32>
    %143 = vector.shape_cast %142 : vector<1x8x32xf32> to vector<8x32xf32>
    %c1_94 = arith.constant 1 : index
    %144 = arith.index_cast %139 : i32 to index
    %c0_95 = arith.constant 0 : index
    %145 = vector.load %arg12[%c1_94, %144, %c0_95] : memref<3x64x32xf32, #tpu.memory_space<vmem>>, vector<1x8x32xf32>
    %146 = vector.shape_cast %145 : vector<1x8x32xf32> to vector<8x32xf32>
    %c2_96 = arith.constant 2 : index
    %147 = arith.index_cast %139 : i32 to index
    %c0_97 = arith.constant 0 : index
    %148 = vector.load %arg12[%c2_96, %147, %c0_97] : memref<3x64x32xf32, #tpu.memory_space<vmem>>, vector<1x8x32xf32>
    %149 = vector.shape_cast %148 : vector<1x8x32xf32> to vector<8x32xf32>
    %c0_98 = arith.constant 0 : index
    %c0_99 = arith.constant 0 : index
    %c0_100 = arith.constant 0 : index
    %150 = vector.load %arg2[%c0_98, %c0_99, %c0_100] : memref<3x32x32xbf16, #tpu.memory_space<vmem>>, vector<1x32x32xbf16>
    %151 = vector.shape_cast %150 : vector<1x32x32xbf16> to vector<32x32xbf16>
    %cst_101 = arith.constant dense<0.000000e+00> : vector<8x32xf32>
    %152 = tpu.matmul %140, %151, %cst_101 {dimension_numbers = #tpu.dot_dimension_numbers<[1], [0], [0], [1], [0, 0, 1, 1], [], []>} : vector<8x32xbf16>, vector<32x32xbf16>, vector<8x32xf32> -> vector<8x32xf32>
    %c1_102 = arith.constant 1 : index
    %c0_103 = arith.constant 0 : index
    %c0_104 = arith.constant 0 : index
    %153 = vector.load %arg2[%c1_102, %c0_103, %c0_104] : memref<3x32x32xbf16, #tpu.memory_space<vmem>>, vector<1x32x32xbf16>
    %154 = vector.shape_cast %153 : vector<1x32x32xbf16> to vector<32x32xbf16>
    %cst_105 = arith.constant dense<0.000000e+00> : vector<8x32xf32>
    %155 = tpu.matmul %140, %154, %cst_105 {dimension_numbers = #tpu.dot_dimension_numbers<[1], [0], [0], [1], [0, 0, 1, 1], [], []>} : vector<8x32xbf16>, vector<32x32xbf16>, vector<8x32xf32> -> vector<8x32xf32>
    %c2_106 = arith.constant 2 : index
    %c0_107 = arith.constant 0 : index
    %c0_108 = arith.constant 0 : index
    %156 = vector.load %arg2[%c2_106, %c0_107, %c0_108] : memref<3x32x32xbf16, #tpu.memory_space<vmem>>, vector<1x32x32xbf16>
    %157 = vector.shape_cast %156 : vector<1x32x32xbf16> to vector<32x32xbf16>
    %cst_109 = arith.constant dense<0.000000e+00> : vector<8x32xf32>
    %158 = tpu.matmul %140, %157, %cst_109 {dimension_numbers = #tpu.dot_dimension_numbers<[1], [0], [0], [1], [0, 0, 1, 1], [], []>} : vector<8x32xbf16>, vector<32x32xbf16>, vector<8x32xf32> -> vector<8x32xf32>
    %159 = arith.addf %143, %152 : vector<8x32xf32>
    %160 = arith.negf %159 : vector<8x32xf32>
    %161 = math.exp %160 : vector<8x32xf32>
    %cst_110 = arith.constant 1.000000e+00 : f32
    %162 = vector.broadcast %cst_110 : f32 to vector<8x32xf32>
    %163 = arith.addf %162, %161 : vector<8x32xf32>
    %164 = arith.divf %162, %163 : vector<8x32xf32>
    %165 = arith.addf %146, %155 : vector<8x32xf32>
    %166 = arith.negf %165 : vector<8x32xf32>
    %167 = math.exp %166 : vector<8x32xf32>
    %cst_111 = arith.constant 1.000000e+00 : f32
    %168 = vector.broadcast %cst_111 : f32 to vector<8x32xf32>
    %169 = arith.addf %168, %167 : vector<8x32xf32>
    %170 = arith.divf %168, %169 : vector<8x32xf32>
    %171 = arith.addf %158, %34 : vector<8x32xf32>
    %172 = arith.mulf %164, %171 : vector<8x32xf32>
    %173 = arith.addf %149, %172 : vector<8x32xf32>
    %174 = math.tanh %173 : vector<8x32xf32>
    %cst_112 = arith.constant 1.000000e+00 : f32
    %175 = vector.broadcast %cst_112 : f32 to vector<8x32xf32>
    %176 = arith.subf %175, %170 : vector<8x32xf32>
    %177 = arith.mulf %176, %174 : vector<8x32xf32>
    %178 = arith.mulf %170, %93 : vector<8x32xf32>
    %179 = arith.addf %177, %178 : vector<8x32xf32>
    %180 = arith.truncf %137 : vector<8x32xf32> to vector<8x32xbf16>
    %181 = arith.truncf %179 : vector<8x32xf32> to vector<8x32xbf16>
    %c0_113 = arith.constant 0 : index
    %c0_114 = arith.constant 0 : index
    %c0_115 = arith.constant 0 : index
    %182 = vector.load %arg5[%c0_113, %c0_114, %c0_115] : memref<3x32x32xbf16, #tpu.memory_space<vmem>>, vector<1x32x32xbf16>
    %183 = vector.shape_cast %182 : vector<1x32x32xbf16> to vector<32x32xbf16>
    %cst_116 = arith.constant dense<0.000000e+00> : vector<8x32xf32>
    %184 = tpu.matmul %181, %183, %cst_116 {dimension_numbers = #tpu.dot_dimension_numbers<[1], [0], [0], [1], [0, 0, 1, 1], [], []>} : vector<8x32xbf16>, vector<32x32xbf16>, vector<8x32xf32> -> vector<8x32xf32>
    %185 = arith.addf %184, %38 : vector<8x32xf32>
    %c1_117 = arith.constant 1 : index
    %c0_118 = arith.constant 0 : index
    %c0_119 = arith.constant 0 : index
    %186 = vector.load %arg5[%c1_117, %c0_118, %c0_119] : memref<3x32x32xbf16, #tpu.memory_space<vmem>>, vector<1x32x32xbf16>
    %187 = vector.shape_cast %186 : vector<1x32x32xbf16> to vector<32x32xbf16>
    %cst_120 = arith.constant dense<0.000000e+00> : vector<8x32xf32>
    %188 = tpu.matmul %181, %187, %cst_120 {dimension_numbers = #tpu.dot_dimension_numbers<[1], [0], [0], [1], [0, 0, 1, 1], [], []>} : vector<8x32xbf16>, vector<32x32xbf16>, vector<8x32xf32> -> vector<8x32xf32>
    %189 = arith.addf %188, %42 : vector<8x32xf32>
    %c2_121 = arith.constant 2 : index
    %c0_122 = arith.constant 0 : index
    %c0_123 = arith.constant 0 : index
    %190 = vector.load %arg5[%c2_121, %c0_122, %c0_123] : memref<3x32x32xbf16, #tpu.memory_space<vmem>>, vector<1x32x32xbf16>
    %191 = vector.shape_cast %190 : vector<1x32x32xbf16> to vector<32x32xbf16>
    %cst_124 = arith.constant dense<0.000000e+00> : vector<8x32xf32>
    %192 = tpu.matmul %181, %191, %cst_124 {dimension_numbers = #tpu.dot_dimension_numbers<[1], [0], [0], [1], [0, 0, 1, 1], [], []>} : vector<8x32xbf16>, vector<32x32xbf16>, vector<8x32xf32> -> vector<8x32xf32>
    %193 = arith.addf %192, %46 : vector<8x32xf32>
    %c0_125 = arith.constant 0 : index
    %c0_126 = arith.constant 0 : index
    %c0_127 = arith.constant 0 : index
    %194 = vector.load %arg6[%c0_125, %c0_126, %c0_127] : memref<3x32x32xbf16, #tpu.memory_space<vmem>>, vector<1x32x32xbf16>
    %195 = vector.shape_cast %194 : vector<1x32x32xbf16> to vector<32x32xbf16>
    %cst_128 = arith.constant dense<0.000000e+00> : vector<8x32xf32>
    %196 = tpu.matmul %180, %195, %cst_128 {dimension_numbers = #tpu.dot_dimension_numbers<[1], [0], [0], [1], [0, 0, 1, 1], [], []>} : vector<8x32xbf16>, vector<32x32xbf16>, vector<8x32xf32> -> vector<8x32xf32>
    %c1_129 = arith.constant 1 : index
    %c0_130 = arith.constant 0 : index
    %c0_131 = arith.constant 0 : index
    %197 = vector.load %arg6[%c1_129, %c0_130, %c0_131] : memref<3x32x32xbf16, #tpu.memory_space<vmem>>, vector<1x32x32xbf16>
    %198 = vector.shape_cast %197 : vector<1x32x32xbf16> to vector<32x32xbf16>
    %cst_132 = arith.constant dense<0.000000e+00> : vector<8x32xf32>
    %199 = tpu.matmul %180, %198, %cst_132 {dimension_numbers = #tpu.dot_dimension_numbers<[1], [0], [0], [1], [0, 0, 1, 1], [], []>} : vector<8x32xbf16>, vector<32x32xbf16>, vector<8x32xf32> -> vector<8x32xf32>
    %c2_133 = arith.constant 2 : index
    %c0_134 = arith.constant 0 : index
    %c0_135 = arith.constant 0 : index
    %200 = vector.load %arg6[%c2_133, %c0_134, %c0_135] : memref<3x32x32xbf16, #tpu.memory_space<vmem>>, vector<1x32x32xbf16>
    %201 = vector.shape_cast %200 : vector<1x32x32xbf16> to vector<32x32xbf16>
    %cst_136 = arith.constant dense<0.000000e+00> : vector<8x32xf32>
    %202 = tpu.matmul %180, %201, %cst_136 {dimension_numbers = #tpu.dot_dimension_numbers<[1], [0], [0], [1], [0, 0, 1, 1], [], []>} : vector<8x32xbf16>, vector<32x32xbf16>, vector<8x32xf32> -> vector<8x32xf32>
    %203 = arith.addf %185, %196 : vector<8x32xf32>
    %204 = arith.negf %203 : vector<8x32xf32>
    %205 = math.exp %204 : vector<8x32xf32>
    %cst_137 = arith.constant 1.000000e+00 : f32
    %206 = vector.broadcast %cst_137 : f32 to vector<8x32xf32>
    %207 = arith.addf %206, %205 : vector<8x32xf32>
    %208 = arith.divf %206, %207 : vector<8x32xf32>
    %209 = arith.addf %189, %199 : vector<8x32xf32>
    %210 = arith.negf %209 : vector<8x32xf32>
    %211 = math.exp %210 : vector<8x32xf32>
    %cst_138 = arith.constant 1.000000e+00 : f32
    %212 = vector.broadcast %cst_138 : f32 to vector<8x32xf32>
    %213 = arith.addf %212, %211 : vector<8x32xf32>
    %214 = arith.divf %212, %213 : vector<8x32xf32>
    %215 = arith.addf %202, %49 : vector<8x32xf32>
    %216 = arith.mulf %208, %215 : vector<8x32xf32>
    %217 = arith.addf %193, %216 : vector<8x32xf32>
    %218 = math.tanh %217 : vector<8x32xf32>
    %cst_139 = arith.constant 1.000000e+00 : f32
    %219 = vector.broadcast %cst_139 : f32 to vector<8x32xf32>
    %220 = arith.subf %219, %214 : vector<8x32xf32>
    %221 = arith.mulf %220, %218 : vector<8x32xf32>
    %222 = arith.mulf %214, %137 : vector<8x32xf32>
    %223 = arith.addf %221, %222 : vector<8x32xf32>
    %c2_i32 = arith.constant 2 : i32
    %c8_i32_140 = arith.constant 8 : i32
    %224 = arith.muli %c2_i32, %c8_i32_140 : i32
    %225 = tpu.assume_multiple %224, 8 : i32
    %226 = arith.truncf %179 : vector<8x32xf32> to vector<8x32xbf16>
    %c0_141 = arith.constant 0 : index
    %227 = arith.index_cast %225 : i32 to index
    %c0_142 = arith.constant 0 : index
    %228 = vector.load %arg12[%c0_141, %227, %c0_142] : memref<3x64x32xf32, #tpu.memory_space<vmem>>, vector<1x8x32xf32>
    %229 = vector.shape_cast %228 : vector<1x8x32xf32> to vector<8x32xf32>
    %c1_143 = arith.constant 1 : index
    %230 = arith.index_cast %225 : i32 to index
    %c0_144 = arith.constant 0 : index
    %231 = vector.load %arg12[%c1_143, %230, %c0_144] : memref<3x64x32xf32, #tpu.memory_space<vmem>>, vector<1x8x32xf32>
    %232 = vector.shape_cast %231 : vector<1x8x32xf32> to vector<8x32xf32>
    %c2_145 = arith.constant 2 : index
    %233 = arith.index_cast %225 : i32 to index
    %c0_146 = arith.constant 0 : index
    %234 = vector.load %arg12[%c2_145, %233, %c0_146] : memref<3x64x32xf32, #tpu.memory_space<vmem>>, vector<1x8x32xf32>
    %235 = vector.shape_cast %234 : vector<1x8x32xf32> to vector<8x32xf32>
    %c0_147 = arith.constant 0 : index
    %c0_148 = arith.constant 0 : index
    %c0_149 = arith.constant 0 : index
    %236 = vector.load %arg2[%c0_147, %c0_148, %c0_149] : memref<3x32x32xbf16, #tpu.memory_space<vmem>>, vector<1x32x32xbf16>
    %237 = vector.shape_cast %236 : vector<1x32x32xbf16> to vector<32x32xbf16>
    %cst_150 = arith.constant dense<0.000000e+00> : vector<8x32xf32>
    %238 = tpu.matmul %226, %237, %cst_150 {dimension_numbers = #tpu.dot_dimension_numbers<[1], [0], [0], [1], [0, 0, 1, 1], [], []>} : vector<8x32xbf16>, vector<32x32xbf16>, vector<8x32xf32> -> vector<8x32xf32>
    %c1_151 = arith.constant 1 : index
    %c0_152 = arith.constant 0 : index
    %c0_153 = arith.constant 0 : index
    %239 = vector.load %arg2[%c1_151, %c0_152, %c0_153] : memref<3x32x32xbf16, #tpu.memory_space<vmem>>, vector<1x32x32xbf16>
    %240 = vector.shape_cast %239 : vector<1x32x32xbf16> to vector<32x32xbf16>
    %cst_154 = arith.constant dense<0.000000e+00> : vector<8x32xf32>
    %241 = tpu.matmul %226, %240, %cst_154 {dimension_numbers = #tpu.dot_dimension_numbers<[1], [0], [0], [1], [0, 0, 1, 1], [], []>} : vector<8x32xbf16>, vector<32x32xbf16>, vector<8x32xf32> -> vector<8x32xf32>
    %c2_155 = arith.constant 2 : index
    %c0_156 = arith.constant 0 : index
    %c0_157 = arith.constant 0 : index
    %242 = vector.load %arg2[%c2_155, %c0_156, %c0_157] : memref<3x32x32xbf16, #tpu.memory_space<vmem>>, vector<1x32x32xbf16>
    %243 = vector.shape_cast %242 : vector<1x32x32xbf16> to vector<32x32xbf16>
    %cst_158 = arith.constant dense<0.000000e+00> : vector<8x32xf32>
    %244 = tpu.matmul %226, %243, %cst_158 {dimension_numbers = #tpu.dot_dimension_numbers<[1], [0], [0], [1], [0, 0, 1, 1], [], []>} : vector<8x32xbf16>, vector<32x32xbf16>, vector<8x32xf32> -> vector<8x32xf32>
    %245 = arith.addf %229, %238 : vector<8x32xf32>
    %246 = arith.negf %245 : vector<8x32xf32>
    %247 = math.exp %246 : vector<8x32xf32>
    %cst_159 = arith.constant 1.000000e+00 : f32
    %248 = vector.broadcast %cst_159 : f32 to vector<8x32xf32>
    %249 = arith.addf %248, %247 : vector<8x32xf32>
    %250 = arith.divf %248, %249 : vector<8x32xf32>
    %251 = arith.addf %232, %241 : vector<8x32xf32>
    %252 = arith.negf %251 : vector<8x32xf32>
    %253 = math.exp %252 : vector<8x32xf32>
    %cst_160 = arith.constant 1.000000e+00 : f32
    %254 = vector.broadcast %cst_160 : f32 to vector<8x32xf32>
    %255 = arith.addf %254, %253 : vector<8x32xf32>
    %256 = arith.divf %254, %255 : vector<8x32xf32>
    %257 = arith.addf %244, %34 : vector<8x32xf32>
    %258 = arith.mulf %250, %257 : vector<8x32xf32>
    %259 = arith.addf %235, %258 : vector<8x32xf32>
    %260 = math.tanh %259 : vector<8x32xf32>
    %cst_161 = arith.constant 1.000000e+00 : f32
    %261 = vector.broadcast %cst_161 : f32 to vector<8x32xf32>
    %262 = arith.subf %261, %256 : vector<8x32xf32>
    %263 = arith.mulf %262, %260 : vector<8x32xf32>
    %264 = arith.mulf %256, %179 : vector<8x32xf32>
    %265 = arith.addf %263, %264 : vector<8x32xf32>
    %266 = arith.truncf %223 : vector<8x32xf32> to vector<8x32xbf16>
    %267 = arith.truncf %265 : vector<8x32xf32> to vector<8x32xbf16>
    %c0_162 = arith.constant 0 : index
    %c0_163 = arith.constant 0 : index
    %c0_164 = arith.constant 0 : index
    %268 = vector.load %arg5[%c0_162, %c0_163, %c0_164] : memref<3x32x32xbf16, #tpu.memory_space<vmem>>, vector<1x32x32xbf16>
    %269 = vector.shape_cast %268 : vector<1x32x32xbf16> to vector<32x32xbf16>
    %cst_165 = arith.constant dense<0.000000e+00> : vector<8x32xf32>
    %270 = tpu.matmul %267, %269, %cst_165 {dimension_numbers = #tpu.dot_dimension_numbers<[1], [0], [0], [1], [0, 0, 1, 1], [], []>} : vector<8x32xbf16>, vector<32x32xbf16>, vector<8x32xf32> -> vector<8x32xf32>
    %271 = arith.addf %270, %38 : vector<8x32xf32>
    %c1_166 = arith.constant 1 : index
    %c0_167 = arith.constant 0 : index
    %c0_168 = arith.constant 0 : index
    %272 = vector.load %arg5[%c1_166, %c0_167, %c0_168] : memref<3x32x32xbf16, #tpu.memory_space<vmem>>, vector<1x32x32xbf16>
    %273 = vector.shape_cast %272 : vector<1x32x32xbf16> to vector<32x32xbf16>
    %cst_169 = arith.constant dense<0.000000e+00> : vector<8x32xf32>
    %274 = tpu.matmul %267, %273, %cst_169 {dimension_numbers = #tpu.dot_dimension_numbers<[1], [0], [0], [1], [0, 0, 1, 1], [], []>} : vector<8x32xbf16>, vector<32x32xbf16>, vector<8x32xf32> -> vector<8x32xf32>
    %275 = arith.addf %274, %42 : vector<8x32xf32>
    %c2_170 = arith.constant 2 : index
    %c0_171 = arith.constant 0 : index
    %c0_172 = arith.constant 0 : index
    %276 = vector.load %arg5[%c2_170, %c0_171, %c0_172] : memref<3x32x32xbf16, #tpu.memory_space<vmem>>, vector<1x32x32xbf16>
    %277 = vector.shape_cast %276 : vector<1x32x32xbf16> to vector<32x32xbf16>
    %cst_173 = arith.constant dense<0.000000e+00> : vector<8x32xf32>
    %278 = tpu.matmul %267, %277, %cst_173 {dimension_numbers = #tpu.dot_dimension_numbers<[1], [0], [0], [1], [0, 0, 1, 1], [], []>} : vector<8x32xbf16>, vector<32x32xbf16>, vector<8x32xf32> -> vector<8x32xf32>
    %279 = arith.addf %278, %46 : vector<8x32xf32>
    %c0_174 = arith.constant 0 : index
    %c0_175 = arith.constant 0 : index
    %c0_176 = arith.constant 0 : index
    %280 = vector.load %arg6[%c0_174, %c0_175, %c0_176] : memref<3x32x32xbf16, #tpu.memory_space<vmem>>, vector<1x32x32xbf16>
    %281 = vector.shape_cast %280 : vector<1x32x32xbf16> to vector<32x32xbf16>
    %cst_177 = arith.constant dense<0.000000e+00> : vector<8x32xf32>
    %282 = tpu.matmul %266, %281, %cst_177 {dimension_numbers = #tpu.dot_dimension_numbers<[1], [0], [0], [1], [0, 0, 1, 1], [], []>} : vector<8x32xbf16>, vector<32x32xbf16>, vector<8x32xf32> -> vector<8x32xf32>
    %c1_178 = arith.constant 1 : index
    %c0_179 = arith.constant 0 : index
    %c0_180 = arith.constant 0 : index
    %283 = vector.load %arg6[%c1_178, %c0_179, %c0_180] : memref<3x32x32xbf16, #tpu.memory_space<vmem>>, vector<1x32x32xbf16>
    %284 = vector.shape_cast %283 : vector<1x32x32xbf16> to vector<32x32xbf16>
    %cst_181 = arith.constant dense<0.000000e+00> : vector<8x32xf32>
    %285 = tpu.matmul %266, %284, %cst_181 {dimension_numbers = #tpu.dot_dimension_numbers<[1], [0], [0], [1], [0, 0, 1, 1], [], []>} : vector<8x32xbf16>, vector<32x32xbf16>, vector<8x32xf32> -> vector<8x32xf32>
    %c2_182 = arith.constant 2 : index
    %c0_183 = arith.constant 0 : index
    %c0_184 = arith.constant 0 : index
    %286 = vector.load %arg6[%c2_182, %c0_183, %c0_184] : memref<3x32x32xbf16, #tpu.memory_space<vmem>>, vector<1x32x32xbf16>
    %287 = vector.shape_cast %286 : vector<1x32x32xbf16> to vector<32x32xbf16>
    %cst_185 = arith.constant dense<0.000000e+00> : vector<8x32xf32>
    %288 = tpu.matmul %266, %287, %cst_185 {dimension_numbers = #tpu.dot_dimension_numbers<[1], [0], [0], [1], [0, 0, 1, 1], [], []>} : vector<8x32xbf16>, vector<32x32xbf16>, vector<8x32xf32> -> vector<8x32xf32>
    %289 = arith.addf %271, %282 : vector<8x32xf32>
    %290 = arith.negf %289 : vector<8x32xf32>
    %291 = math.exp %290 : vector<8x32xf32>
    %cst_186 = arith.constant 1.000000e+00 : f32
    %292 = vector.broadcast %cst_186 : f32 to vector<8x32xf32>
    %293 = arith.addf %292, %291 : vector<8x32xf32>
    %294 = arith.divf %292, %293 : vector<8x32xf32>
    %295 = arith.addf %275, %285 : vector<8x32xf32>
    %296 = arith.negf %295 : vector<8x32xf32>
    %297 = math.exp %296 : vector<8x32xf32>
    %cst_187 = arith.constant 1.000000e+00 : f32
    %298 = vector.broadcast %cst_187 : f32 to vector<8x32xf32>
    %299 = arith.addf %298, %297 : vector<8x32xf32>
    %300 = arith.divf %298, %299 : vector<8x32xf32>
    %301 = arith.addf %288, %49 : vector<8x32xf32>
    %302 = arith.mulf %294, %301 : vector<8x32xf32>
    %303 = arith.addf %279, %302 : vector<8x32xf32>
    %304 = math.tanh %303 : vector<8x32xf32>
    %cst_188 = arith.constant 1.000000e+00 : f32
    %305 = vector.broadcast %cst_188 : f32 to vector<8x32xf32>
    %306 = arith.subf %305, %300 : vector<8x32xf32>
    %307 = arith.mulf %306, %304 : vector<8x32xf32>
    %308 = arith.mulf %300, %223 : vector<8x32xf32>
    %309 = arith.addf %307, %308 : vector<8x32xf32>
    %c3_i32 = arith.constant 3 : i32
    %c8_i32_189 = arith.constant 8 : i32
    %310 = arith.muli %c3_i32, %c8_i32_189 : i32
    %311 = tpu.assume_multiple %310, 8 : i32
    %312 = arith.truncf %265 : vector<8x32xf32> to vector<8x32xbf16>
    %c0_190 = arith.constant 0 : index
    %313 = arith.index_cast %311 : i32 to index
    %c0_191 = arith.constant 0 : index
    %314 = vector.load %arg12[%c0_190, %313, %c0_191] : memref<3x64x32xf32, #tpu.memory_space<vmem>>, vector<1x8x32xf32>
    %315 = vector.shape_cast %314 : vector<1x8x32xf32> to vector<8x32xf32>
    %c1_192 = arith.constant 1 : index
    %316 = arith.index_cast %311 : i32 to index
    %c0_193 = arith.constant 0 : index
    %317 = vector.load %arg12[%c1_192, %316, %c0_193] : memref<3x64x32xf32, #tpu.memory_space<vmem>>, vector<1x8x32xf32>
    %318 = vector.shape_cast %317 : vector<1x8x32xf32> to vector<8x32xf32>
    %c2_194 = arith.constant 2 : index
    %319 = arith.index_cast %311 : i32 to index
    %c0_195 = arith.constant 0 : index
    %320 = vector.load %arg12[%c2_194, %319, %c0_195] : memref<3x64x32xf32, #tpu.memory_space<vmem>>, vector<1x8x32xf32>
    %321 = vector.shape_cast %320 : vector<1x8x32xf32> to vector<8x32xf32>
    %c0_196 = arith.constant 0 : index
    %c0_197 = arith.constant 0 : index
    %c0_198 = arith.constant 0 : index
    %322 = vector.load %arg2[%c0_196, %c0_197, %c0_198] : memref<3x32x32xbf16, #tpu.memory_space<vmem>>, vector<1x32x32xbf16>
    %323 = vector.shape_cast %322 : vector<1x32x32xbf16> to vector<32x32xbf16>
    %cst_199 = arith.constant dense<0.000000e+00> : vector<8x32xf32>
    %324 = tpu.matmul %312, %323, %cst_199 {dimension_numbers = #tpu.dot_dimension_numbers<[1], [0], [0], [1], [0, 0, 1, 1], [], []>} : vector<8x32xbf16>, vector<32x32xbf16>, vector<8x32xf32> -> vector<8x32xf32>
    %c1_200 = arith.constant 1 : index
    %c0_201 = arith.constant 0 : index
    %c0_202 = arith.constant 0 : index
    %325 = vector.load %arg2[%c1_200, %c0_201, %c0_202] : memref<3x32x32xbf16, #tpu.memory_space<vmem>>, vector<1x32x32xbf16>
    %326 = vector.shape_cast %325 : vector<1x32x32xbf16> to vector<32x32xbf16>
    %cst_203 = arith.constant dense<0.000000e+00> : vector<8x32xf32>
    %327 = tpu.matmul %312, %326, %cst_203 {dimension_numbers = #tpu.dot_dimension_numbers<[1], [0], [0], [1], [0, 0, 1, 1], [], []>} : vector<8x32xbf16>, vector<32x32xbf16>, vector<8x32xf32> -> vector<8x32xf32>
    %c2_204 = arith.constant 2 : index
    %c0_205 = arith.constant 0 : index
    %c0_206 = arith.constant 0 : index
    %328 = vector.load %arg2[%c2_204, %c0_205, %c0_206] : memref<3x32x32xbf16, #tpu.memory_space<vmem>>, vector<1x32x32xbf16>
    %329 = vector.shape_cast %328 : vector<1x32x32xbf16> to vector<32x32xbf16>
    %cst_207 = arith.constant dense<0.000000e+00> : vector<8x32xf32>
    %330 = tpu.matmul %312, %329, %cst_207 {dimension_numbers = #tpu.dot_dimension_numbers<[1], [0], [0], [1], [0, 0, 1, 1], [], []>} : vector<8x32xbf16>, vector<32x32xbf16>, vector<8x32xf32> -> vector<8x32xf32>
    %331 = arith.addf %315, %324 : vector<8x32xf32>
    %332 = arith.negf %331 : vector<8x32xf32>
    %333 = math.exp %332 : vector<8x32xf32>
    %cst_208 = arith.constant 1.000000e+00 : f32
    %334 = vector.broadcast %cst_208 : f32 to vector<8x32xf32>
    %335 = arith.addf %334, %333 : vector<8x32xf32>
    %336 = arith.divf %334, %335 : vector<8x32xf32>
    %337 = arith.addf %318, %327 : vector<8x32xf32>
    %338 = arith.negf %337 : vector<8x32xf32>
    %339 = math.exp %338 : vector<8x32xf32>
    %cst_209 = arith.constant 1.000000e+00 : f32
    %340 = vector.broadcast %cst_209 : f32 to vector<8x32xf32>
    %341 = arith.addf %340, %339 : vector<8x32xf32>
    %342 = arith.divf %340, %341 : vector<8x32xf32>
    %343 = arith.addf %330, %34 : vector<8x32xf32>
    %344 = arith.mulf %336, %343 : vector<8x32xf32>
    %345 = arith.addf %321, %344 : vector<8x32xf32>
    %346 = math.tanh %345 : vector<8x32xf32>
    %cst_210 = arith.constant 1.000000e+00 : f32
    %347 = vector.broadcast %cst_210 : f32 to vector<8x32xf32>
    %348 = arith.subf %347, %342 : vector<8x32xf32>
    %349 = arith.mulf %348, %346 : vector<8x32xf32>
    %350 = arith.mulf %342, %265 : vector<8x32xf32>
    %351 = arith.addf %349, %350 : vector<8x32xf32>
    %352 = arith.truncf %309 : vector<8x32xf32> to vector<8x32xbf16>
    %353 = arith.truncf %351 : vector<8x32xf32> to vector<8x32xbf16>
    %c0_211 = arith.constant 0 : index
    %c0_212 = arith.constant 0 : index
    %c0_213 = arith.constant 0 : index
    %354 = vector.load %arg5[%c0_211, %c0_212, %c0_213] : memref<3x32x32xbf16, #tpu.memory_space<vmem>>, vector<1x32x32xbf16>
    %355 = vector.shape_cast %354 : vector<1x32x32xbf16> to vector<32x32xbf16>
    %cst_214 = arith.constant dense<0.000000e+00> : vector<8x32xf32>
    %356 = tpu.matmul %353, %355, %cst_214 {dimension_numbers = #tpu.dot_dimension_numbers<[1], [0], [0], [1], [0, 0, 1, 1], [], []>} : vector<8x32xbf16>, vector<32x32xbf16>, vector<8x32xf32> -> vector<8x32xf32>
    %357 = arith.addf %356, %38 : vector<8x32xf32>
    %c1_215 = arith.constant 1 : index
    %c0_216 = arith.constant 0 : index
    %c0_217 = arith.constant 0 : index
    %358 = vector.load %arg5[%c1_215, %c0_216, %c0_217] : memref<3x32x32xbf16, #tpu.memory_space<vmem>>, vector<1x32x32xbf16>
    %359 = vector.shape_cast %358 : vector<1x32x32xbf16> to vector<32x32xbf16>
    %cst_218 = arith.constant dense<0.000000e+00> : vector<8x32xf32>
    %360 = tpu.matmul %353, %359, %cst_218 {dimension_numbers = #tpu.dot_dimension_numbers<[1], [0], [0], [1], [0, 0, 1, 1], [], []>} : vector<8x32xbf16>, vector<32x32xbf16>, vector<8x32xf32> -> vector<8x32xf32>
    %361 = arith.addf %360, %42 : vector<8x32xf32>
    %c2_219 = arith.constant 2 : index
    %c0_220 = arith.constant 0 : index
    %c0_221 = arith.constant 0 : index
    %362 = vector.load %arg5[%c2_219, %c0_220, %c0_221] : memref<3x32x32xbf16, #tpu.memory_space<vmem>>, vector<1x32x32xbf16>
    %363 = vector.shape_cast %362 : vector<1x32x32xbf16> to vector<32x32xbf16>
    %cst_222 = arith.constant dense<0.000000e+00> : vector<8x32xf32>
    %364 = tpu.matmul %353, %363, %cst_222 {dimension_numbers = #tpu.dot_dimension_numbers<[1], [0], [0], [1], [0, 0, 1, 1], [], []>} : vector<8x32xbf16>, vector<32x32xbf16>, vector<8x32xf32> -> vector<8x32xf32>
    %365 = arith.addf %364, %46 : vector<8x32xf32>
    %c0_223 = arith.constant 0 : index
    %c0_224 = arith.constant 0 : index
    %c0_225 = arith.constant 0 : index
    %366 = vector.load %arg6[%c0_223, %c0_224, %c0_225] : memref<3x32x32xbf16, #tpu.memory_space<vmem>>, vector<1x32x32xbf16>
    %367 = vector.shape_cast %366 : vector<1x32x32xbf16> to vector<32x32xbf16>
    %cst_226 = arith.constant dense<0.000000e+00> : vector<8x32xf32>
    %368 = tpu.matmul %352, %367, %cst_226 {dimension_numbers = #tpu.dot_dimension_numbers<[1], [0], [0], [1], [0, 0, 1, 1], [], []>} : vector<8x32xbf16>, vector<32x32xbf16>, vector<8x32xf32> -> vector<8x32xf32>
    %c1_227 = arith.constant 1 : index
    %c0_228 = arith.constant 0 : index
    %c0_229 = arith.constant 0 : index
    %369 = vector.load %arg6[%c1_227, %c0_228, %c0_229] : memref<3x32x32xbf16, #tpu.memory_space<vmem>>, vector<1x32x32xbf16>
    %370 = vector.shape_cast %369 : vector<1x32x32xbf16> to vector<32x32xbf16>
    %cst_230 = arith.constant dense<0.000000e+00> : vector<8x32xf32>
    %371 = tpu.matmul %352, %370, %cst_230 {dimension_numbers = #tpu.dot_dimension_numbers<[1], [0], [0], [1], [0, 0, 1, 1], [], []>} : vector<8x32xbf16>, vector<32x32xbf16>, vector<8x32xf32> -> vector<8x32xf32>
    %c2_231 = arith.constant 2 : index
    %c0_232 = arith.constant 0 : index
    %c0_233 = arith.constant 0 : index
    %372 = vector.load %arg6[%c2_231, %c0_232, %c0_233] : memref<3x32x32xbf16, #tpu.memory_space<vmem>>, vector<1x32x32xbf16>
    %373 = vector.shape_cast %372 : vector<1x32x32xbf16> to vector<32x32xbf16>
    %cst_234 = arith.constant dense<0.000000e+00> : vector<8x32xf32>
    %374 = tpu.matmul %352, %373, %cst_234 {dimension_numbers = #tpu.dot_dimension_numbers<[1], [0], [0], [1], [0, 0, 1, 1], [], []>} : vector<8x32xbf16>, vector<32x32xbf16>, vector<8x32xf32> -> vector<8x32xf32>
    %375 = arith.addf %357, %368 : vector<8x32xf32>
    %376 = arith.negf %375 : vector<8x32xf32>
    %377 = math.exp %376 : vector<8x32xf32>
    %cst_235 = arith.constant 1.000000e+00 : f32
    %378 = vector.broadcast %cst_235 : f32 to vector<8x32xf32>
    %379 = arith.addf %378, %377 : vector<8x32xf32>
    %380 = arith.divf %378, %379 : vector<8x32xf32>
    %381 = arith.addf %361, %371 : vector<8x32xf32>
    %382 = arith.negf %381 : vector<8x32xf32>
    %383 = math.exp %382 : vector<8x32xf32>
    %cst_236 = arith.constant 1.000000e+00 : f32
    %384 = vector.broadcast %cst_236 : f32 to vector<8x32xf32>
    %385 = arith.addf %384, %383 : vector<8x32xf32>
    %386 = arith.divf %384, %385 : vector<8x32xf32>
    %387 = arith.addf %374, %49 : vector<8x32xf32>
    %388 = arith.mulf %380, %387 : vector<8x32xf32>
    %389 = arith.addf %365, %388 : vector<8x32xf32>
    %390 = math.tanh %389 : vector<8x32xf32>
    %cst_237 = arith.constant 1.000000e+00 : f32
    %391 = vector.broadcast %cst_237 : f32 to vector<8x32xf32>
    %392 = arith.subf %391, %386 : vector<8x32xf32>
    %393 = arith.mulf %392, %390 : vector<8x32xf32>
    %394 = arith.mulf %386, %309 : vector<8x32xf32>
    %395 = arith.addf %393, %394 : vector<8x32xf32>
    %c4_i32 = arith.constant 4 : i32
    %c8_i32_238 = arith.constant 8 : i32
    %396 = arith.muli %c4_i32, %c8_i32_238 : i32
    %397 = tpu.assume_multiple %396, 8 : i32
    %398 = arith.truncf %351 : vector<8x32xf32> to vector<8x32xbf16>
    %c0_239 = arith.constant 0 : index
    %399 = arith.index_cast %397 : i32 to index
    %c0_240 = arith.constant 0 : index
    %400 = vector.load %arg12[%c0_239, %399, %c0_240] : memref<3x64x32xf32, #tpu.memory_space<vmem>>, vector<1x8x32xf32>
    %401 = vector.shape_cast %400 : vector<1x8x32xf32> to vector<8x32xf32>
    %c1_241 = arith.constant 1 : index
    %402 = arith.index_cast %397 : i32 to index
    %c0_242 = arith.constant 0 : index
    %403 = vector.load %arg12[%c1_241, %402, %c0_242] : memref<3x64x32xf32, #tpu.memory_space<vmem>>, vector<1x8x32xf32>
    %404 = vector.shape_cast %403 : vector<1x8x32xf32> to vector<8x32xf32>
    %c2_243 = arith.constant 2 : index
    %405 = arith.index_cast %397 : i32 to index
    %c0_244 = arith.constant 0 : index
    %406 = vector.load %arg12[%c2_243, %405, %c0_244] : memref<3x64x32xf32, #tpu.memory_space<vmem>>, vector<1x8x32xf32>
    %407 = vector.shape_cast %406 : vector<1x8x32xf32> to vector<8x32xf32>
    %c0_245 = arith.constant 0 : index
    %c0_246 = arith.constant 0 : index
    %c0_247 = arith.constant 0 : index
    %408 = vector.load %arg2[%c0_245, %c0_246, %c0_247] : memref<3x32x32xbf16, #tpu.memory_space<vmem>>, vector<1x32x32xbf16>
    %409 = vector.shape_cast %408 : vector<1x32x32xbf16> to vector<32x32xbf16>
    %cst_248 = arith.constant dense<0.000000e+00> : vector<8x32xf32>
    %410 = tpu.matmul %398, %409, %cst_248 {dimension_numbers = #tpu.dot_dimension_numbers<[1], [0], [0], [1], [0, 0, 1, 1], [], []>} : vector<8x32xbf16>, vector<32x32xbf16>, vector<8x32xf32> -> vector<8x32xf32>
    %c1_249 = arith.constant 1 : index
    %c0_250 = arith.constant 0 : index
    %c0_251 = arith.constant 0 : index
    %411 = vector.load %arg2[%c1_249, %c0_250, %c0_251] : memref<3x32x32xbf16, #tpu.memory_space<vmem>>, vector<1x32x32xbf16>
    %412 = vector.shape_cast %411 : vector<1x32x32xbf16> to vector<32x32xbf16>
    %cst_252 = arith.constant dense<0.000000e+00> : vector<8x32xf32>
    %413 = tpu.matmul %398, %412, %cst_252 {dimension_numbers = #tpu.dot_dimension_numbers<[1], [0], [0], [1], [0, 0, 1, 1], [], []>} : vector<8x32xbf16>, vector<32x32xbf16>, vector<8x32xf32> -> vector<8x32xf32>
    %c2_253 = arith.constant 2 : index
    %c0_254 = arith.constant 0 : index
    %c0_255 = arith.constant 0 : index
    %414 = vector.load %arg2[%c2_253, %c0_254, %c0_255] : memref<3x32x32xbf16, #tpu.memory_space<vmem>>, vector<1x32x32xbf16>
    %415 = vector.shape_cast %414 : vector<1x32x32xbf16> to vector<32x32xbf16>
    %cst_256 = arith.constant dense<0.000000e+00> : vector<8x32xf32>
    %416 = tpu.matmul %398, %415, %cst_256 {dimension_numbers = #tpu.dot_dimension_numbers<[1], [0], [0], [1], [0, 0, 1, 1], [], []>} : vector<8x32xbf16>, vector<32x32xbf16>, vector<8x32xf32> -> vector<8x32xf32>
    %417 = arith.addf %401, %410 : vector<8x32xf32>
    %418 = arith.negf %417 : vector<8x32xf32>
    %419 = math.exp %418 : vector<8x32xf32>
    %cst_257 = arith.constant 1.000000e+00 : f32
    %420 = vector.broadcast %cst_257 : f32 to vector<8x32xf32>
    %421 = arith.addf %420, %419 : vector<8x32xf32>
    %422 = arith.divf %420, %421 : vector<8x32xf32>
    %423 = arith.addf %404, %413 : vector<8x32xf32>
    %424 = arith.negf %423 : vector<8x32xf32>
    %425 = math.exp %424 : vector<8x32xf32>
    %cst_258 = arith.constant 1.000000e+00 : f32
    %426 = vector.broadcast %cst_258 : f32 to vector<8x32xf32>
    %427 = arith.addf %426, %425 : vector<8x32xf32>
    %428 = arith.divf %426, %427 : vector<8x32xf32>
    %429 = arith.addf %416, %34 : vector<8x32xf32>
    %430 = arith.mulf %422, %429 : vector<8x32xf32>
    %431 = arith.addf %407, %430 : vector<8x32xf32>
    %432 = math.tanh %431 : vector<8x32xf32>
    %cst_259 = arith.constant 1.000000e+00 : f32
    %433 = vector.broadcast %cst_259 : f32 to vector<8x32xf32>
    %434 = arith.subf %433, %428 : vector<8x32xf32>
    %435 = arith.mulf %434, %432 : vector<8x32xf32>
    %436 = arith.mulf %428, %351 : vector<8x32xf32>
    %437 = arith.addf %435, %436 : vector<8x32xf32>
    %438 = arith.truncf %395 : vector<8x32xf32> to vector<8x32xbf16>
    %439 = arith.truncf %437 : vector<8x32xf32> to vector<8x32xbf16>
    %c0_260 = arith.constant 0 : index
    %c0_261 = arith.constant 0 : index
    %c0_262 = arith.constant 0 : index
    %440 = vector.load %arg5[%c0_260, %c0_261, %c0_262] : memref<3x32x32xbf16, #tpu.memory_space<vmem>>, vector<1x32x32xbf16>
    %441 = vector.shape_cast %440 : vector<1x32x32xbf16> to vector<32x32xbf16>
    %cst_263 = arith.constant dense<0.000000e+00> : vector<8x32xf32>
    %442 = tpu.matmul %439, %441, %cst_263 {dimension_numbers = #tpu.dot_dimension_numbers<[1], [0], [0], [1], [0, 0, 1, 1], [], []>} : vector<8x32xbf16>, vector<32x32xbf16>, vector<8x32xf32> -> vector<8x32xf32>
    %443 = arith.addf %442, %38 : vector<8x32xf32>
    %c1_264 = arith.constant 1 : index
    %c0_265 = arith.constant 0 : index
    %c0_266 = arith.constant 0 : index
    %444 = vector.load %arg5[%c1_264, %c0_265, %c0_266] : memref<3x32x32xbf16, #tpu.memory_space<vmem>>, vector<1x32x32xbf16>
    %445 = vector.shape_cast %444 : vector<1x32x32xbf16> to vector<32x32xbf16>
    %cst_267 = arith.constant dense<0.000000e+00> : vector<8x32xf32>
    %446 = tpu.matmul %439, %445, %cst_267 {dimension_numbers = #tpu.dot_dimension_numbers<[1], [0], [0], [1], [0, 0, 1, 1], [], []>} : vector<8x32xbf16>, vector<32x32xbf16>, vector<8x32xf32> -> vector<8x32xf32>
    %447 = arith.addf %446, %42 : vector<8x32xf32>
    %c2_268 = arith.constant 2 : index
    %c0_269 = arith.constant 0 : index
    %c0_270 = arith.constant 0 : index
    %448 = vector.load %arg5[%c2_268, %c0_269, %c0_270] : memref<3x32x32xbf16, #tpu.memory_space<vmem>>, vector<1x32x32xbf16>
    %449 = vector.shape_cast %448 : vector<1x32x32xbf16> to vector<32x32xbf16>
    %cst_271 = arith.constant dense<0.000000e+00> : vector<8x32xf32>
    %450 = tpu.matmul %439, %449, %cst_271 {dimension_numbers = #tpu.dot_dimension_numbers<[1], [0], [0], [1], [0, 0, 1, 1], [], []>} : vector<8x32xbf16>, vector<32x32xbf16>, vector<8x32xf32> -> vector<8x32xf32>
    %451 = arith.addf %450, %46 : vector<8x32xf32>
    %c0_272 = arith.constant 0 : index
    %c0_273 = arith.constant 0 : index
    %c0_274 = arith.constant 0 : index
    %452 = vector.load %arg6[%c0_272, %c0_273, %c0_274] : memref<3x32x32xbf16, #tpu.memory_space<vmem>>, vector<1x32x32xbf16>
    %453 = vector.shape_cast %452 : vector<1x32x32xbf16> to vector<32x32xbf16>
    %cst_275 = arith.constant dense<0.000000e+00> : vector<8x32xf32>
    %454 = tpu.matmul %438, %453, %cst_275 {dimension_numbers = #tpu.dot_dimension_numbers<[1], [0], [0], [1], [0, 0, 1, 1], [], []>} : vector<8x32xbf16>, vector<32x32xbf16>, vector<8x32xf32> -> vector<8x32xf32>
    %c1_276 = arith.constant 1 : index
    %c0_277 = arith.constant 0 : index
    %c0_278 = arith.constant 0 : index
    %455 = vector.load %arg6[%c1_276, %c0_277, %c0_278] : memref<3x32x32xbf16, #tpu.memory_space<vmem>>, vector<1x32x32xbf16>
    %456 = vector.shape_cast %455 : vector<1x32x32xbf16> to vector<32x32xbf16>
    %cst_279 = arith.constant dense<0.000000e+00> : vector<8x32xf32>
    %457 = tpu.matmul %438, %456, %cst_279 {dimension_numbers = #tpu.dot_dimension_numbers<[1], [0], [0], [1], [0, 0, 1, 1], [], []>} : vector<8x32xbf16>, vector<32x32xbf16>, vector<8x32xf32> -> vector<8x32xf32>
    %c2_280 = arith.constant 2 : index
    %c0_281 = arith.constant 0 : index
    %c0_282 = arith.constant 0 : index
    %458 = vector.load %arg6[%c2_280, %c0_281, %c0_282] : memref<3x32x32xbf16, #tpu.memory_space<vmem>>, vector<1x32x32xbf16>
    %459 = vector.shape_cast %458 : vector<1x32x32xbf16> to vector<32x32xbf16>
    %cst_283 = arith.constant dense<0.000000e+00> : vector<8x32xf32>
    %460 = tpu.matmul %438, %459, %cst_283 {dimension_numbers = #tpu.dot_dimension_numbers<[1], [0], [0], [1], [0, 0, 1, 1], [], []>} : vector<8x32xbf16>, vector<32x32xbf16>, vector<8x32xf32> -> vector<8x32xf32>
    %461 = arith.addf %443, %454 : vector<8x32xf32>
    %462 = arith.negf %461 : vector<8x32xf32>
    %463 = math.exp %462 : vector<8x32xf32>
    %cst_284 = arith.constant 1.000000e+00 : f32
    %464 = vector.broadcast %cst_284 : f32 to vector<8x32xf32>
    %465 = arith.addf %464, %463 : vector<8x32xf32>
    %466 = arith.divf %464, %465 : vector<8x32xf32>
    %467 = arith.addf %447, %457 : vector<8x32xf32>
    %468 = arith.negf %467 : vector<8x32xf32>
    %469 = math.exp %468 : vector<8x32xf32>
    %cst_285 = arith.constant 1.000000e+00 : f32
    %470 = vector.broadcast %cst_285 : f32 to vector<8x32xf32>
    %471 = arith.addf %470, %469 : vector<8x32xf32>
    %472 = arith.divf %470, %471 : vector<8x32xf32>
    %473 = arith.addf %460, %49 : vector<8x32xf32>
    %474 = arith.mulf %466, %473 : vector<8x32xf32>
    %475 = arith.addf %451, %474 : vector<8x32xf32>
    %476 = math.tanh %475 : vector<8x32xf32>
    %cst_286 = arith.constant 1.000000e+00 : f32
    %477 = vector.broadcast %cst_286 : f32 to vector<8x32xf32>
    %478 = arith.subf %477, %472 : vector<8x32xf32>
    %479 = arith.mulf %478, %476 : vector<8x32xf32>
    %480 = arith.mulf %472, %395 : vector<8x32xf32>
    %481 = arith.addf %479, %480 : vector<8x32xf32>
    %c5_i32 = arith.constant 5 : i32
    %c8_i32_287 = arith.constant 8 : i32
    %482 = arith.muli %c5_i32, %c8_i32_287 : i32
    %483 = tpu.assume_multiple %482, 8 : i32
    %484 = arith.truncf %437 : vector<8x32xf32> to vector<8x32xbf16>
    %c0_288 = arith.constant 0 : index
    %485 = arith.index_cast %483 : i32 to index
    %c0_289 = arith.constant 0 : index
    %486 = vector.load %arg12[%c0_288, %485, %c0_289] : memref<3x64x32xf32, #tpu.memory_space<vmem>>, vector<1x8x32xf32>
    %487 = vector.shape_cast %486 : vector<1x8x32xf32> to vector<8x32xf32>
    %c1_290 = arith.constant 1 : index
    %488 = arith.index_cast %483 : i32 to index
    %c0_291 = arith.constant 0 : index
    %489 = vector.load %arg12[%c1_290, %488, %c0_291] : memref<3x64x32xf32, #tpu.memory_space<vmem>>, vector<1x8x32xf32>
    %490 = vector.shape_cast %489 : vector<1x8x32xf32> to vector<8x32xf32>
    %c2_292 = arith.constant 2 : index
    %491 = arith.index_cast %483 : i32 to index
    %c0_293 = arith.constant 0 : index
    %492 = vector.load %arg12[%c2_292, %491, %c0_293] : memref<3x64x32xf32, #tpu.memory_space<vmem>>, vector<1x8x32xf32>
    %493 = vector.shape_cast %492 : vector<1x8x32xf32> to vector<8x32xf32>
    %c0_294 = arith.constant 0 : index
    %c0_295 = arith.constant 0 : index
    %c0_296 = arith.constant 0 : index
    %494 = vector.load %arg2[%c0_294, %c0_295, %c0_296] : memref<3x32x32xbf16, #tpu.memory_space<vmem>>, vector<1x32x32xbf16>
    %495 = vector.shape_cast %494 : vector<1x32x32xbf16> to vector<32x32xbf16>
    %cst_297 = arith.constant dense<0.000000e+00> : vector<8x32xf32>
    %496 = tpu.matmul %484, %495, %cst_297 {dimension_numbers = #tpu.dot_dimension_numbers<[1], [0], [0], [1], [0, 0, 1, 1], [], []>} : vector<8x32xbf16>, vector<32x32xbf16>, vector<8x32xf32> -> vector<8x32xf32>
    %c1_298 = arith.constant 1 : index
    %c0_299 = arith.constant 0 : index
    %c0_300 = arith.constant 0 : index
    %497 = vector.load %arg2[%c1_298, %c0_299, %c0_300] : memref<3x32x32xbf16, #tpu.memory_space<vmem>>, vector<1x32x32xbf16>
    %498 = vector.shape_cast %497 : vector<1x32x32xbf16> to vector<32x32xbf16>
    %cst_301 = arith.constant dense<0.000000e+00> : vector<8x32xf32>
    %499 = tpu.matmul %484, %498, %cst_301 {dimension_numbers = #tpu.dot_dimension_numbers<[1], [0], [0], [1], [0, 0, 1, 1], [], []>} : vector<8x32xbf16>, vector<32x32xbf16>, vector<8x32xf32> -> vector<8x32xf32>
    %c2_302 = arith.constant 2 : index
    %c0_303 = arith.constant 0 : index
    %c0_304 = arith.constant 0 : index
    %500 = vector.load %arg2[%c2_302, %c0_303, %c0_304] : memref<3x32x32xbf16, #tpu.memory_space<vmem>>, vector<1x32x32xbf16>
    %501 = vector.shape_cast %500 : vector<1x32x32xbf16> to vector<32x32xbf16>
    %cst_305 = arith.constant dense<0.000000e+00> : vector<8x32xf32>
    %502 = tpu.matmul %484, %501, %cst_305 {dimension_numbers = #tpu.dot_dimension_numbers<[1], [0], [0], [1], [0, 0, 1, 1], [], []>} : vector<8x32xbf16>, vector<32x32xbf16>, vector<8x32xf32> -> vector<8x32xf32>
    %503 = arith.addf %487, %496 : vector<8x32xf32>
    %504 = arith.negf %503 : vector<8x32xf32>
    %505 = math.exp %504 : vector<8x32xf32>
    %cst_306 = arith.constant 1.000000e+00 : f32
    %506 = vector.broadcast %cst_306 : f32 to vector<8x32xf32>
    %507 = arith.addf %506, %505 : vector<8x32xf32>
    %508 = arith.divf %506, %507 : vector<8x32xf32>
    %509 = arith.addf %490, %499 : vector<8x32xf32>
    %510 = arith.negf %509 : vector<8x32xf32>
    %511 = math.exp %510 : vector<8x32xf32>
    %cst_307 = arith.constant 1.000000e+00 : f32
    %512 = vector.broadcast %cst_307 : f32 to vector<8x32xf32>
    %513 = arith.addf %512, %511 : vector<8x32xf32>
    %514 = arith.divf %512, %513 : vector<8x32xf32>
    %515 = arith.addf %502, %34 : vector<8x32xf32>
    %516 = arith.mulf %508, %515 : vector<8x32xf32>
    %517 = arith.addf %493, %516 : vector<8x32xf32>
    %518 = math.tanh %517 : vector<8x32xf32>
    %cst_308 = arith.constant 1.000000e+00 : f32
    %519 = vector.broadcast %cst_308 : f32 to vector<8x32xf32>
    %520 = arith.subf %519, %514 : vector<8x32xf32>
    %521 = arith.mulf %520, %518 : vector<8x32xf32>
    %522 = arith.mulf %514, %437 : vector<8x32xf32>
    %523 = arith.addf %521, %522 : vector<8x32xf32>
    %524 = arith.truncf %481 : vector<8x32xf32> to vector<8x32xbf16>
    %525 = arith.truncf %523 : vector<8x32xf32> to vector<8x32xbf16>
    %c0_309 = arith.constant 0 : index
    %c0_310 = arith.constant 0 : index
    %c0_311 = arith.constant 0 : index
    %526 = vector.load %arg5[%c0_309, %c0_310, %c0_311] : memref<3x32x32xbf16, #tpu.memory_space<vmem>>, vector<1x32x32xbf16>
    %527 = vector.shape_cast %526 : vector<1x32x32xbf16> to vector<32x32xbf16>
    %cst_312 = arith.constant dense<0.000000e+00> : vector<8x32xf32>
    %528 = tpu.matmul %525, %527, %cst_312 {dimension_numbers = #tpu.dot_dimension_numbers<[1], [0], [0], [1], [0, 0, 1, 1], [], []>} : vector<8x32xbf16>, vector<32x32xbf16>, vector<8x32xf32> -> vector<8x32xf32>
    %529 = arith.addf %528, %38 : vector<8x32xf32>
    %c1_313 = arith.constant 1 : index
    %c0_314 = arith.constant 0 : index
    %c0_315 = arith.constant 0 : index
    %530 = vector.load %arg5[%c1_313, %c0_314, %c0_315] : memref<3x32x32xbf16, #tpu.memory_space<vmem>>, vector<1x32x32xbf16>
    %531 = vector.shape_cast %530 : vector<1x32x32xbf16> to vector<32x32xbf16>
    %cst_316 = arith.constant dense<0.000000e+00> : vector<8x32xf32>
    %532 = tpu.matmul %525, %531, %cst_316 {dimension_numbers = #tpu.dot_dimension_numbers<[1], [0], [0], [1], [0, 0, 1, 1], [], []>} : vector<8x32xbf16>, vector<32x32xbf16>, vector<8x32xf32> -> vector<8x32xf32>
    %533 = arith.addf %532, %42 : vector<8x32xf32>
    %c2_317 = arith.constant 2 : index
    %c0_318 = arith.constant 0 : index
    %c0_319 = arith.constant 0 : index
    %534 = vector.load %arg5[%c2_317, %c0_318, %c0_319] : memref<3x32x32xbf16, #tpu.memory_space<vmem>>, vector<1x32x32xbf16>
    %535 = vector.shape_cast %534 : vector<1x32x32xbf16> to vector<32x32xbf16>
    %cst_320 = arith.constant dense<0.000000e+00> : vector<8x32xf32>
    %536 = tpu.matmul %525, %535, %cst_320 {dimension_numbers = #tpu.dot_dimension_numbers<[1], [0], [0], [1], [0, 0, 1, 1], [], []>} : vector<8x32xbf16>, vector<32x32xbf16>, vector<8x32xf32> -> vector<8x32xf32>
    %537 = arith.addf %536, %46 : vector<8x32xf32>
    %c0_321 = arith.constant 0 : index
    %c0_322 = arith.constant 0 : index
    %c0_323 = arith.constant 0 : index
    %538 = vector.load %arg6[%c0_321, %c0_322, %c0_323] : memref<3x32x32xbf16, #tpu.memory_space<vmem>>, vector<1x32x32xbf16>
    %539 = vector.shape_cast %538 : vector<1x32x32xbf16> to vector<32x32xbf16>
    %cst_324 = arith.constant dense<0.000000e+00> : vector<8x32xf32>
    %540 = tpu.matmul %524, %539, %cst_324 {dimension_numbers = #tpu.dot_dimension_numbers<[1], [0], [0], [1], [0, 0, 1, 1], [], []>} : vector<8x32xbf16>, vector<32x32xbf16>, vector<8x32xf32> -> vector<8x32xf32>
    %c1_325 = arith.constant 1 : index
    %c0_326 = arith.constant 0 : index
    %c0_327 = arith.constant 0 : index
    %541 = vector.load %arg6[%c1_325, %c0_326, %c0_327] : memref<3x32x32xbf16, #tpu.memory_space<vmem>>, vector<1x32x32xbf16>
    %542 = vector.shape_cast %541 : vector<1x32x32xbf16> to vector<32x32xbf16>
    %cst_328 = arith.constant dense<0.000000e+00> : vector<8x32xf32>
    %543 = tpu.matmul %524, %542, %cst_328 {dimension_numbers = #tpu.dot_dimension_numbers<[1], [0], [0], [1], [0, 0, 1, 1], [], []>} : vector<8x32xbf16>, vector<32x32xbf16>, vector<8x32xf32> -> vector<8x32xf32>
    %c2_329 = arith.constant 2 : index
    %c0_330 = arith.constant 0 : index
    %c0_331 = arith.constant 0 : index
    %544 = vector.load %arg6[%c2_329, %c0_330, %c0_331] : memref<3x32x32xbf16, #tpu.memory_space<vmem>>, vector<1x32x32xbf16>
    %545 = vector.shape_cast %544 : vector<1x32x32xbf16> to vector<32x32xbf16>
    %cst_332 = arith.constant dense<0.000000e+00> : vector<8x32xf32>
    %546 = tpu.matmul %524, %545, %cst_332 {dimension_numbers = #tpu.dot_dimension_numbers<[1], [0], [0], [1], [0, 0, 1, 1], [], []>} : vector<8x32xbf16>, vector<32x32xbf16>, vector<8x32xf32> -> vector<8x32xf32>
    %547 = arith.addf %529, %540 : vector<8x32xf32>
    %548 = arith.negf %547 : vector<8x32xf32>
    %549 = math.exp %548 : vector<8x32xf32>
    %cst_333 = arith.constant 1.000000e+00 : f32
    %550 = vector.broadcast %cst_333 : f32 to vector<8x32xf32>
    %551 = arith.addf %550, %549 : vector<8x32xf32>
    %552 = arith.divf %550, %551 : vector<8x32xf32>
    %553 = arith.addf %533, %543 : vector<8x32xf32>
    %554 = arith.negf %553 : vector<8x32xf32>
    %555 = math.exp %554 : vector<8x32xf32>
    %cst_334 = arith.constant 1.000000e+00 : f32
    %556 = vector.broadcast %cst_334 : f32 to vector<8x32xf32>
    %557 = arith.addf %556, %555 : vector<8x32xf32>
    %558 = arith.divf %556, %557 : vector<8x32xf32>
    %559 = arith.addf %546, %49 : vector<8x32xf32>
    %560 = arith.mulf %552, %559 : vector<8x32xf32>
    %561 = arith.addf %537, %560 : vector<8x32xf32>
    %562 = math.tanh %561 : vector<8x32xf32>
    %cst_335 = arith.constant 1.000000e+00 : f32
    %563 = vector.broadcast %cst_335 : f32 to vector<8x32xf32>
    %564 = arith.subf %563, %558 : vector<8x32xf32>
    %565 = arith.mulf %564, %562 : vector<8x32xf32>
    %566 = arith.mulf %558, %481 : vector<8x32xf32>
    %567 = arith.addf %565, %566 : vector<8x32xf32>
    %c6_i32 = arith.constant 6 : i32
    %c8_i32_336 = arith.constant 8 : i32
    %568 = arith.muli %c6_i32, %c8_i32_336 : i32
    %569 = tpu.assume_multiple %568, 8 : i32
    %570 = arith.truncf %523 : vector<8x32xf32> to vector<8x32xbf16>
    %c0_337 = arith.constant 0 : index
    %571 = arith.index_cast %569 : i32 to index
    %c0_338 = arith.constant 0 : index
    %572 = vector.load %arg12[%c0_337, %571, %c0_338] : memref<3x64x32xf32, #tpu.memory_space<vmem>>, vector<1x8x32xf32>
    %573 = vector.shape_cast %572 : vector<1x8x32xf32> to vector<8x32xf32>
    %c1_339 = arith.constant 1 : index
    %574 = arith.index_cast %569 : i32 to index
    %c0_340 = arith.constant 0 : index
    %575 = vector.load %arg12[%c1_339, %574, %c0_340] : memref<3x64x32xf32, #tpu.memory_space<vmem>>, vector<1x8x32xf32>
    %576 = vector.shape_cast %575 : vector<1x8x32xf32> to vector<8x32xf32>
    %c2_341 = arith.constant 2 : index
    %577 = arith.index_cast %569 : i32 to index
    %c0_342 = arith.constant 0 : index
    %578 = vector.load %arg12[%c2_341, %577, %c0_342] : memref<3x64x32xf32, #tpu.memory_space<vmem>>, vector<1x8x32xf32>
    %579 = vector.shape_cast %578 : vector<1x8x32xf32> to vector<8x32xf32>
    %c0_343 = arith.constant 0 : index
    %c0_344 = arith.constant 0 : index
    %c0_345 = arith.constant 0 : index
    %580 = vector.load %arg2[%c0_343, %c0_344, %c0_345] : memref<3x32x32xbf16, #tpu.memory_space<vmem>>, vector<1x32x32xbf16>
    %581 = vector.shape_cast %580 : vector<1x32x32xbf16> to vector<32x32xbf16>
    %cst_346 = arith.constant dense<0.000000e+00> : vector<8x32xf32>
    %582 = tpu.matmul %570, %581, %cst_346 {dimension_numbers = #tpu.dot_dimension_numbers<[1], [0], [0], [1], [0, 0, 1, 1], [], []>} : vector<8x32xbf16>, vector<32x32xbf16>, vector<8x32xf32> -> vector<8x32xf32>
    %c1_347 = arith.constant 1 : index
    %c0_348 = arith.constant 0 : index
    %c0_349 = arith.constant 0 : index
    %583 = vector.load %arg2[%c1_347, %c0_348, %c0_349] : memref<3x32x32xbf16, #tpu.memory_space<vmem>>, vector<1x32x32xbf16>
    %584 = vector.shape_cast %583 : vector<1x32x32xbf16> to vector<32x32xbf16>
    %cst_350 = arith.constant dense<0.000000e+00> : vector<8x32xf32>
    %585 = tpu.matmul %570, %584, %cst_350 {dimension_numbers = #tpu.dot_dimension_numbers<[1], [0], [0], [1], [0, 0, 1, 1], [], []>} : vector<8x32xbf16>, vector<32x32xbf16>, vector<8x32xf32> -> vector<8x32xf32>
    %c2_351 = arith.constant 2 : index
    %c0_352 = arith.constant 0 : index
    %c0_353 = arith.constant 0 : index
    %586 = vector.load %arg2[%c2_351, %c0_352, %c0_353] : memref<3x32x32xbf16, #tpu.memory_space<vmem>>, vector<1x32x32xbf16>
    %587 = vector.shape_cast %586 : vector<1x32x32xbf16> to vector<32x32xbf16>
    %cst_354 = arith.constant dense<0.000000e+00> : vector<8x32xf32>
    %588 = tpu.matmul %570, %587, %cst_354 {dimension_numbers = #tpu.dot_dimension_numbers<[1], [0], [0], [1], [0, 0, 1, 1], [], []>} : vector<8x32xbf16>, vector<32x32xbf16>, vector<8x32xf32> -> vector<8x32xf32>
    %589 = arith.addf %573, %582 : vector<8x32xf32>
    %590 = arith.negf %589 : vector<8x32xf32>
    %591 = math.exp %590 : vector<8x32xf32>
    %cst_355 = arith.constant 1.000000e+00 : f32
    %592 = vector.broadcast %cst_355 : f32 to vector<8x32xf32>
    %593 = arith.addf %592, %591 : vector<8x32xf32>
    %594 = arith.divf %592, %593 : vector<8x32xf32>
    %595 = arith.addf %576, %585 : vector<8x32xf32>
    %596 = arith.negf %595 : vector<8x32xf32>
    %597 = math.exp %596 : vector<8x32xf32>
    %cst_356 = arith.constant 1.000000e+00 : f32
    %598 = vector.broadcast %cst_356 : f32 to vector<8x32xf32>
    %599 = arith.addf %598, %597 : vector<8x32xf32>
    %600 = arith.divf %598, %599 : vector<8x32xf32>
    %601 = arith.addf %588, %34 : vector<8x32xf32>
    %602 = arith.mulf %594, %601 : vector<8x32xf32>
    %603 = arith.addf %579, %602 : vector<8x32xf32>
    %604 = math.tanh %603 : vector<8x32xf32>
    %cst_357 = arith.constant 1.000000e+00 : f32
    %605 = vector.broadcast %cst_357 : f32 to vector<8x32xf32>
    %606 = arith.subf %605, %600 : vector<8x32xf32>
    %607 = arith.mulf %606, %604 : vector<8x32xf32>
    %608 = arith.mulf %600, %523 : vector<8x32xf32>
    %609 = arith.addf %607, %608 : vector<8x32xf32>
    %610 = arith.truncf %567 : vector<8x32xf32> to vector<8x32xbf16>
    %611 = arith.truncf %609 : vector<8x32xf32> to vector<8x32xbf16>
    %c0_358 = arith.constant 0 : index
    %c0_359 = arith.constant 0 : index
    %c0_360 = arith.constant 0 : index
    %612 = vector.load %arg5[%c0_358, %c0_359, %c0_360] : memref<3x32x32xbf16, #tpu.memory_space<vmem>>, vector<1x32x32xbf16>
    %613 = vector.shape_cast %612 : vector<1x32x32xbf16> to vector<32x32xbf16>
    %cst_361 = arith.constant dense<0.000000e+00> : vector<8x32xf32>
    %614 = tpu.matmul %611, %613, %cst_361 {dimension_numbers = #tpu.dot_dimension_numbers<[1], [0], [0], [1], [0, 0, 1, 1], [], []>} : vector<8x32xbf16>, vector<32x32xbf16>, vector<8x32xf32> -> vector<8x32xf32>
    %615 = arith.addf %614, %38 : vector<8x32xf32>
    %c1_362 = arith.constant 1 : index
    %c0_363 = arith.constant 0 : index
    %c0_364 = arith.constant 0 : index
    %616 = vector.load %arg5[%c1_362, %c0_363, %c0_364] : memref<3x32x32xbf16, #tpu.memory_space<vmem>>, vector<1x32x32xbf16>
    %617 = vector.shape_cast %616 : vector<1x32x32xbf16> to vector<32x32xbf16>
    %cst_365 = arith.constant dense<0.000000e+00> : vector<8x32xf32>
    %618 = tpu.matmul %611, %617, %cst_365 {dimension_numbers = #tpu.dot_dimension_numbers<[1], [0], [0], [1], [0, 0, 1, 1], [], []>} : vector<8x32xbf16>, vector<32x32xbf16>, vector<8x32xf32> -> vector<8x32xf32>
    %619 = arith.addf %618, %42 : vector<8x32xf32>
    %c2_366 = arith.constant 2 : index
    %c0_367 = arith.constant 0 : index
    %c0_368 = arith.constant 0 : index
    %620 = vector.load %arg5[%c2_366, %c0_367, %c0_368] : memref<3x32x32xbf16, #tpu.memory_space<vmem>>, vector<1x32x32xbf16>
    %621 = vector.shape_cast %620 : vector<1x32x32xbf16> to vector<32x32xbf16>
    %cst_369 = arith.constant dense<0.000000e+00> : vector<8x32xf32>
    %622 = tpu.matmul %611, %621, %cst_369 {dimension_numbers = #tpu.dot_dimension_numbers<[1], [0], [0], [1], [0, 0, 1, 1], [], []>} : vector<8x32xbf16>, vector<32x32xbf16>, vector<8x32xf32> -> vector<8x32xf32>
    %623 = arith.addf %622, %46 : vector<8x32xf32>
    %c0_370 = arith.constant 0 : index
    %c0_371 = arith.constant 0 : index
    %c0_372 = arith.constant 0 : index
    %624 = vector.load %arg6[%c0_370, %c0_371, %c0_372] : memref<3x32x32xbf16, #tpu.memory_space<vmem>>, vector<1x32x32xbf16>
    %625 = vector.shape_cast %624 : vector<1x32x32xbf16> to vector<32x32xbf16>
    %cst_373 = arith.constant dense<0.000000e+00> : vector<8x32xf32>
    %626 = tpu.matmul %610, %625, %cst_373 {dimension_numbers = #tpu.dot_dimension_numbers<[1], [0], [0], [1], [0, 0, 1, 1], [], []>} : vector<8x32xbf16>, vector<32x32xbf16>, vector<8x32xf32> -> vector<8x32xf32>
    %c1_374 = arith.constant 1 : index
    %c0_375 = arith.constant 0 : index
    %c0_376 = arith.constant 0 : index
    %627 = vector.load %arg6[%c1_374, %c0_375, %c0_376] : memref<3x32x32xbf16, #tpu.memory_space<vmem>>, vector<1x32x32xbf16>
    %628 = vector.shape_cast %627 : vector<1x32x32xbf16> to vector<32x32xbf16>
    %cst_377 = arith.constant dense<0.000000e+00> : vector<8x32xf32>
    %629 = tpu.matmul %610, %628, %cst_377 {dimension_numbers = #tpu.dot_dimension_numbers<[1], [0], [0], [1], [0, 0, 1, 1], [], []>} : vector<8x32xbf16>, vector<32x32xbf16>, vector<8x32xf32> -> vector<8x32xf32>
    %c2_378 = arith.constant 2 : index
    %c0_379 = arith.constant 0 : index
    %c0_380 = arith.constant 0 : index
    %630 = vector.load %arg6[%c2_378, %c0_379, %c0_380] : memref<3x32x32xbf16, #tpu.memory_space<vmem>>, vector<1x32x32xbf16>
    %631 = vector.shape_cast %630 : vector<1x32x32xbf16> to vector<32x32xbf16>
    %cst_381 = arith.constant dense<0.000000e+00> : vector<8x32xf32>
    %632 = tpu.matmul %610, %631, %cst_381 {dimension_numbers = #tpu.dot_dimension_numbers<[1], [0], [0], [1], [0, 0, 1, 1], [], []>} : vector<8x32xbf16>, vector<32x32xbf16>, vector<8x32xf32> -> vector<8x32xf32>
    %633 = arith.addf %615, %626 : vector<8x32xf32>
    %634 = arith.negf %633 : vector<8x32xf32>
    %635 = math.exp %634 : vector<8x32xf32>
    %cst_382 = arith.constant 1.000000e+00 : f32
    %636 = vector.broadcast %cst_382 : f32 to vector<8x32xf32>
    %637 = arith.addf %636, %635 : vector<8x32xf32>
    %638 = arith.divf %636, %637 : vector<8x32xf32>
    %639 = arith.addf %619, %629 : vector<8x32xf32>
    %640 = arith.negf %639 : vector<8x32xf32>
    %641 = math.exp %640 : vector<8x32xf32>
    %cst_383 = arith.constant 1.000000e+00 : f32
    %642 = vector.broadcast %cst_383 : f32 to vector<8x32xf32>
    %643 = arith.addf %642, %641 : vector<8x32xf32>
    %644 = arith.divf %642, %643 : vector<8x32xf32>
    %645 = arith.addf %632, %49 : vector<8x32xf32>
    %646 = arith.mulf %638, %645 : vector<8x32xf32>
    %647 = arith.addf %623, %646 : vector<8x32xf32>
    %648 = math.tanh %647 : vector<8x32xf32>
    %cst_384 = arith.constant 1.000000e+00 : f32
    %649 = vector.broadcast %cst_384 : f32 to vector<8x32xf32>
    %650 = arith.subf %649, %644 : vector<8x32xf32>
    %651 = arith.mulf %650, %648 : vector<8x32xf32>
    %652 = arith.mulf %644, %567 : vector<8x32xf32>
    %653 = arith.addf %651, %652 : vector<8x32xf32>
    %c7_i32 = arith.constant 7 : i32
    %c8_i32_385 = arith.constant 8 : i32
    %654 = arith.muli %c7_i32, %c8_i32_385 : i32
    %655 = tpu.assume_multiple %654, 8 : i32
    %656 = arith.truncf %609 : vector<8x32xf32> to vector<8x32xbf16>
    %c0_386 = arith.constant 0 : index
    %657 = arith.index_cast %655 : i32 to index
    %c0_387 = arith.constant 0 : index
    %658 = vector.load %arg12[%c0_386, %657, %c0_387] : memref<3x64x32xf32, #tpu.memory_space<vmem>>, vector<1x8x32xf32>
    %659 = vector.shape_cast %658 : vector<1x8x32xf32> to vector<8x32xf32>
    %c1_388 = arith.constant 1 : index
    %660 = arith.index_cast %655 : i32 to index
    %c0_389 = arith.constant 0 : index
    %661 = vector.load %arg12[%c1_388, %660, %c0_389] : memref<3x64x32xf32, #tpu.memory_space<vmem>>, vector<1x8x32xf32>
    %662 = vector.shape_cast %661 : vector<1x8x32xf32> to vector<8x32xf32>
    %c2_390 = arith.constant 2 : index
    %663 = arith.index_cast %655 : i32 to index
    %c0_391 = arith.constant 0 : index
    %664 = vector.load %arg12[%c2_390, %663, %c0_391] : memref<3x64x32xf32, #tpu.memory_space<vmem>>, vector<1x8x32xf32>
    %665 = vector.shape_cast %664 : vector<1x8x32xf32> to vector<8x32xf32>
    %c0_392 = arith.constant 0 : index
    %c0_393 = arith.constant 0 : index
    %c0_394 = arith.constant 0 : index
    %666 = vector.load %arg2[%c0_392, %c0_393, %c0_394] : memref<3x32x32xbf16, #tpu.memory_space<vmem>>, vector<1x32x32xbf16>
    %667 = vector.shape_cast %666 : vector<1x32x32xbf16> to vector<32x32xbf16>
    %cst_395 = arith.constant dense<0.000000e+00> : vector<8x32xf32>
    %668 = tpu.matmul %656, %667, %cst_395 {dimension_numbers = #tpu.dot_dimension_numbers<[1], [0], [0], [1], [0, 0, 1, 1], [], []>} : vector<8x32xbf16>, vector<32x32xbf16>, vector<8x32xf32> -> vector<8x32xf32>
    %c1_396 = arith.constant 1 : index
    %c0_397 = arith.constant 0 : index
    %c0_398 = arith.constant 0 : index
    %669 = vector.load %arg2[%c1_396, %c0_397, %c0_398] : memref<3x32x32xbf16, #tpu.memory_space<vmem>>, vector<1x32x32xbf16>
    %670 = vector.shape_cast %669 : vector<1x32x32xbf16> to vector<32x32xbf16>
    %cst_399 = arith.constant dense<0.000000e+00> : vector<8x32xf32>
    %671 = tpu.matmul %656, %670, %cst_399 {dimension_numbers = #tpu.dot_dimension_numbers<[1], [0], [0], [1], [0, 0, 1, 1], [], []>} : vector<8x32xbf16>, vector<32x32xbf16>, vector<8x32xf32> -> vector<8x32xf32>
    %c2_400 = arith.constant 2 : index
    %c0_401 = arith.constant 0 : index
    %c0_402 = arith.constant 0 : index
    %672 = vector.load %arg2[%c2_400, %c0_401, %c0_402] : memref<3x32x32xbf16, #tpu.memory_space<vmem>>, vector<1x32x32xbf16>
    %673 = vector.shape_cast %672 : vector<1x32x32xbf16> to vector<32x32xbf16>
    %cst_403 = arith.constant dense<0.000000e+00> : vector<8x32xf32>
    %674 = tpu.matmul %656, %673, %cst_403 {dimension_numbers = #tpu.dot_dimension_numbers<[1], [0], [0], [1], [0, 0, 1, 1], [], []>} : vector<8x32xbf16>, vector<32x32xbf16>, vector<8x32xf32> -> vector<8x32xf32>
    %675 = arith.addf %659, %668 : vector<8x32xf32>
    %676 = arith.negf %675 : vector<8x32xf32>
    %677 = math.exp %676 : vector<8x32xf32>
    %cst_404 = arith.constant 1.000000e+00 : f32
    %678 = vector.broadcast %cst_404 : f32 to vector<8x32xf32>
    %679 = arith.addf %678, %677 : vector<8x32xf32>
    %680 = arith.divf %678, %679 : vector<8x32xf32>
    %681 = arith.addf %662, %671 : vector<8x32xf32>
    %682 = arith.negf %681 : vector<8x32xf32>
    %683 = math.exp %682 : vector<8x32xf32>
    %cst_405 = arith.constant 1.000000e+00 : f32
    %684 = vector.broadcast %cst_405 : f32 to vector<8x32xf32>
    %685 = arith.addf %684, %683 : vector<8x32xf32>
    %686 = arith.divf %684, %685 : vector<8x32xf32>
    %687 = arith.addf %674, %34 : vector<8x32xf32>
    %688 = arith.mulf %680, %687 : vector<8x32xf32>
    %689 = arith.addf %665, %688 : vector<8x32xf32>
    %690 = math.tanh %689 : vector<8x32xf32>
    %cst_406 = arith.constant 1.000000e+00 : f32
    %691 = vector.broadcast %cst_406 : f32 to vector<8x32xf32>
    %692 = arith.subf %691, %686 : vector<8x32xf32>
    %693 = arith.mulf %692, %690 : vector<8x32xf32>
    %694 = arith.mulf %686, %609 : vector<8x32xf32>
    %695 = arith.addf %693, %694 : vector<8x32xf32>
    %696 = arith.truncf %653 : vector<8x32xf32> to vector<8x32xbf16>
    %697 = arith.truncf %695 : vector<8x32xf32> to vector<8x32xbf16>
    %c0_407 = arith.constant 0 : index
    %c0_408 = arith.constant 0 : index
    %c0_409 = arith.constant 0 : index
    %698 = vector.load %arg5[%c0_407, %c0_408, %c0_409] : memref<3x32x32xbf16, #tpu.memory_space<vmem>>, vector<1x32x32xbf16>
    %699 = vector.shape_cast %698 : vector<1x32x32xbf16> to vector<32x32xbf16>
    %cst_410 = arith.constant dense<0.000000e+00> : vector<8x32xf32>
    %700 = tpu.matmul %697, %699, %cst_410 {dimension_numbers = #tpu.dot_dimension_numbers<[1], [0], [0], [1], [0, 0, 1, 1], [], []>} : vector<8x32xbf16>, vector<32x32xbf16>, vector<8x32xf32> -> vector<8x32xf32>
    %701 = arith.addf %700, %38 : vector<8x32xf32>
    %c1_411 = arith.constant 1 : index
    %c0_412 = arith.constant 0 : index
    %c0_413 = arith.constant 0 : index
    %702 = vector.load %arg5[%c1_411, %c0_412, %c0_413] : memref<3x32x32xbf16, #tpu.memory_space<vmem>>, vector<1x32x32xbf16>
    %703 = vector.shape_cast %702 : vector<1x32x32xbf16> to vector<32x32xbf16>
    %cst_414 = arith.constant dense<0.000000e+00> : vector<8x32xf32>
    %704 = tpu.matmul %697, %703, %cst_414 {dimension_numbers = #tpu.dot_dimension_numbers<[1], [0], [0], [1], [0, 0, 1, 1], [], []>} : vector<8x32xbf16>, vector<32x32xbf16>, vector<8x32xf32> -> vector<8x32xf32>
    %705 = arith.addf %704, %42 : vector<8x32xf32>
    %c2_415 = arith.constant 2 : index
    %c0_416 = arith.constant 0 : index
    %c0_417 = arith.constant 0 : index
    %706 = vector.load %arg5[%c2_415, %c0_416, %c0_417] : memref<3x32x32xbf16, #tpu.memory_space<vmem>>, vector<1x32x32xbf16>
    %707 = vector.shape_cast %706 : vector<1x32x32xbf16> to vector<32x32xbf16>
    %cst_418 = arith.constant dense<0.000000e+00> : vector<8x32xf32>
    %708 = tpu.matmul %697, %707, %cst_418 {dimension_numbers = #tpu.dot_dimension_numbers<[1], [0], [0], [1], [0, 0, 1, 1], [], []>} : vector<8x32xbf16>, vector<32x32xbf16>, vector<8x32xf32> -> vector<8x32xf32>
    %709 = arith.addf %708, %46 : vector<8x32xf32>
    %c0_419 = arith.constant 0 : index
    %c0_420 = arith.constant 0 : index
    %c0_421 = arith.constant 0 : index
    %710 = vector.load %arg6[%c0_419, %c0_420, %c0_421] : memref<3x32x32xbf16, #tpu.memory_space<vmem>>, vector<1x32x32xbf16>
    %711 = vector.shape_cast %710 : vector<1x32x32xbf16> to vector<32x32xbf16>
    %cst_422 = arith.constant dense<0.000000e+00> : vector<8x32xf32>
    %712 = tpu.matmul %696, %711, %cst_422 {dimension_numbers = #tpu.dot_dimension_numbers<[1], [0], [0], [1], [0, 0, 1, 1], [], []>} : vector<8x32xbf16>, vector<32x32xbf16>, vector<8x32xf32> -> vector<8x32xf32>
    %c1_423 = arith.constant 1 : index
    %c0_424 = arith.constant 0 : index
    %c0_425 = arith.constant 0 : index
    %713 = vector.load %arg6[%c1_423, %c0_424, %c0_425] : memref<3x32x32xbf16, #tpu.memory_space<vmem>>, vector<1x32x32xbf16>
    %714 = vector.shape_cast %713 : vector<1x32x32xbf16> to vector<32x32xbf16>
    %cst_426 = arith.constant dense<0.000000e+00> : vector<8x32xf32>
    %715 = tpu.matmul %696, %714, %cst_426 {dimension_numbers = #tpu.dot_dimension_numbers<[1], [0], [0], [1], [0, 0, 1, 1], [], []>} : vector<8x32xbf16>, vector<32x32xbf16>, vector<8x32xf32> -> vector<8x32xf32>
    %c2_427 = arith.constant 2 : index
    %c0_428 = arith.constant 0 : index
    %c0_429 = arith.constant 0 : index
    %716 = vector.load %arg6[%c2_427, %c0_428, %c0_429] : memref<3x32x32xbf16, #tpu.memory_space<vmem>>, vector<1x32x32xbf16>
    %717 = vector.shape_cast %716 : vector<1x32x32xbf16> to vector<32x32xbf16>
    %cst_430 = arith.constant dense<0.000000e+00> : vector<8x32xf32>
    %718 = tpu.matmul %696, %717, %cst_430 {dimension_numbers = #tpu.dot_dimension_numbers<[1], [0], [0], [1], [0, 0, 1, 1], [], []>} : vector<8x32xbf16>, vector<32x32xbf16>, vector<8x32xf32> -> vector<8x32xf32>
    %719 = arith.addf %701, %712 : vector<8x32xf32>
    %720 = arith.negf %719 : vector<8x32xf32>
    %721 = math.exp %720 : vector<8x32xf32>
    %cst_431 = arith.constant 1.000000e+00 : f32
    %722 = vector.broadcast %cst_431 : f32 to vector<8x32xf32>
    %723 = arith.addf %722, %721 : vector<8x32xf32>
    %724 = arith.divf %722, %723 : vector<8x32xf32>
    %725 = arith.addf %705, %715 : vector<8x32xf32>
    %726 = arith.negf %725 : vector<8x32xf32>
    %727 = math.exp %726 : vector<8x32xf32>
    %cst_432 = arith.constant 1.000000e+00 : f32
    %728 = vector.broadcast %cst_432 : f32 to vector<8x32xf32>
    %729 = arith.addf %728, %727 : vector<8x32xf32>
    %730 = arith.divf %728, %729 : vector<8x32xf32>
    %731 = arith.addf %718, %49 : vector<8x32xf32>
    %732 = arith.mulf %724, %731 : vector<8x32xf32>
    %733 = arith.addf %709, %732 : vector<8x32xf32>
    %734 = math.tanh %733 : vector<8x32xf32>
    %cst_433 = arith.constant 1.000000e+00 : f32
    %735 = vector.broadcast %cst_433 : f32 to vector<8x32xf32>
    %736 = arith.subf %735, %730 : vector<8x32xf32>
    %737 = arith.mulf %736, %734 : vector<8x32xf32>
    %738 = arith.mulf %730, %653 : vector<8x32xf32>
    %739 = arith.addf %737, %738 : vector<8x32xf32>
    %c8_i32_434 = arith.constant 8 : i32
    %740 = arith.truncf %739 : vector<8x32xf32> to vector<8x32xbf16>
    %c0_435 = arith.constant 0 : index
    %c0_436 = arith.constant 0 : index
    %741 = vector.load %arg9[%c0_435, %c0_436] : memref<32x3xbf16, #tpu.memory_space<vmem>>, vector<32x3xbf16>
    %cst_437 = arith.constant dense<0.000000e+00> : vector<8x3xf32>
    %742 = tpu.matmul %740, %741, %cst_437 {dimension_numbers = #tpu.dot_dimension_numbers<[1], [0], [0], [1], [0, 0, 1, 1], [], []>} : vector<8x32xbf16>, vector<32x3xbf16>, vector<8x3xf32> -> vector<8x3xf32>
    %c0_438 = arith.constant 0 : index
    %c0_439 = arith.constant 0 : index
    %743 = vector.load %arg10[%c0_438, %c0_439] : memref<1x3xf32, #tpu.memory_space<vmem>>, vector<1x3xf32>
    %744 = vector.broadcast %743 : vector<1x3xf32> to vector<8x3xf32>
    %745 = arith.addf %742, %744 : vector<8x3xf32>
    %746 = vector.extract_strided_slice %745 {offsets = [0, 0], sizes = [2, 3], strides = [1, 1]} : vector<8x3xf32> to vector<2x3xf32>
    %c0_440 = arith.constant 0 : index
    %c0_441 = arith.constant 0 : index
    %747 = vector.load %arg11[%c0_440, %c0_441] : memref<2x3xf32, #tpu.memory_space<vmem>>, vector<2x3xf32>
    tpu.vector_store %arg11[%c0_440, %c0_441], %746 {strides = array<i32>} : memref<2x3xf32, #tpu.memory_space<vmem>>, vector<2x3xf32>,
    return
  }
}

</mosaic_0001>

<llo_original>
// kernel: gru_forward.1
$region0: #{gru_forward.1}
  #allocation0 [shape = 'u32[]', space=smem, size = 0x4, offset = 0x4, fixed_abs, tag = 'smem constant byte address 0x4 - core index']
  #allocation1 [shape = 'u32[144,128]{1,0:T(1,128)}', space=vmem, size = 0x12000, scoped, tag = 'internal scratch']
  #allocation2 [shape = 'f32[3,64,32]{2,1,0:T(8,128)}', space=vmem, size = 0x18000, scoped, tag = 'scratch operand']
  %s0 = inlined_call_operand.vmem [shape: f32[64,4], index: 0, kind: input, shape index: {}]
  %s1 = inlined_call_operand.vmem [shape: bf16[3,4,32], index: 1, kind: input, shape index: {}]
  %s2 = inlined_call_operand.vmem [shape: bf16[3,32,32], index: 2, kind: input, shape index: {}]
  %s3 = inlined_call_operand.vmem [shape: f32[3,1,32], index: 3, kind: input, shape index: {}]
  %s4 = inlined_call_operand.vmem [shape: f32[1,32], index: 4, kind: input, shape index: {}]
  %s5 = inlined_call_operand.vmem [shape: bf16[3,32,32], index: 5, kind: input, shape index: {}]
  %s6 = inlined_call_operand.hbm [shape: bf16[3,32,32], index: 6, kind: input, shape index: {}]
  %s7 = inlined_call_operand.vmem [shape: f32[3,1,32], index: 7, kind: input, shape index: {}]
  %s8 = inlined_call_operand.vmem [shape: f32[1,32], index: 8, kind: input, shape index: {}]
  %s9 = inlined_call_operand.vmem [shape: bf16[32,3], index: 9, kind: input, shape index: {}]
  %s10 = inlined_call_operand.vmem [shape: f32[1,3], index: 10, kind: input, shape index: {}]
  %s11 = inlined_call_operand.hbm [shape: f32[2,3], index: 11, kind: output, shape index: {}]
  %s12 = sld [smem:[#allocation0]]
  $region58: #{gru_forward.1} parent=0
    _
  %s14 = ssub.s32 1, %s12
  %s15 = scalar_select 0, %s14, %s12
  $region1: #{gru_forward.1} parent=0
    #allocation3 [shape = 'u8[24576]{0}', space=vmem, size = 0x6000, scoped, tag = 'input window, operand 6, single buffered']
    #allocation4 [shape = 's32[1]{0}', space=sflag, size = 0x4, scoped, tag = 'scoped memory for gru_forward.1']
    #allocation5 [shape = 's32[1]{0}', space=sflag, size = 0x4, scoped, tag = 'scoped memory for gru_forward.1']
    #allocation6 [shape = 'u8[1024]{0}', space=vmem, size = 0x400, scoped, tag = 'output window, operand 0, single buffered']
    %16 = vsyncpa [#allocation4], 0
    %17 = vsyncpa [#allocation5], 0
    // Predicated region
    $region2: #{gru_forward.1} parent=1 // pred_check
      _
    $region3: #{gru_forward.1} parent=1 // pred_check_branch
      %19 = sbr.rel (0) target = $region5
    $region4: #{gru_forward.1} parent=1 // pred_region
      _
    $region5: #{gru_forward.1} parent=1 // pred_fallthru
      _
    // Predicated region
    $region6: #{gru_forward.1} parent=1 // pred_check
      _
    $region7: #{gru_forward.1} parent=1 // pred_check_branch
      %21 = sbr.rel (0) target = $region9
    $region8: #{gru_forward.1} parent=1 // pred_region
      _
    $region9: #{gru_forward.1} parent=1 // pred_fallthru
      _
    // Predicated region
    $region10: #{gru_forward.1} parent=1 // pred_check
      _
    $region11: #{gru_forward.1} parent=1 // pred_check_branch
      %23 = sbr.rel (0) target = $region13
    $region12: #{gru_forward.1} parent=1 // pred_region
      _
    $region13: #{gru_forward.1} parent=1 // pred_fallthru
      _
    // Predicated region
    $region14: #{gru_forward.1} parent=1 // pred_check
      _
    $region15: #{gru_forward.1} parent=1 // pred_check_branch
      %25 = sbr.rel (0) target = $region17
    $region16: #{gru_forward.1} parent=1 // pred_region
      _
    $region17: #{gru_forward.1} parent=1 // pred_fallthru
      _
    // Predicated region
    $region18: #{gru_forward.1} parent=1 // pred_check
      _
    $region19: #{gru_forward.1} parent=1 // pred_check_branch
      %27 = sbr.rel (0) target = $region21
    $region20: #{gru_forward.1} parent=1 // pred_region
      _
    $region21: #{gru_forward.1} parent=1 // pred_fallthru
      _
    // Predicated region
    $region22: #{gru_forward.1} parent=1 // pred_check
      _
    $region23: #{gru_forward.1} parent=1 // pred_check_branch
      %29 = sbr.rel (0) target = $region25
    $region24: #{gru_forward.1} parent=1 // pred_region
      _
    $region25: #{gru_forward.1} parent=1 // pred_fallthru
      _
    // Predicated region
    $region26: #{gru_forward.1} parent=1 // pred_check
      _
    $region27: #{gru_forward.1} parent=1 // pred_check_branch
      %31 = sbr.rel (0) target = $region29
    $region28: #{gru_forward.1} parent=1 // pred_region
      %s33 = ssub.s32 768, 768
      %34 = vsyncadd [#allocation4], %s33
      %s35 = sshll.u32 [#allocation3], 4
      %s36 = int_to_ptr.vmem [resolvable:$true] %s35
      %41 = dma.hbm_to_vmem [thread:$0]  %s6, 768, %s36, [#allocation4], 64, 64, 4
    $region29: #{gru_forward.1} parent=1 // pred_fallthru
      _
    // Predicated region
    $region30: #{gru_forward.1} parent=1 // pred_check
      _
    $region31: #{gru_forward.1} parent=1 // pred_check_branch
      %43 = sbr.rel (0) target = $region33
    $region32: #{gru_forward.1} parent=1 // pred_region
      _
    $region33: #{gru_forward.1} parent=1 // pred_fallthru
      _
    // Predicated region
    $region34: #{gru_forward.1} parent=1 // pred_check
      _
    $region35: #{gru_forward.1} parent=1 // pred_check_branch
      %45 = sbr.rel (0) target = $region37
    $region36: #{gru_forward.1} parent=1 // pred_region
      _
    $region37: #{gru_forward.1} parent=1 // pred_fallthru
      _
    // Predicated region
    $region38: #{gru_forward.1} parent=1 // pred_check
      _
    $region39: #{gru_forward.1} parent=1 // pred_check_branch
      %47 = sbr.rel (0) target = $region41
    $region40: #{gru_forward.1} parent=1 // pred_region
      _
    $region41: #{gru_forward.1} parent=1 // pred_fallthru
      _
    // Predicated region
    $region42: #{gru_forward.1} parent=1 // pred_check
      _
    $region43: #{gru_forward.1} parent=1 // pred_check_branch
      %49 = sbr.rel (0) target = $region45
    $region44: #{gru_forward.1} parent=1 // pred_region
      _
    $region45: #{gru_forward.1} parent=1 // pred_fallthru
      _
    // Predicated region
    $region46: #{gru_forward.1} parent=1 // pred_check
      _
    $region47: #{gru_forward.1} parent=1 // pred_check_branch
      %51 = sbr.rel (0) target = $region49
    $region48: #{gru_forward.1} parent=1 // pred_region
      %52 = dma.done [#allocation4], 768
    $region49: #{gru_forward.1} parent=1 // pred_fallthru
      _
    %v54 = vld [vmem:[%s0] sm:$0xff]
    %v55 = vld [vmem:[%s0 + $0x8] sm:$0xff]
    %v56 = vld [vmem:[%s0 + $0x10] sm:$0xff]
    %v57 = vld [vmem:[%s0 + $0x18] sm:$0xff]
    %v58 = vld [vmem:[%s0 + $0x20] sm:$0xff]
    %v59 = vld [vmem:[%s0 + $0x28] sm:$0xff]
    %v60 = vld [vmem:[%s0 + $0x30] sm:$0xff]
    %v61 = vld [vmem:[%s0 + $0x38] sm:$0xff]
    %v62 = vpack.c.bf16 %v55, %v54
    %v63 = vpack.c.bf16 %v57, %v56
    %v64 = vpack.c.bf16 %v59, %v58
    %v65 = vpack.c.bf16 %v61, %v60
    %v66 = vld [vmem:[%s1] sm:$0x3]
    %v67 = vld [vmem:[%s3] sm:$0x1]
    %v69 = vlaneseq
    %v70 = vshrl.u32 %v69, 7
    %v71 = vsub.s32 0, %v70
    %v72 = vrot.slane %v67, %v71
    %vm74 = vcmask 31744
    %v76 = vsel %vm74, %v62, 0
    %v79 = vsel %vm74, %v63, 0
    %v82 = vsel %vm74, %v64, 0
    %v85 = vsel %vm74, %v65, 0
    %vm87 = vcmask 1041408
    %v89 = vsel %vm87, %v66, 0
    %91 = vmatprep.subr.bf16.mxu0 0
    %92 = vmatpush1.bf16.msra.mxu0 %v89
    %93 = vmatprep.subr.bf16.mxu0 0
    %94 = vmatpush1.bf16.msra.mxu0 0
    %95 = vmatprep.subr.bf16.mxu0 0
    %96 = vmatpush1.bf16.msra.mxu0 0
    %97 = vmatprep.subr.bf16.mxu0 0
    %98 = vmatpush1.bf16.msra.mxu0 0
    %99 = vmatprep.subr.bf16.mxu0 0
    %100 = vmatpush1.bf16.msra.mxu0 0
    %101 = vmatprep.subr.bf16.mxu0 0
    %102 = vmatpush1.bf16.msra.mxu0 0
    %103 = vmatprep.subr.bf16.mxu0 0
    %104 = vmatpush1.bf16.msra.mxu0 0
    %105 = vmatprep.subr.bf16.mxu0 0
    %106 = vmatpush1.bf16.msra.mxu0 0
    %107 = vmatprep.subr.bf16.mxu0 0
    %108 = vmatpush1.bf16.msra.mxu0 0
    %109 = vmatprep.subr.bf16.mxu0 0
    %110 = vmatpush1.bf16.msra.mxu0 0
    %111 = vmatprep.subr.bf16.mxu0 0
    %112 = vmatpush1.bf16.msra.mxu0 0
    %113 = vmatprep.subr.bf16.mxu0 0
    %114 = vmatpush1.bf16.msra.mxu0 0
    %115 = vmatprep.subr.bf16.mxu0 0
    %116 = vmatpush1.bf16.msra.mxu0 0
    %117 = vmatprep.subr.bf16.mxu0 0
    %118 = vmatpush1.bf16.msra.mxu0 0
    %119 = vmatprep.subr.bf16.mxu0 0
    %120 = vmatpush1.bf16.msra.mxu0 0
    %121 = vmatprep.subr.bf16.mxu0 0
    %122 = vmatpush1.bf16.msra.mxu0 0
    %123 = vmatprep.mubr.bf16.mxu0 0
    %124 = vmatmul.mubr.bf16.gmra.mrb[0].mxu0 %v76
    %v125 = vpop.f32.mrb[0].mxu0
    %v126 = vadd.f32 %v72, %v125
    %v127 = vpop.f32.mrb[0].mxu0
    %v128 = vpop.f32.mrb[0].mxu0
    %v129 = vadd.f32 %v72, %v128
    %v130 = vpop.f32.mrb[0].mxu0
    %131 = vmatprep.mubr.bf16.mxu0 0
    %132 = vmatmul.mubr.bf16.gmra.mrb[0].mxu0 %v79
    %v133 = vpop.f32.mrb[0].mxu0
    %v134 = vadd.f32 %v72, %v133
    %v135 = vpop.f32.mrb[0].mxu0
    %v136 = vpop.f32.mrb[0].mxu0
    %v137 = vadd.f32 %v72, %v136
    %v138 = vpop.f32.mrb[0].mxu0
    %139 = vmatprep.mubr.bf16.mxu0 0
    %140 = vmatmul.mubr.bf16.gmra.mrb[0].mxu0 %v82
    %v141 = vpop.f32.mrb[0].mxu0
    %v142 = vadd.f32 %v72, %v141
    %v143 = vpop.f32.mrb[0].mxu0
    %v144 = vpop.f32.mrb[0].mxu0
    %v145 = vadd.f32 %v72, %v144
    %v146 = vpop.f32.mrb[0].mxu0
    %147 = vmatprep.mubr.bf16.mxu0 0
    %148 = vmatmul.mubr.bf16.gmra.mrb[0].mxu0 %v85
    %v149 = vpop.f32.mrb[0].mxu0
    %v150 = vadd.f32 %v72, %v149
    %v151 = vpop.f32.mrb[0].mxu0
    %v152 = vpop.f32.mrb[0].mxu0
    %v153 = vadd.f32 %v72, %v152
    %v154 = vpop.f32.mrb[0].mxu0
    %155 = vdwg.mxu0
    %vm156 = vcmask 261120
    %157 = vst.msk [vmem:[#allocation2] sm:$0xff] %vm156, %v126
    %158 = vst.msk [vmem:[#allocation2 + $0x8] sm:$0xff] %vm156, %v129
    %159 = vst.msk [vmem:[#allocation2 + $0x10] sm:$0xff] %vm156, %v134
    %160 = vst.msk [vmem:[#allocation2 + $0x18] sm:$0xff] %vm156, %v137
    %161 = vst.msk [vmem:[#allocation2 + $0x20] sm:$0xff] %vm156, %v142
    %162 = vst.msk [vmem:[#allocation2 + $0x28] sm:$0xff] %vm156, %v145
    %163 = vst.msk [vmem:[#allocation2 + $0x30] sm:$0xff] %vm156, %v150
    %164 = vst.msk [vmem:[#allocation2 + $0x38] sm:$0xff] %vm156, %v153
    %s165 = scalar_lea.vmem %s1, 2
    %v166 = vld [vmem:[%s165] sm:$0x3]
    %s167 = scalar_lea.vmem %s3, 1
    %v168 = vld [vmem:[%s167] sm:$0x1]
    %v170 = vlaneseq
    %v171 = vshrl.u32 %v170, 7
    %v172 = vsub.s32 0, %v171
    %v173 = vrot.slane %v168, %v172
    %v176 = vsel %vm87, %v166, 0
    %178 = vmatprep.subr.bf16.mxu0 0
    %179 = vmatpush1.bf16.msra.mxu0 %v176
    %180 = vmatprep.subr.bf16.mxu0 0
    %181 = vmatpush1.bf16.msra.mxu0 0
    %182 = vmatprep.subr.bf16.mxu0 0
    %183 = vmatpush1.bf16.msra.mxu0 0
    %184 = vmatprep.subr.bf16.mxu0 0
    %185 = vmatpush1.bf16.msra.mxu0 0
    %186 = vmatprep.subr.bf16.mxu0 0
    %187 = vmatpush1.bf16.msra.mxu0 0
    %188 = vmatprep.subr.bf16.mxu0 0
    %189 = vmatpush1.bf16.msra.mxu0 0
    %190 = vmatprep.subr.bf16.mxu0 0
    %191 = vmatpush1.bf16.msra.mxu0 0
    %192 = vmatprep.subr.bf16.mxu0 0
    %193 = vmatpush1.bf16.msra.mxu0 0
    %194 = vmatprep.subr.bf16.mxu0 0
    %195 = vmatpush1.bf16.msra.mxu0 0
    %196 = vmatprep.subr.bf16.mxu0 0
    %197 = vmatpush1.bf16.msra.mxu0 0
    %198 = vmatprep.subr.bf16.mxu0 0
    %199 = vmatpush1.bf16.msra.mxu0 0
    %200 = vmatprep.subr.bf16.mxu0 0
    %201 = vmatpush1.bf16.msra.mxu0 0
    %202 = vmatprep.subr.bf16.mxu0 0
    %203 = vmatpush1.bf16.msra.mxu0 0
    %204 = vmatprep.subr.bf16.mxu0 0
    %205 = vmatpush1.bf16.msra.mxu0 0
    %206 = vmatprep.subr.bf16.mxu0 0
    %207 = vmatpush1.bf16.msra.mxu0 0
    %208 = vmatprep.subr.bf16.mxu0 0
    %209 = vmatpush1.bf16.msra.mxu0 0
    %210 = vmatprep.mubr.bf16.mxu0 0
    %211 = vmatmul.mubr.bf16.gmra.mrb[0].mxu0 %v76
    %v212 = vpop.f32.mrb[0].mxu0
    %v213 = vadd.f32 %v173, %v212
    %v214 = vpop.f32.mrb[0].mxu0
    %v215 = vpop.f32.mrb[0].mxu0
    %v216 = vadd.f32 %v173, %v215
    %v217 = vpop.f32.mrb[0].mxu0
    %218 = vmatprep.mubr.bf16.mxu0 0
    %219 = vmatmul.mubr.bf16.gmra.mrb[0].mxu0 %v79
    %v220 = vpop.f32.mrb[0].mxu0
    %v221 = vadd.f32 %v173, %v220
    %v222 = vpop.f32.mrb[0].mxu0
    %v223 = vpop.f32.mrb[0].mxu0
    %v224 = vadd.f32 %v173, %v223
    %v225 = vpop.f32.mrb[0].mxu0
    %226 = vmatprep.mubr.bf16.mxu0 0
    %227 = vmatmul.mubr.bf16.gmra.mrb[0].mxu0 %v82
    %v228 = vpop.f32.mrb[0].mxu0
    %v229 = vadd.f32 %v173, %v228
    %v230 = vpop.f32.mrb[0].mxu0
    %v231 = vpop.f32.mrb[0].mxu0
    %v232 = vadd.f32 %v173, %v231
    %v233 = vpop.f32.mrb[0].mxu0
    %234 = vmatprep.mubr.bf16.mxu0 0
    %235 = vmatmul.mubr.bf16.gmra.mrb[0].mxu0 %v85
    %v236 = vpop.f32.mrb[0].mxu0
    %v237 = vadd.f32 %v173, %v236
    %v238 = vpop.f32.mrb[0].mxu0
    %v239 = vpop.f32.mrb[0].mxu0
    %v240 = vadd.f32 %v173, %v239
    %v241 = vpop.f32.mrb[0].mxu0
    %242 = vdwg.mxu0
    %s243 = scalar_lea.vmem [#allocation2], 64
    %244 = vst.msk [vmem:[%s243] sm:$0xff] %vm156, %v213
    %245 = vst.msk [vmem:[%s243 + $0x8] sm:$0xff] %vm156, %v216
    %246 = vst.msk [vmem:[%s243 + $0x10] sm:$0xff] %vm156, %v221
    %247 = vst.msk [vmem:[%s243 + $0x18] sm:$0xff] %vm156, %v224
    %248 = vst.msk [vmem:[%s243 + $0x20] sm:$0xff] %vm156, %v229
    %249 = vst.msk [vmem:[%s243 + $0x28] sm:$0xff] %vm156, %v232
    %250 = vst.msk [vmem:[%s243 + $0x30] sm:$0xff] %vm156, %v237
    %251 = vst.msk [vmem:[%s243 + $0x38] sm:$0xff] %vm156, %v240
    %s252 = scalar_lea.vmem %s1, 4
    %v253 = vld [vmem:[%s252] sm:$0x3]
    %s254 = scalar_lea.vmem %s3, 2
    %v255 = vld [vmem:[%s254] sm:$0x1]
    %v257 = vlaneseq
    %v258 = vshrl.u32 %v257, 7
    %v259 = vsub.s32 0, %v258
    %v260 = vrot.slane %v255, %v259
    %v263 = vsel %vm87, %v253, 0
    %265 = vmatprep.subr.bf16.mxu0 0
    %266 = vmatpush1.bf16.msra.mxu0 %v263
    %267 = vmatprep.subr.bf16.mxu0 0
    %268 = vmatpush1.bf16.msra.mxu0 0
    %269 = vmatprep.subr.bf16.mxu0 0
    %270 = vmatpush1.bf16.msra.mxu0 0
    %271 = vmatprep.subr.bf16.mxu0 0
    %272 = vmatpush1.bf16.msra.mxu0 0
    %273 = vmatprep.subr.bf16.mxu0 0
    %274 = vmatpush1.bf16.msra.mxu0 0
    %275 = vmatprep.subr.bf16.mxu0 0
    %276 = vmatpush1.bf16.msra.mxu0 0
    %277 = vmatprep.subr.bf16.mxu0 0
    %278 = vmatpush1.bf16.msra.mxu0 0
    %279 = vmatprep.subr.bf16.mxu0 0
    %280 = vmatpush1.bf16.msra.mxu0 0
    %281 = vmatprep.subr.bf16.mxu0 0
    %282 = vmatpush1.bf16.msra.mxu0 0
    %283 = vmatprep.subr.bf16.mxu0 0
    %284 = vmatpush1.bf16.msra.mxu0 0
    %285 = vmatprep.subr.bf16.mxu0 0
    %286 = vmatpush1.bf16.msra.mxu0 0
    %287 = vmatprep.subr.bf16.mxu0 0
    %288 = vmatpush1.bf16.msra.mxu0 0
    %289 = vmatprep.subr.bf16.mxu0 0
    %290 = vmatpush1.bf16.msra.mxu0 0
    %291 = vmatprep.subr.bf16.mxu0 0
    %292 = vmatpush1.bf16.msra.mxu0 0
    %293 = vmatprep.subr.bf16.mxu0 0
    %294 = vmatpush1.bf16.msra.mxu0 0
    %295 = vmatprep.subr.bf16.mxu0 0
    %296 = vmatpush1.bf16.msra.mxu0 0
    %297 = vmatprep.mubr.bf16.mxu0 0
    %298 = vmatmul.mubr.bf16.gmra.mrb[0].mxu0 %v76
    %v299 = vpop.f32.mrb[0].mxu0
    %v300 = vadd.f32 %v260, %v299
    %v301 = vpop.f32.mrb[0].mxu0
    %v302 = vpop.f32.mrb[0].mxu0
    %v303 = vadd.f32 %v260, %v302
    %v304 = vpop.f32.mrb[0].mxu0
    %305 = vmatprep.mubr.bf16.mxu0 0
    %306 = vmatmul.mubr.bf16.gmra.mrb[0].mxu0 %v79
    %v307 = vpop.f32.mrb[0].mxu0
    %v308 = vadd.f32 %v260, %v307
    %v309 = vpop.f32.mrb[0].mxu0
    %v310 = vpop.f32.mrb[0].mxu0
    %v311 = vadd.f32 %v260, %v310
    %v312 = vpop.f32.mrb[0].mxu0
    %313 = vmatprep.mubr.bf16.mxu0 0
    %314 = vmatmul.mubr.bf16.gmra.mrb[0].mxu0 %v82
    %v315 = vpop.f32.mrb[0].mxu0
    %v316 = vadd.f32 %v260, %v315
    %v317 = vpop.f32.mrb[0].mxu0
    %v318 = vpop.f32.mrb[0].mxu0
    %v319 = vadd.f32 %v260, %v318
    %v320 = vpop.f32.mrb[0].mxu0
    %321 = vmatprep.mubr.bf16.mxu0 0
    %322 = vmatmul.mubr.bf16.gmra.mrb[0].mxu0 %v85
    %v323 = vpop.f32.mrb[0].mxu0
    %v324 = vadd.f32 %v260, %v323
    %v325 = vpop.f32.mrb[0].mxu0
    %v326 = vpop.f32.mrb[0].mxu0
    %v327 = vadd.f32 %v260, %v326
    %v328 = vpop.f32.mrb[0].mxu0
    %329 = vdwg.mxu0
    %s330 = scalar_lea.vmem [#allocation2], 128
    %331 = vst.msk [vmem:[%s330] sm:$0xff] %vm156, %v300
    %332 = vst.msk [vmem:[%s330 + $0x8] sm:$0xff] %vm156, %v303
    %333 = vst.msk [vmem:[%s330 + $0x10] sm:$0xff] %vm156, %v308
    %334 = vst.msk [vmem:[%s330 + $0x18] sm:$0xff] %vm156, %v311
    %335 = vst.msk [vmem:[%s330 + $0x20] sm:$0xff] %vm156, %v316
    %336 = vst.msk [vmem:[%s330 + $0x28] sm:$0xff] %vm156, %v319
    %337 = vst.msk [vmem:[%s330 + $0x30] sm:$0xff] %vm156, %v324
    %338 = vst.msk [vmem:[%s330 + $0x38] sm:$0xff] %vm156, %v327
    %v339 = vld [vmem:[%s4] sm:$0x1]
    %v341 = vlaneseq
    %v342 = vshrl.u32 %v341, 7
    %v343 = vsub.s32 0, %v342
    %v344 = vrot.slane %v339, %v343
    %v346 = vld [vmem:[%s7] sm:$0x1]
    %v348 = vlaneseq
    %v349 = vshrl.u32 %v348, 7
    %v350 = vsub.s32 0, %v349
    %v351 = vrot.slane %v346, %v350
    %s353 = scalar_lea.vmem %s7, 1
    %v354 = vld [vmem:[%s353] sm:$0x1]
    %v356 = vlaneseq
    %v357 = vshrl.u32 %v356, 7
    %v358 = vsub.s32 0, %v357
    %v359 = vrot.slane %v354, %v358
    %s361 = scalar_lea.vmem %s7, 2
    %v362 = vld [vmem:[%s361] sm:$0x1]
    %v364 = vlaneseq
    %v365 = vshrl.u32 %v364, 7
    %v366 = vsub.s32 0, %v365
    %v367 = vrot.slane %v362, %v366
    %v369 = vld [vmem:[%s8] sm:$0x1]
    %v371 = vlaneseq
    %v372 = vshrl.u32 %v371, 7
    %v373 = vsub.s32 0, %v372
    %v374 = vrot.slane %v369, %v373
    %v376 = vld [vmem:[#allocation2] sm:$0xff]
    %s377 = sadd.s32 0, 64
    %s378 = scalar_lea.vmem [#allocation2], %s377
    %v379 = vld [vmem:[%s378] sm:$0xff]
    %s380 = sadd.s32 0, 128
    %s381 = scalar_lea.vmem [#allocation2], %s380
    %v382 = vld [vmem:[%s381] sm:$0xff]
    %v383 = vld [vmem:[%s2] sm:$0xf]
    %v384 = vld [vmem:[%s2 + $0x4] sm:$0xf]
    %v385 = vld [vmem:[%s2 + $0x8] sm:$0xf]
    %v386 = vld [vmem:[%s2 + $0xc] sm:$0xf]
    %v391 = vunpack.c.l.b16 %v383
    %v392 = vunpack.c.l.b16 %v384
    %v393 = vunpack.c.l.b16 %v385
    %v394 = vunpack.c.l.b16 %v386
    %v395 = vpack.c.b16 %v392, %v391
    %v396 = vpack.c.b16 %v394, %v393
    %v400 = vsel %vm156, 0, 0
    %402 = vmatprep.subr.bf16.mxu0 0
    %403 = vmatpush1.bf16.msra.mxu0 %v395
    %404 = vmatprep.subr.bf16.mxu0 0
    %405 = vmatpush1.bf16.msra.mxu0 %v396
    %406 = vmatprep.subr.bf16.mxu0 0
    %407 = vmatpush1.bf16.msra.mxu0 0
    %408 = vmatprep.subr.bf16.mxu0 0
    %409 = vmatpush1.bf16.msra.mxu0 0
    %410 = vmatprep.subr.bf16.mxu0 0
    %411 = vmatpush1.bf16.msra.mxu0 0
    %412 = vmatprep.subr.bf16.mxu0 0
    %413 = vmatpush1.bf16.msra.mxu0 0
    %414 = vmatprep.subr.bf16.mxu0 0
    %415 = vmatpush1.bf16.msra.mxu0 0
    %416 = vmatprep.subr.bf16.mxu0 0
    %417 = vmatpush1.bf16.msra.mxu0 0
    %418 = vmatprep.subr.bf16.mxu0 0
    %419 = vmatpush1.bf16.msra.mxu0 0
    %420 = vmatprep.subr.bf16.mxu0 0
    %421 = vmatpush1.bf16.msra.mxu0 0
    %422 = vmatprep.subr.bf16.mxu0 0
    %423 = vmatpush1.bf16.msra.mxu0 0
    %424 = vmatprep.subr.bf16.mxu0 0
    %425 = vmatpush1.bf16.msra.mxu0 0
    %426 = vmatprep.subr.bf16.mxu0 0
    %427 = vmatpush1.bf16.msra.mxu0 0
    %428 = vmatprep.subr.bf16.mxu0 0
    %429 = vmatpush1.bf16.msra.mxu0 0
    %430 = vmatprep.subr.bf16.mxu0 0
    %431 = vmatpush1.bf16.msra.mxu0 0
    %432 = vmatprep.subr.bf16.mxu0 0
    %433 = vmatpush1.bf16.msra.mxu0 0
    %434 = vmatprep.mubr.bf16.mxu0 0
    %435 = vmatmul.mubr.bf16.gmra.mrb[0].mxu0 %v400
    %v436 = vpop.f32.mrb[0].mxu0
    %v437 = vadd.f32 0.0, %v436
    %v438 = vpop.f32.mrb[0].mxu0
    %v439 = vpop.f32.mrb[0].mxu0
    %v440 = vpop.f32.mrb[0].mxu0
    %441 = vdwg.mxu0
    %s442 = scalar_lea.vmem %s2, 16
    %v443 = vld [vmem:[%s442] sm:$0xf]
    %v444 = vld [vmem:[%s442 + $0x4] sm:$0xf]
    %v445 = vld [vmem:[%s442 + $0x8] sm:$0xf]
    %v446 = vld [vmem:[%s442 + $0xc] sm:$0xf]
    %v451 = vunpack.c.l.b16 %v443
    %v452 = vunpack.c.l.b16 %v444
    %v453 = vunpack.c.l.b16 %v445
    %v454 = vunpack.c.l.b16 %v446
    %v455 = vpack.c.b16 %v452, %v451
    %v456 = vpack.c.b16 %v454, %v453
    %459 = vmatprep.subr.bf16.mxu0 0
    %460 = vmatpush1.bf16.msra.mxu0 %v455
    %461 = vmatprep.subr.bf16.mxu0 0
    %462 = vmatpush1.bf16.msra.mxu0 %v456
    %463 = vmatprep.subr.bf16.mxu0 0
    %464 = vmatpush1.bf16.msra.mxu0 0
    %465 = vmatprep.subr.bf16.mxu0 0
    %466 = vmatpush1.bf16.msra.mxu0 0
    %467 = vmatprep.subr.bf16.mxu0 0
    %468 = vmatpush1.bf16.msra.mxu0 0
    %469 = vmatprep.subr.bf16.mxu0 0
    %470 = vmatpush1.bf16.msra.mxu0 0
    %471 = vmatprep.subr.bf16.mxu0 0
    %472 = vmatpush1.bf16.msra.mxu0 0
    %473 = vmatprep.subr.bf16.mxu0 0
    %474 = vmatpush1.bf16.msra.mxu0 0
    %475 = vmatprep.subr.bf16.mxu0 0
    %476 = vmatpush1.bf16.msra.mxu0 0
    %477 = vmatprep.subr.bf16.mxu0 0
    %478 = vmatpush1.bf16.msra.mxu0 0
    %479 = vmatprep.subr.bf16.mxu0 0
    %480 = vmatpush1.bf16.msra.mxu0 0
    %481 = vmatprep.subr.bf16.mxu0 0
    %482 = vmatpush1.bf16.msra.mxu0 0
    %483 = vmatprep.subr.bf16.mxu0 0
    %484 = vmatpush1.bf16.msra.mxu0 0
    %485 = vmatprep.subr.bf16.mxu0 0
    %486 = vmatpush1.bf16.msra.mxu0 0
    %487 = vmatprep.subr.bf16.mxu0 0
    %488 = vmatpush1.bf16.msra.mxu0 0
    %489 = vmatprep.subr.bf16.mxu0 0
    %490 = vmatpush1.bf16.msra.mxu0 0
    %491 = vmatprep.mubr.bf16.mxu0 0
    %492 = vmatmul.mubr.bf16.gmra.mrb[0].mxu0 %v400
    %v493 = vpop.f32.mrb[0].mxu0
    %v494 = vadd.f32 0.0, %v493
    %v495 = vpop.f32.mrb[0].mxu0
    %v496 = vpop.f32.mrb[0].mxu0
    %v497 = vpop.f32.mrb[0].mxu0
    %498 = vdwg.mxu0
    %s499 = scalar_lea.vmem %s2, 32
    %v500 = vld [vmem:[%s499] sm:$0xf]
    %v501 = vld [vmem:[%s499 + $0x4] sm:$0xf]
    %v502 = vld [vmem:[%s499 + $0x8] sm:$0xf]
    %v503 = vld [vmem:[%s499 + $0xc] sm:$0xf]
    %v504 = vadd.f32 %v376, %v437
    %v505 = vxor.u32 %v504, 2147483648
    %v506 = vmul.f32 %v505, 1.442695
    %v507 = vpow.pop %v506
    %v508 = vadd.f32 %v507, 1.0
    %v509 = vrcp.pop %v508
    %v510 = vmul.f32 1.0, %v509
    %v511 = vadd.f32 %v379, %v494
    %v512 = vxor.u32 %v511, 2147483648
    %v513 = vmul.f32 %v512, 1.442695
    %v514 = vpow.pop %v513
    %v515 = vadd.f32 %v514, 1.0
    %v516 = vrcp.pop %v515
    %v517 = vmul.f32 1.0, %v516
    %v522 = vunpack.c.l.b16 %v500
    %v523 = vunpack.c.l.b16 %v501
    %v524 = vunpack.c.l.b16 %v502
    %v525 = vunpack.c.l.b16 %v503
    %v526 = vpack.c.b16 %v523, %v522
    %v527 = vpack.c.b16 %v525, %v524
    %530 = vmatprep.subr.bf16.mxu0 0
    %531 = vmatpush1.bf16.msra.mxu0 %v526
    %532 = vmatprep.subr.bf16.mxu0 0
    %533 = vmatpush1.bf16.msra.mxu0 %v527
    %534 = vmatprep.subr.bf16.mxu0 0
    %535 = vmatpush1.bf16.msra.mxu0 0
    %536 = vmatprep.subr.bf16.mxu0 0
    %537 = vmatpush1.bf16.msra.mxu0 0
    %538 = vmatprep.subr.bf16.mxu0 0
    %539 = vmatpush1.bf16.msra.mxu0 0
    %540 = vmatprep.subr.bf16.mxu0 0
    %541 = vmatpush1.bf16.msra.mxu0 0
    %542 = vmatprep.subr.bf16.mxu0 0
    %543 = vmatpush1.bf16.msra.mxu0 0
    %544 = vmatprep.subr.bf16.mxu0 0
    %545 = vmatpush1.bf16.msra.mxu0 0
    %546 = vmatprep.subr.bf16.mxu0 0
    %547 = vmatpush1.bf16.msra.mxu0 0
    %548 = vmatprep.subr.bf16.mxu0 0
    %549 = vmatpush1.bf16.msra.mxu0 0
    %550 = vmatprep.subr.bf16.mxu0 0
    %551 = vmatpush1.bf16.msra.mxu0 0
    %552 = vmatprep.subr.bf16.mxu0 0
    %553 = vmatpush1.bf16.msra.mxu0 0
    %554 = vmatprep.subr.bf16.mxu0 0
    %555 = vmatpush1.bf16.msra.mxu0 0
    %556 = vmatprep.subr.bf16.mxu0 0
    %557 = vmatpush1.bf16.msra.mxu0 0
    %558 = vmatprep.subr.bf16.mxu0 0
    %559 = vmatpush1.bf16.msra.mxu0 0
    %560 = vmatprep.subr.bf16.mxu0 0
    %561 = vmatpush1.bf16.msra.mxu0 0
    %562 = vmatprep.mubr.bf16.mxu0 0
    %563 = vmatmul.mubr.bf16.gmra.mrb[0].mxu0 %v400
    %v564 = vpop.f32.mrb[0].mxu0
    %v565 = vadd.f32 %v344, %v564
    %v566 = vpop.f32.mrb[0].mxu0
    %v567 = vpop.f32.mrb[0].mxu0
    %v568 = vpop.f32.mrb[0].mxu0
    %569 = vdwg.mxu0
    %v570 = vmul.f32 %v510, %v565
    %v571 = vadd.f32 %v382, %v570
    %v572 = vtanh.pop %v571
    %v573 = vsub.f32 1.0, %v517
    %v574 = vmul.f32 %v573, %v572
    %v575 = vmul.f32 %v517, 0.0
    %v576 = vadd.f32 %v574, %v575
    %v577 = vpack.c.bf16 %v576, %v576
    %v578 = vld [vmem:[%s5] sm:$0xf]
    %v579 = vld [vmem:[%s5 + $0x4] sm:$0xf]
    %v580 = vld [vmem:[%s5 + $0x8] sm:$0xf]
    %v581 = vld [vmem:[%s5 + $0xc] sm:$0xf]
    %v586 = vunpack.c.l.b16 %v578
    %v587 = vunpack.c.l.b16 %v579
    %v588 = vunpack.c.l.b16 %v580
    %v589 = vunpack.c.l.b16 %v581
    %v590 = vpack.c.b16 %v587, %v586
    %v591 = vpack.c.b16 %v589, %v588
    %v595 = vsel %vm156, %v577, 0
    %597 = vmatprep.subr.bf16.mxu0 0
    %598 = vmatpush1.bf16.msra.mxu0 %v590
    %599 = vmatprep.subr.bf16.mxu0 0
    %600 = vmatpush1.bf16.msra.mxu0 %v591
    %601 = vmatprep.subr.bf16.mxu0 0
    %602 = vmatpush1.bf16.msra.mxu0 0
    %603 = vmatprep.subr.bf16.mxu0 0
    %604 = vmatpush1.bf16.msra.mxu0 0
    %605 = vmatprep.subr.bf16.mxu0 0
    %606 = vmatpush1.bf16.msra.mxu0 0
    %607 = vmatprep.subr.bf16.mxu0 0
    %608 = vmatpush1.bf16.msra.mxu0 0
    %609 = vmatprep.subr.bf16.mxu0 0
    %610 = vmatpush1.bf16.msra.mxu0 0
    %611 = vmatprep.subr.bf16.mxu0 0
    %612 = vmatpush1.bf16.msra.mxu0 0
    %613 = vmatprep.subr.bf16.mxu0 0
    %614 = vmatpush1.bf16.msra.mxu0 0
    %615 = vmatprep.subr.bf16.mxu0 0
    %616 = vmatpush1.bf16.msra.mxu0 0
    %617 = vmatprep.subr.bf16.mxu0 0
    %618 = vmatpush1.bf16.msra.mxu0 0
    %619 = vmatprep.subr.bf16.mxu0 0
    %620 = vmatpush1.bf16.msra.mxu0 0
    %621 = vmatprep.subr.bf16.mxu0 0
    %622 = vmatpush1.bf16.msra.mxu0 0
    %623 = vmatprep.subr.bf16.mxu0 0
    %624 = vmatpush1.bf16.msra.mxu0 0
    %625 = vmatprep.subr.bf16.mxu0 0
    %626 = vmatpush1.bf16.msra.mxu0 0
    %627 = vmatprep.subr.bf16.mxu0 0
    %628 = vmatpush1.bf16.msra.mxu0 0
    %629 = vmatprep.mubr.bf16.mxu0 0
    %630 = vmatmul.mubr.bf16.gmra.mrb[0].mxu0 %v595
    %v631 = vpop.f32.mrb[0].mxu0
    %v632 = vadd.f32 %v351, %v631
    %v633 = vpop.f32.mrb[0].mxu0
    %v634 = vpop.f32.mrb[0].mxu0
    %v635 = vpop.f32.mrb[0].mxu0
    %636 = vdwg.mxu0
    %s637 = scalar_lea.vmem %s5, 16
    %v638 = vld [vmem:[%s637] sm:$0xf]
    %v639 = vld [vmem:[%s637 + $0x4] sm:$0xf]
    %v640 = vld [vmem:[%s637 + $0x8] sm:$0xf]
    %v641 = vld [vmem:[%s637 + $0xc] sm:$0xf]
    %v646 = vunpack.c.l.b16 %v638
    %v647 = vunpack.c.l.b16 %v639
    %v648 = vunpack.c.l.b16 %v640
    %v649 = vunpack.c.l.b16 %v641
    %v650 = vpack.c.b16 %v647, %v646
    %v651 = vpack.c.b16 %v649, %v648
    %654 = vmatprep.subr.bf16.mxu0 0
    %655 = vmatpush1.bf16.msra.mxu0 %v650
    %656 = vmatprep.subr.bf16.mxu0 0
    %657 = vmatpush1.bf16.msra.mxu0 %v651
    %658 = vmatprep.subr.bf16.mxu0 0
    %659 = vmatpush1.bf16.msra.mxu0 0
    %660 = vmatprep.subr.bf16.mxu0 0
    %661 = vmatpush1.bf16.msra.mxu0 0
    %662 = vmatprep.subr.bf16.mxu0 0
    %663 = vmatpush1.bf16.msra.mxu0 0
    %664 = vmatprep.subr.bf16.mxu0 0
    %665 = vmatpush1.bf16.msra.mxu0 0
    %666 = vmatprep.subr.bf16.mxu0 0
    %667 = vmatpush1.bf16.msra.mxu0 0
    %668 = vmatprep.subr.bf16.mxu0 0
    %669 = vmatpush1.bf16.msra.mxu0 0
    %670 = vmatprep.subr.bf16.mxu0 0
    %671 = vmatpush1.bf16.msra.mxu0 0
    %672 = vmatprep.subr.bf16.mxu0 0
    %673 = vmatpush1.bf16.msra.mxu0 0
    %674 = vmatprep.subr.bf16.mxu0 0
    %675 = vmatpush1.bf16.msra.mxu0 0
    %676 = vmatprep.subr.bf16.mxu0 0
    %677 = vmatpush1.bf16.msra.mxu0 0
    %678 = vmatprep.subr.bf16.mxu0 0
    %679 = vmatpush1.bf16.msra.mxu0 0
    %680 = vmatprep.subr.bf16.mxu0 0
    %681 = vmatpush1.bf16.msra.mxu0 0
    %682 = vmatprep.subr.bf16.mxu0 0
    %683 = vmatpush1.bf16.msra.mxu0 0
    %684 = vmatprep.subr.bf16.mxu0 0
    %685 = vmatpush1.bf16.msra.mxu0 0
    %686 = vmatprep.mubr.bf16.mxu0 0
    %687 = vmatmul.mubr.bf16.gmra.mrb[0].mxu0 %v595
    %v688 = vpop.f32.mrb[0].mxu0
    %v689 = vadd.f32 %v359, %v688
    %v690 = vpop.f32.mrb[0].mxu0
    %v691 = vpop.f32.mrb[0].mxu0
    %v692 = vpop.f32.mrb[0].mxu0
    %693 = vdwg.mxu0
    %s694 = scalar_lea.vmem %s5, 32
    %v695 = vld [vmem:[%s694] sm:$0xf]
    %v696 = vld [vmem:[%s694 + $0x4] sm:$0xf]
    %v697 = vld [vmem:[%s694 + $0x8] sm:$0xf]
    %v698 = vld [vmem:[%s694 + $0xc] sm:$0xf]
    %v703 = vunpack.c.l.b16 %v695
    %v704 = vunpack.c.l.b16 %v696
    %v705 = vunpack.c.l.b16 %v697
    %v706 = vunpack.c.l.b16 %v698
    %v707 = vpack.c.b16 %v704, %v703
    %v708 = vpack.c.b16 %v706, %v705
    %711 = vmatprep.subr.bf16.mxu0 0
    %712 = vmatpush1.bf16.msra.mxu0 %v707
    %713 = vmatprep.subr.bf16.mxu0 0
    %714 = vmatpush1.bf16.msra.mxu0 %v708
    %715 = vmatprep.subr.bf16.mxu0 0
    %716 = vmatpush1.bf16.msra.mxu0 0
    %717 = vmatprep.subr.bf16.mxu0 0
    %718 = vmatpush1.bf16.msra.mxu0 0
    %719 = vmatprep.subr.bf16.mxu0 0
    %720 = vmatpush1.bf16.msra.mxu0 0
    %721 = vmatprep.subr.bf16.mxu0 0
    %722 = vmatpush1.bf16.msra.mxu0 0
    %723 = vmatprep.subr.bf16.mxu0 0
    %724 = vmatpush1.bf16.msra.mxu0 0
    %725 = vmatprep.subr.bf16.mxu0 0
    %726 = vmatpush1.bf16.msra.mxu0 0
    %727 = vmatprep.subr.bf16.mxu0 0
    %728 = vmatpush1.bf16.msra.mxu0 0
    %729 = vmatprep.subr.bf16.mxu0 0
    %730 = vmatpush1.bf16.msra.mxu0 0
    %731 = vmatprep.subr.bf16.mxu0 0
    %732 = vmatpush1.bf16.msra.mxu0 0
    %733 = vmatprep.subr.bf16.mxu0 0
    %734 = vmatpush1.bf16.msra.mxu0 0
    %735 = vmatprep.subr.bf16.mxu0 0
    %736 = vmatpush1.bf16.msra.mxu0 0
    %737 = vmatprep.subr.bf16.mxu0 0
    %738 = vmatpush1.bf16.msra.mxu0 0
    %739 = vmatprep.subr.bf16.mxu0 0
    %740 = vmatpush1.bf16.msra.mxu0 0
    %741 = vmatprep.subr.bf16.mxu0 0
    %742 = vmatpush1.bf16.msra.mxu0 0
    %743 = vmatprep.mubr.bf16.mxu0 0
    %744 = vmatmul.mubr.bf16.gmra.mrb[0].mxu0 %v595
    %v745 = vpop.f32.mrb[0].mxu0
    %v746 = vadd.f32 %v367, %v745
    %v747 = vpop.f32.mrb[0].mxu0
    %v748 = vpop.f32.mrb[0].mxu0
    %v749 = vpop.f32.mrb[0].mxu0
    %750 = vdwg.mxu0
    %v751 = vld [vmem:[#allocation3] sm:$0xf]
    %v752 = vld [vmem:[#allocation3 + $0x4] sm:$0xf]
    %v753 = vld [vmem:[#allocation3 + $0x8] sm:$0xf]
    %v754 = vld [vmem:[#allocation3 + $0xc] sm:$0xf]
    %v759 = vunpack.c.l.b16 %v751
    %v760 = vunpack.c.l.b16 %v752
    %v761 = vunpack.c.l.b16 %v753
    %v762 = vunpack.c.l.b16 %v754
    %v763 = vpack.c.b16 %v760, %v759
    %v764 = vpack.c.b16 %v762, %v761
    %767 = vmatprep.subr.bf16.mxu0 0
    %768 = vmatpush1.bf16.msra.mxu0 %v763
    %769 = vmatprep.subr.bf16.mxu0 0
    %770 = vmatpush1.bf16.msra.mxu0 %v764
    %771 = vmatprep.subr.bf16.mxu0 0
    %772 = vmatpush1.bf16.msra.mxu0 0
    %773 = vmatprep.subr.bf16.mxu0 0
    %774 = vmatpush1.bf16.msra.mxu0 0
    %775 = vmatprep.subr.bf16.mxu0 0
    %776 = vmatpush1.bf16.msra.mxu0 0
    %777 = vmatprep.subr.bf16.mxu0 0
    %778 = vmatpush1.bf16.msra.mxu0 0
    %779 = vmatprep.subr.bf16.mxu0 0
    %780 = vmatpush1.bf16.msra.mxu0 0
    %781 = vmatprep.subr.bf16.mxu0 0
    %782 = vmatpush1.bf16.msra.mxu0 0
    %783 = vmatprep.subr.bf16.mxu0 0
    %784 = vmatpush1.bf16.msra.mxu0 0
    %785 = vmatprep.subr.bf16.mxu0 0
    %786 = vmatpush1.bf16.msra.mxu0 0
    %787 = vmatprep.subr.bf16.mxu0 0
    %788 = vmatpush1.bf16.msra.mxu0 0
    %789 = vmatprep.subr.bf16.mxu0 0
    %790 = vmatpush1.bf16.msra.mxu0 0
    %791 = vmatprep.subr.bf16.mxu0 0
    %792 = vmatpush1.bf16.msra.mxu0 0
    %793 = vmatprep.subr.bf16.mxu0 0
    %794 = vmatpush1.bf16.msra.mxu0 0
    %795 = vmatprep.subr.bf16.mxu0 0
    %796 = vmatpush1.bf16.msra.mxu0 0
    %797 = vmatprep.subr.bf16.mxu0 0
    %798 = vmatpush1.bf16.msra.mxu0 0
    %799 = vmatprep.mubr.bf16.mxu0 0
    %800 = vmatmul.mubr.bf16.gmra.mrb[0].mxu0 %v400
    %v801 = vpop.f32.mrb[0].mxu0
    %v802 = vadd.f32 0.0, %v801
    %v803 = vpop.f32.mrb[0].mxu0
    %v804 = vpop.f32.mrb[0].mxu0
    %v805 = vpop.f32.mrb[0].mxu0
    %806 = vdwg.mxu0
    %s807 = scalar_lea.vmem [#allocation3], 16
    %v808 = vld [vmem:[%s807] sm:$0xf]
    %v809 = vld [vmem:[%s807 + $0x4] sm:$0xf]
    %v810 = vld [vmem:[%s807 + $0x8] sm:$0xf]
    %v811 = vld [vmem:[%s807 + $0xc] sm:$0xf]
    %v816 = vunpack.c.l.b16 %v808
    %v817 = vunpack.c.l.b16 %v809
    %v818 = vunpack.c.l.b16 %v810
    %v819 = vunpack.c.l.b16 %v811
    %v820 = vpack.c.b16 %v817, %v816
    %v821 = vpack.c.b16 %v819, %v818
    %824 = vmatprep.subr.bf16.mxu0 0
    %825 = vmatpush1.bf16.msra.mxu0 %v820
    %826 = vmatprep.subr.bf16.mxu0 0
    %827 = vmatpush1.bf16.msra.mxu0 %v821
    %828 = vmatprep.subr.bf16.mxu0 0
    %829 = vmatpush1.bf16.msra.mxu0 0
    %830 = vmatprep.subr.bf16.mxu0 0
    %831 = vmatpush1.bf16.msra.mxu0 0
    %832 = vmatprep.subr.bf16.mxu0 0
    %833 = vmatpush1.bf16.msra.mxu0 0
    %834 = vmatprep.subr.bf16.mxu0 0
    %835 = vmatpush1.bf16.msra.mxu0 0
    %836 = vmatprep.subr.bf16.mxu0 0
    %837 = vmatpush1.bf16.msra.mxu0 0
    %838 = vmatprep.subr.bf16.mxu0 0
    %839 = vmatpush1.bf16.msra.mxu0 0
    %840 = vmatprep.subr.bf16.mxu0 0
    %841 = vmatpush1.bf16.msra.mxu0 0
    %842 = vmatprep.subr.bf16.mxu0 0
    %843 = vmatpush1.bf16.msra.mxu0 0
    %844 = vmatprep.subr.bf16.mxu0 0
    %845 = vmatpush1.bf16.msra.mxu0 0
    %846 = vmatprep.subr.bf16.mxu0 0
    %847 = vmatpush1.bf16.msra.mxu0 0
    %848 = vmatprep.subr.bf16.mxu0 0
    %849 = vmatpush1.bf16.msra.mxu0 0
    %850 = vmatprep.subr.bf16.mxu0 0
    %851 = vmatpush1.bf16.msra.mxu0 0
    %852 = vmatprep.subr.bf16.mxu0 0
    %853 = vmatpush1.bf16.msra.mxu0 0
    %854 = vmatprep.subr.bf16.mxu0 0
    %855 = vmatpush1.bf16.msra.mxu0 0
    %856 = vmatprep.mubr.bf16.mxu0 0
    %857 = vmatmul.mubr.bf16.gmra.mrb[0].mxu0 %v400
    %v858 = vpop.f32.mrb[0].mxu0
    %v859 = vadd.f32 0.0, %v858
    %v860 = vpop.f32.mrb[0].mxu0
    %v861 = vpop.f32.mrb[0].mxu0
    %v862 = vpop.f32.mrb[0].mxu0
    %863 = vdwg.mxu0
    %s864 = scalar_lea.vmem [#allocation3], 32
    %v865 = vld [vmem:[%s864] sm:$0xf]
    %v866 = vld [vmem:[%s864 + $0x4] sm:$0xf]
    %v867 = vld [vmem:[%s864 + $0x8] sm:$0xf]
    %v868 = vld [vmem:[%s864 + $0xc] sm:$0xf]
    %v869 = vadd.f32 %v632, %v802
    %v870 = vxor.u32 %v869, 2147483648
    %v871 = vmul.f32 %v870, 1.442695
    %v872 = vpow.pop %v871
    %v873 = vadd.f32 %v872, 1.0
    %v874 = vrcp.pop %v873
    %v875 = vmul.f32 1.0, %v874
    %v876 = vadd.f32 %v689, %v859
    %v877 = vxor.u32 %v876, 2147483648
    %v878 = vmul.f32 %v877, 1.442695
    %v879 = vpow.pop %v878
    %v880 = vadd.f32 %v879, 1.0
    %v881 = vrcp.pop %v880
    %v882 = vmul.f32 1.0, %v881
    %v887 = vunpack.c.l.b16 %v865
    %v888 = vunpack.c.l.b16 %v866
    %v889 = vunpack.c.l.b16 %v867
    %v890 = vunpack.c.l.b16 %v868
    %v891 = vpack.c.b16 %v888, %v887
    %v892 = vpack.c.b16 %v890, %v889
    %895 = vmatprep.subr.bf16.mxu0 0
    %896 = vmatpush1.bf16.msra.mxu0 %v891
    %897 = vmatprep.subr.bf16.mxu0 0
    %898 = vmatpush1.bf16.msra.mxu0 %v892
    %899 = vmatprep.subr.bf16.mxu0 0
    %900 = vmatpush1.bf16.msra.mxu0 0
    %901 = vmatprep.subr.bf16.mxu0 0
    %902 = vmatpush1.bf16.msra.mxu0 0
    %903 = vmatprep.subr.bf16.mxu0 0
    %904 = vmatpush1.bf16.msra.mxu0 0
    %905 = vmatprep.subr.bf16.mxu0 0
    %906 = vmatpush1.bf16.msra.mxu0 0
    %907 = vmatprep.subr.bf16.mxu0 0
    %908 = vmatpush1.bf16.msra.mxu0 0
    %909 = vmatprep.subr.bf16.mxu0 0
    %910 = vmatpush1.bf16.msra.mxu0 0
    %911 = vmatprep.subr.bf16.mxu0 0
    %912 = vmatpush1.bf16.msra.mxu0 0
    %913 = vmatprep.subr.bf16.mxu0 0
    %914 = vmatpush1.bf16.msra.mxu0 0
    %915 = vmatprep.subr.bf16.mxu0 0
    %916 = vmatpush1.bf16.msra.mxu0 0
    %917 = vmatprep.subr.bf16.mxu0 0
    %918 = vmatpush1.bf16.msra.mxu0 0
    %919 = vmatprep.subr.bf16.mxu0 0
    %920 = vmatpush1.bf16.msra.mxu0 0
    %921 = vmatprep.subr.bf16.mxu0 0
    %922 = vmatpush1.bf16.msra.mxu0 0
    %923 = vmatprep.subr.bf16.mxu0 0
    %924 = vmatpush1.bf16.msra.mxu0 0
    %925 = vmatprep.subr.bf16.mxu0 0
    %926 = vmatpush1.bf16.msra.mxu0 0
    %927 = vmatprep.mubr.bf16.mxu0 0
    %928 = vmatmul.mubr.bf16.gmra.mrb[0].mxu0 %v400
    %v929 = vpop.f32.mrb[0].mxu0
    %v930 = vadd.f32 %v374, %v929
    %v931 = vpop.f32.mrb[0].mxu0
    %v932 = vpop.f32.mrb[0].mxu0
    %v933 = vpop.f32.mrb[0].mxu0
    %934 = vdwg.mxu0
    %v935 = vmul.f32 %v875, %v930
    %v936 = vadd.f32 %v746, %v935
    %v937 = vtanh.pop %v936
    %v938 = vsub.f32 1.0, %v882
    %v939 = vmul.f32 %v938, %v937
    %v940 = vmul.f32 %v882, 0.0
    %v941 = vadd.f32 %v939, %v940
    %s942 = scalar_lea.vmem [#allocation2], 8
    %v943 = vld [vmem:[%s942] sm:$0xff]
    %s944 = sadd.s32 8, 64
    %s945 = scalar_lea.vmem [#allocation2], %s944
    %v946 = vld [vmem:[%s945] sm:$0xff]
    %s947 = sadd.s32 8, 128
    %s948 = scalar_lea.vmem [#allocation2], %s947
    %v949 = vld [vmem:[%s948] sm:$0xff]
    %950 = vmatprep.subr.bf16.mxu0 0
    %951 = vmatpush1.bf16.msra.mxu0 %v395
    %952 = vmatprep.subr.bf16.mxu0 0
    %953 = vmatpush1.bf16.msra.mxu0 %v396
    %954 = vmatprep.subr.bf16.mxu0 0
    %955 = vmatpush1.bf16.msra.mxu0 0
    %956 = vmatprep.subr.bf16.mxu0 0
    %957 = vmatpush1.bf16.msra.mxu0 0
    %958 = vmatprep.subr.bf16.mxu0 0
    %959 = vmatpush1.bf16.msra.mxu0 0
    %960 = vmatprep.subr.bf16.mxu0 0
    %961 = vmatpush1.bf16.msra.mxu0 0
    %962 = vmatprep.subr.bf16.mxu0 0
    %963 = vmatpush1.bf16.msra.mxu0 0
    %964 = vmatprep.subr.bf16.mxu0 0
    %965 = vmatpush1.bf16.msra.mxu0 0
    %966 = vmatprep.subr.bf16.mxu0 0
    %967 = vmatpush1.bf16.msra.mxu0 0
    %968 = vmatprep.subr.bf16.mxu0 0
    %969 = vmatpush1.bf16.msra.mxu0 0
    %970 = vmatprep.subr.bf16.mxu0 0
    %971 = vmatpush1.bf16.msra.mxu0 0
    %972 = vmatprep.subr.bf16.mxu0 0
    %973 = vmatpush1.bf16.msra.mxu0 0
    %974 = vmatprep.subr.bf16.mxu0 0
    %975 = vmatpush1.bf16.msra.mxu0 0
    %976 = vmatprep.subr.bf16.mxu0 0
    %977 = vmatpush1.bf16.msra.mxu0 0
    %978 = vmatprep.subr.bf16.mxu0 0
    %979 = vmatpush1.bf16.msra.mxu0 0
    %980 = vmatprep.subr.bf16.mxu0 0
    %981 = vmatpush1.bf16.msra.mxu0 0
    %982 = vmatprep.mubr.bf16.mxu0 0
    %983 = vmatmul.mubr.bf16.gmra.mrb[0].mxu0 %v595
    %v984 = vpop.f32.mrb[0].mxu0
    %v985 = vadd.f32 0.0, %v984
    %v986 = vpop.f32.mrb[0].mxu0
    %v987 = vpop.f32.mrb[0].mxu0
    %v988 = vpop.f32.mrb[0].mxu0
    %989 = vdwg.mxu0
    %990 = vmatprep.subr.bf16.mxu0 0
    %991 = vmatpush1.bf16.msra.mxu0 %v455
    %992 = vmatprep.subr.bf16.mxu0 0
    %993 = vmatpush1.bf16.msra.mxu0 %v456
    %994 = vmatprep.subr.bf16.mxu0 0
    %995 = vmatpush1.bf16.msra.mxu0 0
    %996 = vmatprep.subr.bf16.mxu0 0
    %997 = vmatpush1.bf16.msra.mxu0 0
    %998 = vmatprep.subr.bf16.mxu0 0
    %999 = vmatpush1.bf16.msra.mxu0 0
    %1000 = vmatprep.subr.bf16.mxu0 0
    %1001 = vmatpush1.bf16.msra.mxu0 0
    %1002 = vmatprep.subr.bf16.mxu0 0
    %1003 = vmatpush1.bf16.msra.mxu0 0
    %1004 = vmatprep.subr.bf16.mxu0 0
    %1005 = vmatpush1.bf16.msra.mxu0 0
    %1006 = vmatprep.subr.bf16.mxu0 0
    %1007 = vmatpush1.bf16.msra.mxu0 0
    %1008 = vmatprep.subr.bf16.mxu0 0
    %1009 = vmatpush1.bf16.msra.mxu0 0
    %1010 = vmatprep.subr.bf16.mxu0 0
    %1011 = vmatpush1.bf16.msra.mxu0 0
    %1012 = vmatprep.subr.bf16.mxu0 0
    %1013 = vmatpush1.bf16.msra.mxu0 0
    %1014 = vmatprep.subr.bf16.mxu0 0
    %1015 = vmatpush1.bf16.msra.mxu0 0
    %1016 = vmatprep.subr.bf16.mxu0 0
    %1017 = vmatpush1.bf16.msra.mxu0 0
    %1018 = vmatprep.subr.bf16.mxu0 0
    %1019 = vmatpush1.bf16.msra.mxu0 0
    %1020 = vmatprep.subr.bf16.mxu0 0
    %1021 = vmatpush1.bf16.msra.mxu0 0
    %1022 = vmatprep.mubr.bf16.mxu0 0
    %1023 = vmatmul.mubr.bf16.gmra.mrb[0].mxu0 %v595
    %v1024 = vpop.f32.mrb[0].mxu0
    %v1025 = vadd.f32 0.0, %v1024
    %v1026 = vpop.f32.mrb[0].mxu0
    %v1027 = vpop.f32.mrb[0].mxu0
    %v1028 = vpop.f32.mrb[0].mxu0
    %1029 = vdwg.mxu0
    %v1030 = vadd.f32 %v943, %v985
    %v1031 = vxor.u32 %v1030, 2147483648
    %v1032 = vmul.f32 %v1031, 1.442695
    %v1033 = vpow.pop %v1032
    %v1034 = vadd.f32 %v1033, 1.0
    %v1035 = vrcp.pop %v1034
    %v1036 = vmul.f32 1.0, %v1035
    %v1037 = vadd.f32 %v946, %v1025
    %v1038 = vxor.u32 %v1037, 2147483648
    %v1039 = vmul.f32 %v1038, 1.442695
    %v1040 = vpow.pop %v1039
    %v1041 = vadd.f32 %v1040, 1.0
    %v1042 = vrcp.pop %v1041
    %v1043 = vmul.f32 1.0, %v1042
    %1044 = vmatprep.subr.bf16.mxu0 0
    %1045 = vmatpush1.bf16.msra.mxu0 %v526
    %1046 = vmatprep.subr.bf16.mxu0 0
    %1047 = vmatpush1.bf16.msra.mxu0 %v527
    %1048 = vmatprep.subr.bf16.mxu0 0
    %1049 = vmatpush1.bf16.msra.mxu0 0
    %1050 = vmatprep.subr.bf16.mxu0 0
    %1051 = vmatpush1.bf16.msra.mxu0 0
    %1052 = vmatprep.subr.bf16.mxu0 0
    %1053 = vmatpush1.bf16.msra.mxu0 0
    %1054 = vmatprep.subr.bf16.mxu0 0
    %1055 = vmatpush1.bf16.msra.mxu0 0
    %1056 = vmatprep.subr.bf16.mxu0 0
    %1057 = vmatpush1.bf16.msra.mxu0 0
    %1058 = vmatprep.subr.bf16.mxu0 0
    %1059 = vmatpush1.bf16.msra.mxu0 0
    %1060 = vmatprep.subr.bf16.mxu0 0
    %1061 = vmatpush1.bf16.msra.mxu0 0
    %1062 = vmatprep.subr.bf16.mxu0 0
    %1063 = vmatpush1.bf16.msra.mxu0 0
    %1064 = vmatprep.subr.bf16.mxu0 0
    %1065 = vmatpush1.bf16.msra.mxu0 0
    %1066 = vmatprep.subr.bf16.mxu0 0
    %1067 = vmatpush1.bf16.msra.mxu0 0
    %1068 = vmatprep.subr.bf16.mxu0 0
    %1069 = vmatpush1.bf16.msra.mxu0 0
    %1070 = vmatprep.subr.bf16.mxu0 0
    %1071 = vmatpush1.bf16.msra.mxu0 0
    %1072 = vmatprep.subr.bf16.mxu0 0
    %1073 = vmatpush1.bf16.msra.mxu0 0
    %1074 = vmatprep.subr.bf16.mxu0 0
    %1075 = vmatpush1.bf16.msra.mxu0 0
    %1076 = vmatprep.mubr.bf16.mxu0 0
    %1077 = vmatmul.mubr.bf16.gmra.mrb[0].mxu0 %v595
    %v1078 = vpop.f32.mrb[0].mxu0
    %v1079 = vadd.f32 %v344, %v1078
    %v1080 = vpop.f32.mrb[0].mxu0
    %v1081 = vpop.f32.mrb[0].mxu0
    %v1082 = vpop.f32.mrb[0].mxu0
    %1083 = vdwg.mxu0
    %v1084 = vmul.f32 %v1036, %v1079
    %v1085 = vadd.f32 %v949, %v1084
    %v1086 = vtanh.pop %v1085
    %v1087 = vsub.f32 1.0, %v1043
    %v1088 = vmul.f32 %v1087, %v1086
    %v1089 = vmul.f32 %v1043, %v576
    %v1090 = vadd.f32 %v1088, %v1089
    %v1091 = vpack.c.bf16 %v941, %v941
    %v1092 = vpack.c.bf16 %v1090, %v1090
    %v1094 = vsel %vm156, %v1092, 0
    %1096 = vmatprep.subr.bf16.mxu0 0
    %1097 = vmatpush1.bf16.msra.mxu0 %v590
    %1098 = vmatprep.subr.bf16.mxu0 0
    %1099 = vmatpush1.bf16.msra.mxu0 %v591
    %1100 = vmatprep.subr.bf16.mxu0 0
    %1101 = vmatpush1.bf16.msra.mxu0 0
    %1102 = vmatprep.subr.bf16.mxu0 0
    %1103 = vmatpush1.bf16.msra.mxu0 0
    %1104 = vmatprep.subr.bf16.mxu0 0
    %1105 = vmatpush1.bf16.msra.mxu0 0
    %1106 = vmatprep.subr.bf16.mxu0 0
    %1107 = vmatpush1.bf16.msra.mxu0 0
    %1108 = vmatprep.subr.bf16.mxu0 0
    %1109 = vmatpush1.bf16.msra.mxu0 0
    %1110 = vmatprep.subr.bf16.mxu0 0
    %1111 = vmatpush1.bf16.msra.mxu0 0
    %1112 = vmatprep.subr.bf16.mxu0 0
    %1113 = vmatpush1.bf16.msra.mxu0 0
    %1114 = vmatprep.subr.bf16.mxu0 0
    %1115 = vmatpush1.bf16.msra.mxu0 0
    %1116 = vmatprep.subr.bf16.mxu0 0
    %1117 = vmatpush1.bf16.msra.mxu0 0
    %1118 = vmatprep.subr.bf16.mxu0 0
    %1119 = vmatpush1.bf16.msra.mxu0 0
    %1120 = vmatprep.subr.bf16.mxu0 0
    %1121 = vmatpush1.bf16.msra.mxu0 0
    %1122 = vmatprep.subr.bf16.mxu0 0
    %1123 = vmatpush1.bf16.msra.mxu0 0
    %1124 = vmatprep.subr.bf16.mxu0 0
    %1125 = vmatpush1.bf16.msra.mxu0 0
    %1126 = vmatprep.subr.bf16.mxu0 0
    %1127 = vmatpush1.bf16.msra.mxu0 0
    %1128 = vmatprep.mubr.bf16.mxu0 0
    %1129 = vmatmul.mubr.bf16.gmra.mrb[0].mxu0 %v1094
    %v1130 = vpop.f32.mrb[0].mxu0
    %v1131 = vadd.f32 %v351, %v1130
    %v1132 = vpop.f32.mrb[0].mxu0
    %v1133 = vpop.f32.mrb[0].mxu0
    %v1134 = vpop.f32.mrb[0].mxu0
    %1135 = vdwg.mxu0
    %1136 = vmatprep.subr.bf16.mxu0 0
    %1137 = vmatpush1.bf16.msra.mxu0 %v650
    %1138 = vmatprep.subr.bf16.mxu0 0
    %1139 = vmatpush1.bf16.msra.mxu0 %v651
    %1140 = vmatprep.subr.bf16.mxu0 0
    %1141 = vmatpush1.bf16.msra.mxu0 0
    %1142 = vmatprep.subr.bf16.mxu0 0
    %1143 = vmatpush1.bf16.msra.mxu0 0
    %1144 = vmatprep.subr.bf16.mxu0 0
    %1145 = vmatpush1.bf16.msra.mxu0 0
    %1146 = vmatprep.subr.bf16.mxu0 0
    %1147 = vmatpush1.bf16.msra.mxu0 0
    %1148 = vmatprep.subr.bf16.mxu0 0
    %1149 = vmatpush1.bf16.msra.mxu0 0
    %1150 = vmatprep.subr.bf16.mxu0 0
    %1151 = vmatpush1.bf16.msra.mxu0 0
    %1152 = vmatprep.subr.bf16.mxu0 0
    %1153 = vmatpush1.bf16.msra.mxu0 0
    %1154 = vmatprep.subr.bf16.mxu0 0
    %1155 = vmatpush1.bf16.msra.mxu0 0
    %1156 = vmatprep.subr.bf16.mxu0 0
    %1157 = vmatpush1.bf16.msra.mxu0 0
    %1158 = vmatprep.subr.bf16.mxu0 0
    %1159 = vmatpush1.bf16.msra.mxu0 0
    %1160 = vmatprep.subr.bf16.mxu0 0
    %1161 = vmatpush1.bf16.msra.mxu0 0
    %1162 = vmatprep.subr.bf16.mxu0 0
    %1163 = vmatpush1.bf16.msra.mxu0 0
    %1164 = vmatprep.subr.bf16.mxu0 0
    %1165 = vmatpush1.bf16.msra.mxu0 0
    %1166 = vmatprep.subr.bf16.mxu0 0
    %1167 = vmatpush1.bf16.msra.mxu0 0
    %1168 = vmatprep.mubr.bf16.mxu0 0
    %1169 = vmatmul.mubr.bf16.gmra.mrb[0].mxu0 %v1094
    %v1170 = vpop.f32.mrb[0].mxu0
    %v1171 = vadd.f32 %v359, %v1170
    %v1172 = vpop.f32.mrb[0].mxu0
    %v1173 = vpop.f32.mrb[0].mxu0
    %v1174 = vpop.f32.mrb[0].mxu0
    %1175 = vdwg.mxu0
    %1176 = vmatprep.subr.bf16.mxu0 0
    %1177 = vmatpush1.bf16.msra.mxu0 %v707
    %1178 = vmatprep.subr.bf16.mxu0 0
    %1179 = vmatpush1.bf16.msra.mxu0 %v708
    %1180 = vmatprep.subr.bf16.mxu0 0
    %1181 = vmatpush1.bf16.msra.mxu0 0
    %1182 = vmatprep.subr.bf16.mxu0 0
    %1183 = vmatpush1.bf16.msra.mxu0 0
    %1184 = vmatprep.subr.bf16.mxu0 0
    %1185 = vmatpush1.bf16.msra.mxu0 0
    %1186 = vmatprep.subr.bf16.mxu0 0
    %1187 = vmatpush1.bf16.msra.mxu0 0
    %1188 = vmatprep.subr.bf16.mxu0 0
    %1189 = vmatpush1.bf16.msra.mxu0 0
    %1190 = vmatprep.subr.bf16.mxu0 0
    %1191 = vmatpush1.bf16.msra.mxu0 0
    %1192 = vmatprep.subr.bf16.mxu0 0
    %1193 = vmatpush1.bf16.msra.mxu0 0
    %1194 = vmatprep.subr.bf16.mxu0 0
    %1195 = vmatpush1.bf16.msra.mxu0 0
    %1196 = vmatprep.subr.bf16.mxu0 0
    %1197 = vmatpush1.bf16.msra.mxu0 0
    %1198 = vmatprep.subr.bf16.mxu0 0
    %1199 = vmatpush1.bf16.msra.mxu0 0
    %1200 = vmatprep.subr.bf16.mxu0 0
    %1201 = vmatpush1.bf16.msra.mxu0 0
    %1202 = vmatprep.subr.bf16.mxu0 0
    %1203 = vmatpush1.bf16.msra.mxu0 0
    %1204 = vmatprep.subr.bf16.mxu0 0
    %1205 = vmatpush1.bf16.msra.mxu0 0
    %1206 = vmatprep.subr.bf16.mxu0 0
    %1207 = vmatpush1.bf16.msra.mxu0 0
    %1208 = vmatprep.mubr.bf16.mxu0 0
    %1209 = vmatmul.mubr.bf16.gmra.mrb[0].mxu0 %v1094
    %v1210 = vpop.f32.mrb[0].mxu0
    %v1211 = vadd.f32 %v367, %v1210
    %v1212 = vpop.f32.mrb[0].mxu0
    %v1213 = vpop.f32.mrb[0].mxu0
    %v1214 = vpop.f32.mrb[0].mxu0
    %1215 = vdwg.mxu0
    %v1217 = vsel %vm156, %v1091, 0
    %1219 = vmatprep.subr.bf16.mxu0 0
    %1220 = vmatpush1.bf16.msra.mxu0 %v763
    %1221 = vmatprep.subr.bf16.mxu0 0
    %1222 = vmatpush1.bf16.msra.mxu0 %v764
    %1223 = vmatprep.subr.bf16.mxu0 0
    %1224 = vmatpush1.bf16.msra.mxu0 0
    %1225 = vmatprep.subr.bf16.mxu0 0
    %1226 = vmatpush1.bf16.msra.mxu0 0
    %1227 = vmatprep.subr.bf16.mxu0 0
    %1228 = vmatpush1.bf16.msra.mxu0 0
    %1229 = vmatprep.subr.bf16.mxu0 0
    %1230 = vmatpush1.bf16.msra.mxu0 0
    %1231 = vmatprep.subr.bf16.mxu0 0
    %1232 = vmatpush1.bf16.msra.mxu0 0
    %1233 = vmatprep.subr.bf16.mxu0 0
    %1234 = vmatpush1.bf16.msra.mxu0 0
    %1235 = vmatprep.subr.bf16.mxu0 0
    %1236 = vmatpush1.bf16.msra.mxu0 0
    %1237 = vmatprep.subr.bf16.mxu0 0
    %1238 = vmatpush1.bf16.msra.mxu0 0
    %1239 = vmatprep.subr.bf16.mxu0 0
    %1240 = vmatpush1.bf16.msra.mxu0 0
    %1241 = vmatprep.subr.bf16.mxu0 0
    %1242 = vmatpush1.bf16.msra.mxu0 0
    %1243 = vmatprep.subr.bf16.mxu0 0
    %1244 = vmatpush1.bf16.msra.mxu0 0
    %1245 = vmatprep.subr.bf16.mxu0 0
    %1246 = vmatpush1.bf16.msra.mxu0 0
    %1247 = vmatprep.subr.bf16.mxu0 0
    %1248 = vmatpush1.bf16.msra.mxu0 0
    %1249 = vmatprep.subr.bf16.mxu0 0
    %1250 = vmatpush1.bf16.msra.mxu0 0
    %1251 = vmatprep.mubr.bf16.mxu0 0
    %1252 = vmatmul.mubr.bf16.gmra.mrb[0].mxu0 %v1217
    %v1253 = vpop.f32.mrb[0].mxu0
    %v1254 = vadd.f32 0.0, %v1253
    %v1255 = vpop.f32.mrb[0].mxu0
    %v1256 = vpop.f32.mrb[0].mxu0
    %v1257 = vpop.f32.mrb[0].mxu0
    %1258 = vdwg.mxu0
    %1259 = vmatprep.subr.bf16.mxu0 0
    %1260 = vmatpush1.bf16.msra.mxu0 %v820
    %1261 = vmatprep.subr.bf16.mxu0 0
    %1262 = vmatpush1.bf16.msra.mxu0 %v821
    %1263 = vmatprep.subr.bf16.mxu0 0
    %1264 = vmatpush1.bf16.msra.mxu0 0
    %1265 = vmatprep.subr.bf16.mxu0 0
    %1266 = vmatpush1.bf16.msra.mxu0 0
    %1267 = vmatprep.subr.bf16.mxu0 0
    %1268 = vmatpush1.bf16.msra.mxu0 0
    %1269 = vmatprep.subr.bf16.mxu0 0
    %1270 = vmatpush1.bf16.msra.mxu0 0
    %1271 = vmatprep.subr.bf16.mxu0 0
    %1272 = vmatpush1.bf16.msra.mxu0 0
    %1273 = vmatprep.subr.bf16.mxu0 0
    %1274 = vmatpush1.bf16.msra.mxu0 0
    %1275 = vmatprep.subr.bf16.mxu0 0
    %1276 = vmatpush1.bf16.msra.mxu0 0
    %1277 = vmatprep.subr.bf16.mxu0 0
    %1278 = vmatpush1.bf16.msra.mxu0 0
    %1279 = vmatprep.subr.bf16.mxu0 0
    %1280 = vmatpush1.bf16.msra.mxu0 0
    %1281 = vmatprep.subr.bf16.mxu0 0
    %1282 = vmatpush1.bf16.msra.mxu0 0
    %1283 = vmatprep.subr.bf16.mxu0 0
    %1284 = vmatpush1.bf16.msra.mxu0 0
    %1285 = vmatprep.subr.bf16.mxu0 0
    %1286 = vmatpush1.bf16.msra.mxu0 0
    %1287 = vmatprep.subr.bf16.mxu0 0
    %1288 = vmatpush1.bf16.msra.mxu0 0
    %1289 = vmatprep.subr.bf16.mxu0 0
    %1290 = vmatpush1.bf16.msra.mxu0 0
    %1291 = vmatprep.mubr.bf16.mxu0 0
    %1292 = vmatmul.mubr.bf16.gmra.mrb[0].mxu0 %v1217
    %v1293 = vpop.f32.mrb[0].mxu0
    %v1294 = vadd.f32 0.0, %v1293
    %v1295 = vpop.f32.mrb[0].mxu0
    %v1296 = vpop.f32.mrb[0].mxu0
    %v1297 = vpop.f32.mrb[0].mxu0
    %1298 = vdwg.mxu0
    %v1299 = vadd.f32 %v1131, %v1254
    %v1300 = vxor.u32 %v1299, 2147483648
    %v1301 = vmul.f32 %v1300, 1.442695
    %v1302 = vpow.pop %v1301
    %v1303 = vadd.f32 %v1302, 1.0
    %v1304 = vrcp.pop %v1303
    %v1305 = vmul.f32 1.0, %v1304
    %v1306 = vadd.f32 %v1171, %v1294
    %v1307 = vxor.u32 %v1306, 2147483648
    %v1308 = vmul.f32 %v1307, 1.442695
    %v1309 = vpow.pop %v1308
    %v1310 = vadd.f32 %v1309, 1.0
    %v1311 = vrcp.pop %v1310
    %v1312 = vmul.f32 1.0, %v1311
    %1313 = vmatprep.subr.bf16.mxu0 0
    %1314 = vmatpush1.bf16.msra.mxu0 %v891
    %1315 = vmatprep.subr.bf16.mxu0 0
    %1316 = vmatpush1.bf16.msra.mxu0 %v892
    %1317 = vmatprep.subr.bf16.mxu0 0
    %1318 = vmatpush1.bf16.msra.mxu0 0
    %1319 = vmatprep.subr.bf16.mxu0 0
    %1320 = vmatpush1.bf16.msra.mxu0 0
    %1321 = vmatprep.subr.bf16.mxu0 0
    %1322 = vmatpush1.bf16.msra.mxu0 0
    %1323 = vmatprep.subr.bf16.mxu0 0
    %1324 = vmatpush1.bf16.msra.mxu0 0
    %1325 = vmatprep.subr.bf16.mxu0 0
    %1326 = vmatpush1.bf16.msra.mxu0 0
    %1327 = vmatprep.subr.bf16.mxu0 0
    %1328 = vmatpush1.bf16.msra.mxu0 0
    %1329 = vmatprep.subr.bf16.mxu0 0
    %1330 = vmatpush1.bf16.msra.mxu0 0
    %1331 = vmatprep.subr.bf16.mxu0 0
    %1332 = vmatpush1.bf16.msra.mxu0 0
    %1333 = vmatprep.subr.bf16.mxu0 0
    %1334 = vmatpush1.bf16.msra.mxu0 0
    %1335 = vmatprep.subr.bf16.mxu0 0
    %1336 = vmatpush1.bf16.msra.mxu0 0
    %1337 = vmatprep.subr.bf16.mxu0 0
    %1338 = vmatpush1.bf16.msra.mxu0 0
    %1339 = vmatprep.subr.bf16.mxu0 0
    %1340 = vmatpush1.bf16.msra.mxu0 0
    %1341 = vmatprep.subr.bf16.mxu0 0
    %1342 = vmatpush1.bf16.msra.mxu0 0
    %1343 = vmatprep.subr.bf16.mxu0 0
    %1344 = vmatpush1.bf16.msra.mxu0 0
    %1345 = vmatprep.mubr.bf16.mxu0 0
    %1346 = vmatmul.mubr.bf16.gmra.mrb[0].mxu0 %v1217
    %v1347 = vpop.f32.mrb[0].mxu0
    %v1348 = vadd.f32 %v374, %v1347
    %v1349 = vpop.f32.mrb[0].mxu0
    %v1350 = vpop.f32.mrb[0].mxu0
    %v1351 = vpop.f32.mrb[0].mxu0
    %1352 = vdwg.mxu0
    %v1353 = vmul.f32 %v1305, %v1348
    %v1354 = vadd.f32 %v1211, %v1353
    %v1355 = vtanh.pop %v1354
    %v1356 = vsub.f32 1.0, %v1312
    %v1357 = vmul.f32 %v1356, %v1355
    %v1358 = vmul.f32 %v1312, %v941
    %v1359 = vadd.f32 %v1357, %v1358
    %s1360 = scalar_lea.vmem [#allocation2], 16
    %v1361 = vld [vmem:[%s1360] sm:$0xff]
    %s1362 = sadd.s32 16, 64
    %s1363 = scalar_lea.vmem [#allocation2], %s1362
    %v1364 = vld [vmem:[%s1363] sm:$0xff]
    %s1365 = sadd.s32 16, 128
    %s1366 = scalar_lea.vmem [#allocation2], %s1365
    %v1367 = vld [vmem:[%s1366] sm:$0xff]
    %1368 = vmatprep.subr.bf16.mxu0 0
    %1369 = vmatpush1.bf16.msra.mxu0 %v395
    %1370 = vmatprep.subr.bf16.mxu0 0
    %1371 = vmatpush1.bf16.msra.mxu0 %v396
    %1372 = vmatprep.subr.bf16.mxu0 0
    %1373 = vmatpush1.bf16.msra.mxu0 0
    %1374 = vmatprep.subr.bf16.mxu0 0
    %1375 = vmatpush1.bf16.msra.mxu0 0
    %1376 = vmatprep.subr.bf16.mxu0 0
    %1377 = vmatpush1.bf16.msra.mxu0 0
    %1378 = vmatprep.subr.bf16.mxu0 0
    %1379 = vmatpush1.bf16.msra.mxu0 0
    %1380 = vmatprep.subr.bf16.mxu0 0
    %1381 = vmatpush1.bf16.msra.mxu0 0
    %1382 = vmatprep.subr.bf16.mxu0 0
    %1383 = vmatpush1.bf16.msra.mxu0 0
    %1384 = vmatprep.subr.bf16.mxu0 0
    %1385 = vmatpush1.bf16.msra.mxu0 0
    %1386 = vmatprep.subr.bf16.mxu0 0
    %1387 = vmatpush1.bf16.msra.mxu0 0
    %1388 = vmatprep.subr.bf16.mxu0 0
    %1389 = vmatpush1.bf16.msra.mxu0 0
    %1390 = vmatprep.subr.bf16.mxu0 0
    %1391 = vmatpush1.bf16.msra.mxu0 0
    %1392 = vmatprep.subr.bf16.mxu0 0
    %1393 = vmatpush1.bf16.msra.mxu0 0
    %1394 = vmatprep.subr.bf16.mxu0 0
    %1395 = vmatpush1.bf16.msra.mxu0 0
    %1396 = vmatprep.subr.bf16.mxu0 0
    %1397 = vmatpush1.bf16.msra.mxu0 0
    %1398 = vmatprep.subr.bf16.mxu0 0
    %1399 = vmatpush1.bf16.msra.mxu0 0
    %1400 = vmatprep.mubr.bf16.mxu0 0
    %1401 = vmatmul.mubr.bf16.gmra.mrb[0].mxu0 %v1094
    %v1402 = vpop.f32.mrb[0].mxu0
    %v1403 = vadd.f32 0.0, %v1402
    %v1404 = vpop.f32.mrb[0].mxu0
    %v1405 = vpop.f32.mrb[0].mxu0
    %v1406 = vpop.f32.mrb[0].mxu0
    %1407 = vdwg.mxu0
    %1408 = vmatprep.subr.bf16.mxu0 0
    %1409 = vmatpush1.bf16.msra.mxu0 %v455
    %1410 = vmatprep.subr.bf16.mxu0 0
    %1411 = vmatpush1.bf16.msra.mxu0 %v456
    %1412 = vmatprep.subr.bf16.mxu0 0
    %1413 = vmatpush1.bf16.msra.mxu0 0
    %1414 = vmatprep.subr.bf16.mxu0 0
    %1415 = vmatpush1.bf16.msra.mxu0 0
    %1416 = vmatprep.subr.bf16.mxu0 0
    %1417 = vmatpush1.bf16.msra.mxu0 0
    %1418 = vmatprep.subr.bf16.mxu0 0
    %1419 = vmatpush1.bf16.msra.mxu0 0
    %1420 = vmatprep.subr.bf16.mxu0 0
    %1421 = vmatpush1.bf16.msra.mxu0 0
    %1422 = vmatprep.subr.bf16.mxu0 0
    %1423 = vmatpush1.bf16.msra.mxu0 0
    %1424 = vmatprep.subr.bf16.mxu0 0
    %1425 = vmatpush1.bf16.msra.mxu0 0
    %1426 = vmatprep.subr.bf16.mxu0 0
    %1427 = vmatpush1.bf16.msra.mxu0 0
    %1428 = vmatprep.subr.bf16.mxu0 0
    %1429 = vmatpush1.bf16.msra.mxu0 0
    %1430 = vmatprep.subr.bf16.mxu0 0
    %1431 = vmatpush1.bf16.msra.mxu0 0
    %1432 = vmatprep.subr.bf16.mxu0 0
    %1433 = vmatpush1.bf16.msra.mxu0 0
    %1434 = vmatprep.subr.bf16.mxu0 0
    %1435 = vmatpush1.bf16.msra.mxu0 0
    %1436 = vmatprep.subr.bf16.mxu0 0
    %1437 = vmatpush1.bf16.msra.mxu0 0
    %1438 = vmatprep.subr.bf16.mxu0 0
    %1439 = vmatpush1.bf16.msra.mxu0 0
    %1440 = vmatprep.mubr.bf16.mxu0 0
    %1441 = vmatmul.mubr.bf16.gmra.mrb[0].mxu0 %v1094
    %v1442 = vpop.f32.mrb[0].mxu0
    %v1443 = vadd.f32 0.0, %v1442
    %v1444 = vpop.f32.mrb[0].mxu0
    %v1445 = vpop.f32.mrb[0].mxu0
    %v1446 = vpop.f32.mrb[0].mxu0
    %1447 = vdwg.mxu0
    %v1448 = vadd.f32 %v1361, %v1403
    %v1449 = vxor.u32 %v1448, 2147483648
    %v1450 = vmul.f32 %v1449, 1.442695
    %v1451 = vpow.pop %v1450
    %v1452 = vadd.f32 %v1451, 1.0
    %v1453 = vrcp.pop %v1452
    %v1454 = vmul.f32 1.0, %v1453
    %v1455 = vadd.f32 %v1364, %v1443
    %v1456 = vxor.u32 %v1455, 2147483648
    %v1457 = vmul.f32 %v1456, 1.442695
    %v1458 = vpow.pop %v1457
    %v1459 = vadd.f32 %v1458, 1.0
    %v1460 = vrcp.pop %v1459
    %v1461 = vmul.f32 1.0, %v1460
    %1462 = vmatprep.subr.bf16.mxu0 0
    %1463 = vmatpush1.bf16.msra.mxu0 %v526
    %1464 = vmatprep.subr.bf16.mxu0 0
    %1465 = vmatpush1.bf16.msra.mxu0 %v527
    %1466 = vmatprep.subr.bf16.mxu0 0
    %1467 = vmatpush1.bf16.msra.mxu0 0
    %1468 = vmatprep.subr.bf16.mxu0 0
    %1469 = vmatpush1.bf16.msra.mxu0 0
    %1470 = vmatprep.subr.bf16.mxu0 0
    %1471 = vmatpush1.bf16.msra.mxu0 0
    %1472 = vmatprep.subr.bf16.mxu0 0
    %1473 = vmatpush1.bf16.msra.mxu0 0
    %1474 = vmatprep.subr.bf16.mxu0 0
    %1475 = vmatpush1.bf16.msra.mxu0 0
    %1476 = vmatprep.subr.bf16.mxu0 0
    %1477 = vmatpush1.bf16.msra.mxu0 0
    %1478 = vmatprep.subr.bf16.mxu0 0
    %1479 = vmatpush1.bf16.msra.mxu0 0
    %1480 = vmatprep.subr.bf16.mxu0 0
    %1481 = vmatpush1.bf16.msra.mxu0 0
    %1482 = vmatprep.subr.bf16.mxu0 0
    %1483 = vmatpush1.bf16.msra.mxu0 0
    %1484 = vmatprep.subr.bf16.mxu0 0
    %1485 = vmatpush1.bf16.msra.mxu0 0
    %1486 = vmatprep.subr.bf16.mxu0 0
    %1487 = vmatpush1.bf16.msra.mxu0 0
    %1488 = vmatprep.subr.bf16.mxu0 0
    %1489 = vmatpush1.bf16.msra.mxu0 0
    %1490 = vmatprep.subr.bf16.mxu0 0
    %1491 = vmatpush1.bf16.msra.mxu0 0
    %1492 = vmatprep.subr.bf16.mxu0 0
    %1493 = vmatpush1.bf16.msra.mxu0 0
    %1494 = vmatprep.mubr.bf16.mxu0 0
    %1495 = vmatmul.mubr.bf16.gmra.mrb[0].mxu0 %v1094
    %v1496 = vpop.f32.mrb[0].mxu0
    %v1497 = vadd.f32 %v344, %v1496
    %v1498 = vpop.f32.mrb[0].mxu0
    %v1499 = vpop.f32.mrb[0].mxu0
    %v1500 = vpop.f32.mrb[0].mxu0
    %1501 = vdwg.mxu0
    %v1502 = vmul.f32 %v1454, %v1497
    %v1503 = vadd.f32 %v1367, %v1502
    %v1504 = vtanh.pop %v1503
    %v1505 = vsub.f32 1.0, %v1461
    %v1506 = vmul.f32 %v1505, %v1504
    %v1507 = vmul.f32 %v1461, %v1090
    %v1508 = vadd.f32 %v1506, %v1507
    %v1509 = vpack.c.bf16 %v1359, %v1359
    %v1510 = vpack.c.bf16 %v1508, %v1508
    %v1512 = vsel %vm156, %v1510, 0
    %1514 = vmatprep.subr.bf16.mxu0 0
    %1515 = vmatpush1.bf16.msra.mxu0 %v590
    %1516 = vmatprep.subr.bf16.mxu0 0
    %1517 = vmatpush1.bf16.msra.mxu0 %v591
    %1518 = vmatprep.subr.bf16.mxu0 0
    %1519 = vmatpush1.bf16.msra.mxu0 0
    %1520 = vmatprep.subr.bf16.mxu0 0
    %1521 = vmatpush1.bf16.msra.mxu0 0
    %1522 = vmatprep.subr.bf16.mxu0 0
    %1523 = vmatpush1.bf16.msra.mxu0 0
    %1524 = vmatprep.subr.bf16.mxu0 0
    %1525 = vmatpush1.bf16.msra.mxu0 0
    %1526 = vmatprep.subr.bf16.mxu0 0
    %1527 = vmatpush1.bf16.msra.mxu0 0
    %1528 = vmatprep.subr.bf16.mxu0 0
    %1529 = vmatpush1.bf16.msra.mxu0 0
    %1530 = vmatprep.subr.bf16.mxu0 0
    %1531 = vmatpush1.bf16.msra.mxu0 0
    %1532 = vmatprep.subr.bf16.mxu0 0
    %1533 = vmatpush1.bf16.msra.mxu0 0
    %1534 = vmatprep.subr.bf16.mxu0 0
    %1535 = vmatpush1.bf16.msra.mxu0 0
    %1536 = vmatprep.subr.bf16.mxu0 0
    %1537 = vmatpush1.bf16.msra.mxu0 0
    %1538 = vmatprep.subr.bf16.mxu0 0
    %1539 = vmatpush1.bf16.msra.mxu0 0
    %1540 = vmatprep.subr.bf16.mxu0 0
    %1541 = vmatpush1.bf16.msra.mxu0 0
    %1542 = vmatprep.subr.bf16.mxu0 0
    %1543 = vmatpush1.bf16.msra.mxu0 0
    %1544 = vmatprep.subr.bf16.mxu0 0
    %1545 = vmatpush1.bf16.msra.mxu0 0
    %1546 = vmatprep.mubr.bf16.mxu0 0
    %1547 = vmatmul.mubr.bf16.gmra.mrb[0].mxu0 %v1512
    %v1548 = vpop.f32.mrb[0].mxu0
    %v1549 = vadd.f32 %v351, %v1548
    %v1550 = vpop.f32.mrb[0].mxu0
    %v1551 = vpop.f32.mrb[0].mxu0
    %v1552 = vpop.f32.mrb[0].mxu0
    %1553 = vdwg.mxu0
    %1554 = vmatprep.subr.bf16.mxu0 0
    %1555 = vmatpush1.bf16.msra.mxu0 %v650
    %1556 = vmatprep.subr.bf16.mxu0 0
    %1557 = vmatpush1.bf16.msra.mxu0 %v651
    %1558 = vmatprep.subr.bf16.mxu0 0
    %1559 = vmatpush1.bf16.msra.mxu0 0
    %1560 = vmatprep.subr.bf16.mxu0 0
    %1561 = vmatpush1.bf16.msra.mxu0 0
    %1562 = vmatprep.subr.bf16.mxu0 0
    %1563 = vmatpush1.bf16.msra.mxu0 0
    %1564 = vmatprep.subr.bf16.mxu0 0
    %1565 = vmatpush1.bf16.msra.mxu0 0
    %1566 = vmatprep.subr.bf16.mxu0 0
    %1567 = vmatpush1.bf16.msra.mxu0 0
    %1568 = vmatprep.subr.bf16.mxu0 0
    %1569 = vmatpush1.bf16.msra.mxu0 0
    %1570 = vmatprep.subr.bf16.mxu0 0
    %1571 = vmatpush1.bf16.msra.mxu0 0
    %1572 = vmatprep.subr.bf16.mxu0 0
    %1573 = vmatpush1.bf16.msra.mxu0 0
    %1574 = vmatprep.subr.bf16.mxu0 0
    %1575 = vmatpush1.bf16.msra.mxu0 0
    %1576 = vmatprep.subr.bf16.mxu0 0
    %1577 = vmatpush1.bf16.msra.mxu0 0
    %1578 = vmatprep.subr.bf16.mxu0 0
    %1579 = vmatpush1.bf16.msra.mxu0 0
    %1580 = vmatprep.subr.bf16.mxu0 0
    %1581 = vmatpush1.bf16.msra.mxu0 0
    %1582 = vmatprep.subr.bf16.mxu0 0
    %1583 = vmatpush1.bf16.msra.mxu0 0
    %1584 = vmatprep.subr.bf16.mxu0 0
    %1585 = vmatpush1.bf16.msra.mxu0 0
    %1586 = vmatprep.mubr.bf16.mxu0 0
    %1587 = vmatmul.mubr.bf16.gmra.mrb[0].mxu0 %v1512
    %v1588 = vpop.f32.mrb[0].mxu0
    %v1589 = vadd.f32 %v359, %v1588
    %v1590 = vpop.f32.mrb[0].mxu0
    %v1591 = vpop.f32.mrb[0].mxu0
    %v1592 = vpop.f32.mrb[0].mxu0
    %1593 = vdwg.mxu0
    %1594 = vmatprep.subr.bf16.mxu0 0
    %1595 = vmatpush1.bf16.msra.mxu0 %v707
    %1596 = vmatprep.subr.bf16.mxu0 0
    %1597 = vmatpush1.bf16.msra.mxu0 %v708
    %1598 = vmatprep.subr.bf16.mxu0 0
    %1599 = vmatpush1.bf16.msra.mxu0 0
    %1600 = vmatprep.subr.bf16.mxu0 0
    %1601 = vmatpush1.bf16.msra.mxu0 0
    %1602 = vmatprep.subr.bf16.mxu0 0
    %1603 = vmatpush1.bf16.msra.mxu0 0
    %1604 = vmatprep.subr.bf16.mxu0 0
    %1605 = vmatpush1.bf16.msra.mxu0 0
    %1606 = vmatprep.subr.bf16.mxu0 0
    %1607 = vmatpush1.bf16.msra.mxu0 0
    %1608 = vmatprep.subr.bf16.mxu0 0
    %1609 = vmatpush1.bf16.msra.mxu0 0
    %1610 = vmatprep.subr.bf16.mxu0 0
    %1611 = vmatpush1.bf16.msra.mxu0 0
    %1612 = vmatprep.subr.bf16.mxu0 0
    %1613 = vmatpush1.bf16.msra.mxu0 0
    %1614 = vmatprep.subr.bf16.mxu0 0
    %1615 = vmatpush1.bf16.msra.mxu0 0
    %1616 = vmatprep.subr.bf16.mxu0 0
    %1617 = vmatpush1.bf16.msra.mxu0 0
    %1618 = vmatprep.subr.bf16.mxu0 0
    %1619 = vmatpush1.bf16.msra.mxu0 0
    %1620 = vmatprep.subr.bf16.mxu0 0
    %1621 = vmatpush1.bf16.msra.mxu0 0
    %1622 = vmatprep.subr.bf16.mxu0 0
    %1623 = vmatpush1.bf16.msra.mxu0 0
    %1624 = vmatprep.subr.bf16.mxu0 0
    %1625 = vmatpush1.bf16.msra.mxu0 0
    %1626 = vmatprep.mubr.bf16.mxu0 0
    %1627 = vmatmul.mubr.bf16.gmra.mrb[0].mxu0 %v1512
    %v1628 = vpop.f32.mrb[0].mxu0
    %v1629 = vadd.f32 %v367, %v1628
    %v1630 = vpop.f32.mrb[0].mxu0
    %v1631 = vpop.f32.mrb[0].mxu0
    %v1632 = vpop.f32.mrb[0].mxu0
    %1633 = vdwg.mxu0
    %v1635 = vsel %vm156, %v1509, 0
    %1637 = vmatprep.subr.bf16.mxu0 0
    %1638 = vmatpush1.bf16.msra.mxu0 %v763
    %1639 = vmatprep.subr.bf16.mxu0 0
    %1640 = vmatpush1.bf16.msra.mxu0 %v764
    %1641 = vmatprep.subr.bf16.mxu0 0
    %1642 = vmatpush1.bf16.msra.mxu0 0
    %1643 = vmatprep.subr.bf16.mxu0 0
    %1644 = vmatpush1.bf16.msra.mxu0 0
    %1645 = vmatprep.subr.bf16.mxu0 0
    %1646 = vmatpush1.bf16.msra.mxu0 0
    %1647 = vmatprep.subr.bf16.mxu0 0
    %1648 = vmatpush1.bf16.msra.mxu0 0
    %1649 = vmatprep.subr.bf16.mxu0 0
    %1650 = vmatpush1.bf16.msra.mxu0 0
    %1651 = vmatprep.subr.bf16.mxu0 0
    %1652 = vmatpush1.bf16.msra.mxu0 0
    %1653 = vmatprep.subr.bf16.mxu0 0
    %1654 = vmatpush1.bf16.msra.mxu0 0
    %1655 = vmatprep.subr.bf16.mxu0 0
    %1656 = vmatpush1.bf16.msra.mxu0 0
    %1657 = vmatprep.subr.bf16.mxu0 0
    %1658 = vmatpush1.bf16.msra.mxu0 0
    %1659 = vmatprep.subr.bf16.mxu0 0
    %1660 = vmatpush1.bf16.msra.mxu0 0
    %1661 = vmatprep.subr.bf16.mxu0 0
    %1662 = vmatpush1.bf16.msra.mxu0 0
    %1663 = vmatprep.subr.bf16.mxu0 0
    %1664 = vmatpush1.bf16.msra.mxu0 0
    %1665 = vmatprep.subr.bf16.mxu0 0
    %1666 = vmatpush1.bf16.msra.mxu0 0
    %1667 = vmatprep.subr.bf16.mxu0 0
    %1668 = vmatpush1.bf16.msra.mxu0 0
    %1669 = vmatprep.mubr.bf16.mxu0 0
    %1670 = vmatmul.mubr.bf16.gmra.mrb[0].mxu0 %v1635
    %v1671 = vpop.f32.mrb[0].mxu0
    %v1672 = vadd.f32 0.0, %v1671
    %v1673 = vpop.f32.mrb[0].mxu0
    %v1674 = vpop.f32.mrb[0].mxu0
    %v1675 = vpop.f32.mrb[0].mxu0
    %1676 = vdwg.mxu0
    %1677 = vmatprep.subr.bf16.mxu0 0
    %1678 = vmatpush1.bf16.msra.mxu0 %v820
    %1679 = vmatprep.subr.bf16.mxu0 0
    %1680 = vmatpush1.bf16.msra.mxu0 %v821
    %1681 = vmatprep.subr.bf16.mxu0 0
    %1682 = vmatpush1.bf16.msra.mxu0 0
    %1683 = vmatprep.subr.bf16.mxu0 0
    %1684 = vmatpush1.bf16.msra.mxu0 0
    %1685 = vmatprep.subr.bf16.mxu0 0
    %1686 = vmatpush1.bf16.msra.mxu0 0
    %1687 = vmatprep.subr.bf16.mxu0 0
    %1688 = vmatpush1.bf16.msra.mxu0 0
    %1689 = vmatprep.subr.bf16.mxu0 0
    %1690 = vmatpush1.bf16.msra.mxu0 0
    %1691 = vmatprep.subr.bf16.mxu0 0
    %1692 = vmatpush1.bf16.msra.mxu0 0
    %1693 = vmatprep.subr.bf16.mxu0 0
    %1694 = vmatpush1.bf16.msra.mxu0 0
    %1695 = vmatprep.subr.bf16.mxu0 0
    %1696 = vmatpush1.bf16.msra.mxu0 0
    %1697 = vmatprep.subr.bf16.mxu0 0
    %1698 = vmatpush1.bf16.msra.mxu0 0
    %1699 = vmatprep.subr.bf16.mxu0 0
    %1700 = vmatpush1.bf16.msra.mxu0 0
    %1701 = vmatprep.subr.bf16.mxu0 0
    %1702 = vmatpush1.bf16.msra.mxu0 0
    %1703 = vmatprep.subr.bf16.mxu0 0
    %1704 = vmatpush1.bf16.msra.mxu0 0
    %1705 = vmatprep.subr.bf16.mxu0 0
    %1706 = vmatpush1.bf16.msra.mxu0 0
    %1707 = vmatprep.subr.bf16.mxu0 0
    %1708 = vmatpush1.bf16.msra.mxu0 0
    %1709 = vmatprep.mubr.bf16.mxu0 0
    %1710 = vmatmul.mubr.bf16.gmra.mrb[0].mxu0 %v1635
    %v1711 = vpop.f32.mrb[0].mxu0
    %v1712 = vadd.f32 0.0, %v1711
    %v1713 = vpop.f32.mrb[0].mxu0
    %v1714 = vpop.f32.mrb[0].mxu0
    %v1715 = vpop.f32.mrb[0].mxu0
    %1716 = vdwg.mxu0
    %v1717 = vadd.f32 %v1549, %v1672
    %v1718 = vxor.u32 %v1717, 2147483648
    %v1719 = vmul.f32 %v1718, 1.442695
    %v1720 = vpow.pop %v1719
    %v1721 = vadd.f32 %v1720, 1.0
    %v1722 = vrcp.pop %v1721
    %v1723 = vmul.f32 1.0, %v1722
    %v1724 = vadd.f32 %v1589, %v1712
    %v1725 = vxor.u32 %v1724, 2147483648
    %v1726 = vmul.f32 %v1725, 1.442695
    %v1727 = vpow.pop %v1726
    %v1728 = vadd.f32 %v1727, 1.0
    %v1729 = vrcp.pop %v1728
    %v1730 = vmul.f32 1.0, %v1729
    %1731 = vmatprep.subr.bf16.mxu0 0
    %1732 = vmatpush1.bf16.msra.mxu0 %v891
    %1733 = vmatprep.subr.bf16.mxu0 0
    %1734 = vmatpush1.bf16.msra.mxu0 %v892
    %1735 = vmatprep.subr.bf16.mxu0 0
    %1736 = vmatpush1.bf16.msra.mxu0 0
    %1737 = vmatprep.subr.bf16.mxu0 0
    %1738 = vmatpush1.bf16.msra.mxu0 0
    %1739 = vmatprep.subr.bf16.mxu0 0
    %1740 = vmatpush1.bf16.msra.mxu0 0
    %1741 = vmatprep.subr.bf16.mxu0 0
    %1742 = vmatpush1.bf16.msra.mxu0 0
    %1743 = vmatprep.subr.bf16.mxu0 0
    %1744 = vmatpush1.bf16.msra.mxu0 0
    %1745 = vmatprep.subr.bf16.mxu0 0
    %1746 = vmatpush1.bf16.msra.mxu0 0
    %1747 = vmatprep.subr.bf16.mxu0 0
    %1748 = vmatpush1.bf16.msra.mxu0 0
    %1749 = vmatprep.subr.bf16.mxu0 0
    %1750 = vmatpush1.bf16.msra.mxu0 0
    %1751 = vmatprep.subr.bf16.mxu0 0
    %1752 = vmatpush1.bf16.msra.mxu0 0
    %1753 = vmatprep.subr.bf16.mxu0 0
    %1754 = vmatpush1.bf16.msra.mxu0 0
    %1755 = vmatprep.subr.bf16.mxu0 0
    %1756 = vmatpush1.bf16.msra.mxu0 0
    %1757 = vmatprep.subr.bf16.mxu0 0
    %1758 = vmatpush1.bf16.msra.mxu0 0
    %1759 = vmatprep.subr.bf16.mxu0 0
    %1760 = vmatpush1.bf16.msra.mxu0 0
    %1761 = vmatprep.subr.bf16.mxu0 0
    %1762 = vmatpush1.bf16.msra.mxu0 0
    %1763 = vmatprep.mubr.bf16.mxu0 0
    %1764 = vmatmul.mubr.bf16.gmra.mrb[0].mxu0 %v1635
    %v1765 = vpop.f32.mrb[0].mxu0
    %v1766 = vadd.f32 %v374, %v1765
    %v1767 = vpop.f32.mrb[0].mxu0
    %v1768 = vpop.f32.mrb[0].mxu0
    %v1769 = vpop.f32.mrb[0].mxu0
    %1770 = vdwg.mxu0
    %v1771 = vmul.f32 %v1723, %v1766
    %v1772 = vadd.f32 %v1629, %v1771
    %v1773 = vtanh.pop %v1772
    %v1774 = vsub.f32 1.0, %v1730
    %v1775 = vmul.f32 %v1774, %v1773
    %v1776 = vmul.f32 %v1730, %v1359
    %v1777 = vadd.f32 %v1775, %v1776
    %s1778 = scalar_lea.vmem [#allocation2], 24
    %v1779 = vld [vmem:[%s1778] sm:$0xff]
    %s1780 = sadd.s32 24, 64
    %s1781 = scalar_lea.vmem [#allocation2], %s1780
    %v1782 = vld [vmem:[%s1781] sm:$0xff]
    %s1783 = sadd.s32 24, 128
    %s1784 = scalar_lea.vmem [#allocation2], %s1783
    %v1785 = vld [vmem:[%s1784] sm:$0xff]
    %1786 = vmatprep.subr.bf16.mxu0 0
    %1787 = vmatpush1.bf16.msra.mxu0 %v395
    %1788 = vmatprep.subr.bf16.mxu0 0
    %1789 = vmatpush1.bf16.msra.mxu0 %v396
    %1790 = vmatprep.subr.bf16.mxu0 0
    %1791 = vmatpush1.bf16.msra.mxu0 0
    %1792 = vmatprep.subr.bf16.mxu0 0
    %1793 = vmatpush1.bf16.msra.mxu0 0
    %1794 = vmatprep.subr.bf16.mxu0 0
    %1795 = vmatpush1.bf16.msra.mxu0 0
    %1796 = vmatprep.subr.bf16.mxu0 0
    %1797 = vmatpush1.bf16.msra.mxu0 0
    %1798 = vmatprep.subr.bf16.mxu0 0
    %1799 = vmatpush1.bf16.msra.mxu0 0
    %1800 = vmatprep.subr.bf16.mxu0 0
    %1801 = vmatpush1.bf16.msra.mxu0 0
    %1802 = vmatprep.subr.bf16.mxu0 0
    %1803 = vmatpush1.bf16.msra.mxu0 0
    %1804 = vmatprep.subr.bf16.mxu0 0
    %1805 = vmatpush1.bf16.msra.mxu0 0
    %1806 = vmatprep.subr.bf16.mxu0 0
    %1807 = vmatpush1.bf16.msra.mxu0 0
    %1808 = vmatprep.subr.bf16.mxu0 0
    %1809 = vmatpush1.bf16.msra.mxu0 0
    %1810 = vmatprep.subr.bf16.mxu0 0
    %1811 = vmatpush1.bf16.msra.mxu0 0
    %1812 = vmatprep.subr.bf16.mxu0 0
    %1813 = vmatpush1.bf16.msra.mxu0 0
    %1814 = vmatprep.subr.bf16.mxu0 0
    %1815 = vmatpush1.bf16.msra.mxu0 0
    %1816 = vmatprep.subr.bf16.mxu0 0
    %1817 = vmatpush1.bf16.msra.mxu0 0
    %1818 = vmatprep.mubr.bf16.mxu0 0
    %1819 = vmatmul.mubr.bf16.gmra.mrb[0].mxu0 %v1512
    %v1820 = vpop.f32.mrb[0].mxu0
    %v1821 = vadd.f32 0.0, %v1820
    %v1822 = vpop.f32.mrb[0].mxu0
    %v1823 = vpop.f32.mrb[0].mxu0
    %v1824 = vpop.f32.mrb[0].mxu0
    %1825 = vdwg.mxu0
    %1826 = vmatprep.subr.bf16.mxu0 0
    %1827 = vmatpush1.bf16.msra.mxu0 %v455
    %1828 = vmatprep.subr.bf16.mxu0 0
    %1829 = vmatpush1.bf16.msra.mxu0 %v456
    %1830 = vmatprep.subr.bf16.mxu0 0
    %1831 = vmatpush1.bf16.msra.mxu0 0
    %1832 = vmatprep.subr.bf16.mxu0 0
    %1833 = vmatpush1.bf16.msra.mxu0 0
    %1834 = vmatprep.subr.bf16.mxu0 0
    %1835 = vmatpush1.bf16.msra.mxu0 0
    %1836 = vmatprep.subr.bf16.mxu0 0
    %1837 = vmatpush1.bf16.msra.mxu0 0
    %1838 = vmatprep.subr.bf16.mxu0 0
    %1839 = vmatpush1.bf16.msra.mxu0 0
    %1840 = vmatprep.subr.bf16.mxu0 0
    %1841 = vmatpush1.bf16.msra.mxu0 0
    %1842 = vmatprep.subr.bf16.mxu0 0
    %1843 = vmatpush1.bf16.msra.mxu0 0
    %1844 = vmatprep.subr.bf16.mxu0 0
    %1845 = vmatpush1.bf16.msra.mxu0 0
    %1846 = vmatprep.subr.bf16.mxu0 0
    %1847 = vmatpush1.bf16.msra.mxu0 0
    %1848 = vmatprep.subr.bf16.mxu0 0
    %1849 = vmatpush1.bf16.msra.mxu0 0
    %1850 = vmatprep.subr.bf16.mxu0 0
    %1851 = vmatpush1.bf16.msra.mxu0 0
    %1852 = vmatprep.subr.bf16.mxu0 0
    %1853 = vmatpush1.bf16.msra.mxu0 0
    %1854 = vmatprep.subr.bf16.mxu0 0
    %1855 = vmatpush1.bf16.msra.mxu0 0
    %1856 = vmatprep.subr.bf16.mxu0 0
    %1857 = vmatpush1.bf16.msra.mxu0 0
    %1858 = vmatprep.mubr.bf16.mxu0 0
    %1859 = vmatmul.mubr.bf16.gmra.mrb[0].mxu0 %v1512
    %v1860 = vpop.f32.mrb[0].mxu0
    %v1861 = vadd.f32 0.0, %v1860
    %v1862 = vpop.f32.mrb[0].mxu0
    %v1863 = vpop.f32.mrb[0].mxu0
    %v1864 = vpop.f32.mrb[0].mxu0
    %1865 = vdwg.mxu0
    %v1866 = vadd.f32 %v1779, %v1821
    %v1867 = vxor.u32 %v1866, 2147483648
    %v1868 = vmul.f32 %v1867, 1.442695
    %v1869 = vpow.pop %v1868
    %v1870 = vadd.f32 %v1869, 1.0
    %v1871 = vrcp.pop %v1870
    %v1872 = vmul.f32 1.0, %v1871
    %v1873 = vadd.f32 %v1782, %v1861
    %v1874 = vxor.u32 %v1873, 2147483648
    %v1875 = vmul.f32 %v1874, 1.442695
    %v1876 = vpow.pop %v1875
    %v1877 = vadd.f32 %v1876, 1.0
    %v1878 = vrcp.pop %v1877
    %v1879 = vmul.f32 1.0, %v1878
    %1880 = vmatprep.subr.bf16.mxu0 0
    %1881 = vmatpush1.bf16.msra.mxu0 %v526
    %1882 = vmatprep.subr.bf16.mxu0 0
    %1883 = vmatpush1.bf16.msra.mxu0 %v527
    %1884 = vmatprep.subr.bf16.mxu0 0
    %1885 = vmatpush1.bf16.msra.mxu0 0
    %1886 = vmatprep.subr.bf16.mxu0 0
    %1887 = vmatpush1.bf16.msra.mxu0 0
    %1888 = vmatprep.subr.bf16.mxu0 0
    %1889 = vmatpush1.bf16.msra.mxu0 0
    %1890 = vmatprep.subr.bf16.mxu0 0
    %1891 = vmatpush1.bf16.msra.mxu0 0
    %1892 = vmatprep.subr.bf16.mxu0 0
    %1893 = vmatpush1.bf16.msra.mxu0 0
    %1894 = vmatprep.subr.bf16.mxu0 0
    %1895 = vmatpush1.bf16.msra.mxu0 0
    %1896 = vmatprep.subr.bf16.mxu0 0
    %1897 = vmatpush1.bf16.msra.mxu0 0
    %1898 = vmatprep.subr.bf16.mxu0 0
    %1899 = vmatpush1.bf16.msra.mxu0 0
    %1900 = vmatprep.subr.bf16.mxu0 0
    %1901 = vmatpush1.bf16.msra.mxu0 0
    %1902 = vmatprep.subr.bf16.mxu0 0
    %1903 = vmatpush1.bf16.msra.mxu0 0
    %1904 = vmatprep.subr.bf16.mxu0 0
    %1905 = vmatpush1.bf16.msra.mxu0 0
    %1906 = vmatprep.subr.bf16.mxu0 0
    %1907 = vmatpush1.bf16.msra.mxu0 0
    %1908 = vmatprep.subr.bf16.mxu0 0
    %1909 = vmatpush1.bf16.msra.mxu0 0
    %1910 = vmatprep.subr.bf16.mxu0 0
    %1911 = vmatpush1.bf16.msra.mxu0 0
    %1912 = vmatprep.mubr.bf16.mxu0 0
    %1913 = vmatmul.mubr.bf16.gmra.mrb[0].mxu0 %v1512
    %v1914 = vpop.f32.mrb[0].mxu0
    %v1915 = vadd.f32 %v344, %v1914
    %v1916 = vpop.f32.mrb[0].mxu0
    %v1917 = vpop.f32.mrb[0].mxu0
    %v1918 = vpop.f32.mrb[0].mxu0
    %1919 = vdwg.mxu0
    %v1920 = vmul.f32 %v1872, %v1915
    %v1921 = vadd.f32 %v1785, %v1920
    %v1922 = vtanh.pop %v1921
    %v1923 = vsub.f32 1.0, %v1879
    %v1924 = vmul.f32 %v1923, %v1922
    %v1925 = vmul.f32 %v1879, %v1508
    %v1926 = vadd.f32 %v1924, %v1925
    %v1927 = vpack.c.bf16 %v1777, %v1777
    %v1928 = vpack.c.bf16 %v1926, %v1926
    %v1930 = vsel %vm156, %v1928, 0
    %1932 = vmatprep.subr.bf16.mxu0 0
    %1933 = vmatpush1.bf16.msra.mxu0 %v590
    %1934 = vmatprep.subr.bf16.mxu0 0
    %1935 = vmatpush1.bf16.msra.mxu0 %v591
    %1936 = vmatprep.subr.bf16.mxu0 0
    %1937 = vmatpush1.bf16.msra.mxu0 0
    %1938 = vmatprep.subr.bf16.mxu0 0
    %1939 = vmatpush1.bf16.msra.mxu0 0
    %1940 = vmatprep.subr.bf16.mxu0 0
    %1941 = vmatpush1.bf16.msra.mxu0 0
    %1942 = vmatprep.subr.bf16.mxu0 0
    %1943 = vmatpush1.bf16.msra.mxu0 0
    %1944 = vmatprep.subr.bf16.mxu0 0
    %1945 = vmatpush1.bf16.msra.mxu0 0
    %1946 = vmatprep.subr.bf16.mxu0 0
    %1947 = vmatpush1.bf16.msra.mxu0 0
    %1948 = vmatprep.subr.bf16.mxu0 0
    %1949 = vmatpush1.bf16.msra.mxu0 0
    %1950 = vmatprep.subr.bf16.mxu0 0
    %1951 = vmatpush1.bf16.msra.mxu0 0
    %1952 = vmatprep.subr.bf16.mxu0 0
    %1953 = vmatpush1.bf16.msra.mxu0 0
    %1954 = vmatprep.subr.bf16.mxu0 0
    %1955 = vmatpush1.bf16.msra.mxu0 0
    %1956 = vmatprep.subr.bf16.mxu0 0
    %1957 = vmatpush1.bf16.msra.mxu0 0
    %1958 = vmatprep.subr.bf16.mxu0 0
    %1959 = vmatpush1.bf16.msra.mxu0 0
    %1960 = vmatprep.subr.bf16.mxu0 0
    %1961 = vmatpush1.bf16.msra.mxu0 0
    %1962 = vmatprep.subr.bf16.mxu0 0
    %1963 = vmatpush1.bf16.msra.mxu0 0
    %1964 = vmatprep.mubr.bf16.mxu0 0
    %1965 = vmatmul.mubr.bf16.gmra.mrb[0].mxu0 %v1930
    %v1966 = vpop.f32.mrb[0].mxu0
    %v1967 = vadd.f32 %v351, %v1966
    %v1968 = vpop.f32.mrb[0].mxu0
    %v1969 = vpop.f32.mrb[0].mxu0
    %v1970 = vpop.f32.mrb[0].mxu0
    %1971 = vdwg.mxu0
    %1972 = vmatprep.subr.bf16.mxu0 0
    %1973 = vmatpush1.bf16.msra.mxu0 %v650
    %1974 = vmatprep.subr.bf16.mxu0 0
    %1975 = vmatpush1.bf16.msra.mxu0 %v651
    %1976 = vmatprep.subr.bf16.mxu0 0
    %1977 = vmatpush1.bf16.msra.mxu0 0
    %1978 = vmatprep.subr.bf16.mxu0 0
    %1979 = vmatpush1.bf16.msra.mxu0 0
    %1980 = vmatprep.subr.bf16.mxu0 0
    %1981 = vmatpush1.bf16.msra.mxu0 0
    %1982 = vmatprep.subr.bf16.mxu0 0
    %1983 = vmatpush1.bf16.msra.mxu0 0
    %1984 = vmatprep.subr.bf16.mxu0 0
    %1985 = vmatpush1.bf16.msra.mxu0 0
    %1986 = vmatprep.subr.bf16.mxu0 0
    %1987 = vmatpush1.bf16.msra.mxu0 0
    %1988 = vmatprep.subr.bf16.mxu0 0
    %1989 = vmatpush1.bf16.msra.mxu0 0
    %1990 = vmatprep.subr.bf16.mxu0 0
    %1991 = vmatpush1.bf16.msra.mxu0 0
    %1992 = vmatprep.subr.bf16.mxu0 0
    %1993 = vmatpush1.bf16.msra.mxu0 0
    %1994 = vmatprep.subr.bf16.mxu0 0
    %1995 = vmatpush1.bf16.msra.mxu0 0
    %1996 = vmatprep.subr.bf16.mxu0 0
    %1997 = vmatpush1.bf16.msra.mxu0 0
    %1998 = vmatprep.subr.bf16.mxu0 0
    %1999 = vmatpush1.bf16.msra.mxu0 0
    %2000 = vmatprep.subr.bf16.mxu0 0
    %2001 = vmatpush1.bf16.msra.mxu0 0
    %2002 = vmatprep.subr.bf16.mxu0 0
    %2003 = vmatpush1.bf16.msra.mxu0 0
    %2004 = vmatprep.mubr.bf16.mxu0 0
    %2005 = vmatmul.mubr.bf16.gmra.mrb[0].mxu0 %v1930
    %v2006 = vpop.f32.mrb[0].mxu0
    %v2007 = vadd.f32 %v359, %v2006
    %v2008 = vpop.f32.mrb[0].mxu0
    %v2009 = vpop.f32.mrb[0].mxu0
    %v2010 = vpop.f32.mrb[0].mxu0
    %2011 = vdwg.mxu0
    %2012 = vmatprep.subr.bf16.mxu0 0
    %2013 = vmatpush1.bf16.msra.mxu0 %v707
    %2014 = vmatprep.subr.bf16.mxu0 0
    %2015 = vmatpush1.bf16.msra.mxu0 %v708
    %2016 = vmatprep.subr.bf16.mxu0 0
    %2017 = vmatpush1.bf16.msra.mxu0 0
    %2018 = vmatprep.subr.bf16.mxu0 0
    %2019 = vmatpush1.bf16.msra.mxu0 0
    %2020 = vmatprep.subr.bf16.mxu0 0
    %2021 = vmatpush1.bf16.msra.mxu0 0
    %2022 = vmatprep.subr.bf16.mxu0 0
    %2023 = vmatpush1.bf16.msra.mxu0 0
    %2024 = vmatprep.subr.bf16.mxu0 0
    %2025 = vmatpush1.bf16.msra.mxu0 0
    %2026 = vmatprep.subr.bf16.mxu0 0
    %2027 = vmatpush1.bf16.msra.mxu0 0
    %2028 = vmatprep.subr.bf16.mxu0 0
    %2029 = vmatpush1.bf16.msra.mxu0 0
    %2030 = vmatprep.subr.bf16.mxu0 0
    %2031 = vmatpush1.bf16.msra.mxu0 0
    %2032 = vmatprep.subr.bf16.mxu0 0
    %2033 = vmatpush1.bf16.msra.mxu0 0
    %2034 = vmatprep.subr.bf16.mxu0 0
    %2035 = vmatpush1.bf16.msra.mxu0 0
    %2036 = vmatprep.subr.bf16.mxu0 0
    %2037 = vmatpush1.bf16.msra.mxu0 0
    %2038 = vmatprep.subr.bf16.mxu0 0
    %2039 = vmatpush1.bf16.msra.mxu0 0
    %2040 = vmatprep.subr.bf16.mxu0 0
    %2041 = vmatpush1.bf16.msra.mxu0 0
    %2042 = vmatprep.subr.bf16.mxu0 0
    %2043 = vmatpush1.bf16.msra.mxu0 0
    %2044 = vmatprep.mubr.bf16.mxu0 0
    %2045 = vmatmul.mubr.bf16.gmra.mrb[0].mxu0 %v1930
    %v2046 = vpop.f32.mrb[0].mxu0
    %v2047 = vadd.f32 %v367, %v2046
    %v2048 = vpop.f32.mrb[0].mxu0
    %v2049 = vpop.f32.mrb[0].mxu0
    %v2050 = vpop.f32.mrb[0].mxu0
    %2051 = vdwg.mxu0
    %v2053 = vsel %vm156, %v1927, 0
    %2055 = vmatprep.subr.bf16.mxu0 0
    %2056 = vmatpush1.bf16.msra.mxu0 %v763
    %2057 = vmatprep.subr.bf16.mxu0 0
    %2058 = vmatpush1.bf16.msra.mxu0 %v764
    %2059 = vmatprep.subr.bf16.mxu0 0
    %2060 = vmatpush1.bf16.msra.mxu0 0
    %2061 = vmatprep.subr.bf16.mxu0 0
    %2062 = vmatpush1.bf16.msra.mxu0 0
    %2063 = vmatprep.subr.bf16.mxu0 0
    %2064 = vmatpush1.bf16.msra.mxu0 0
    %2065 = vmatprep.subr.bf16.mxu0 0
    %2066 = vmatpush1.bf16.msra.mxu0 0
    %2067 = vmatprep.subr.bf16.mxu0 0
    %2068 = vmatpush1.bf16.msra.mxu0 0
    %2069 = vmatprep.subr.bf16.mxu0 0
    %2070 = vmatpush1.bf16.msra.mxu0 0
    %2071 = vmatprep.subr.bf16.mxu0 0
    %2072 = vmatpush1.bf16.msra.mxu0 0
    %2073 = vmatprep.subr.bf16.mxu0 0
    %2074 = vmatpush1.bf16.msra.mxu0 0
    %2075 = vmatprep.subr.bf16.mxu0 0
    %2076 = vmatpush1.bf16.msra.mxu0 0
    %2077 = vmatprep.subr.bf16.mxu0 0
    %2078 = vmatpush1.bf16.msra.mxu0 0
    %2079 = vmatprep.subr.bf16.mxu0 0
    %2080 = vmatpush1.bf16.msra.mxu0 0
    %2081 = vmatprep.subr.bf16.mxu0 0
    %2082 = vmatpush1.bf16.msra.mxu0 0
    %2083 = vmatprep.subr.bf16.mxu0 0
    %2084 = vmatpush1.bf16.msra.mxu0 0
    %2085 = vmatprep.subr.bf16.mxu0 0
    %2086 = vmatpush1.bf16.msra.mxu0 0
    %2087 = vmatprep.mubr.bf16.mxu0 0
    %2088 = vmatmul.mubr.bf16.gmra.mrb[0].mxu0 %v2053
    %v2089 = vpop.f32.mrb[0].mxu0
    %v2090 = vadd.f32 0.0, %v2089
    %v2091 = vpop.f32.mrb[0].mxu0
    %v2092 = vpop.f32.mrb[0].mxu0
    %v2093 = vpop.f32.mrb[0].mxu0
    %2094 = vdwg.mxu0
    %2095 = vmatprep.subr.bf16.mxu0 0
    %2096 = vmatpush1.bf16.msra.mxu0 %v820
    %2097 = vmatprep.subr.bf16.mxu0 0
    %2098 = vmatpush1.bf16.msra.mxu0 %v821
    %2099 = vmatprep.subr.bf16.mxu0 0
    %2100 = vmatpush1.bf16.msra.mxu0 0
    %2101 = vmatprep.subr.bf16.mxu0 0
    %2102 = vmatpush1.bf16.msra.mxu0 0
    %2103 = vmatprep.subr.bf16.mxu0 0
    %2104 = vmatpush1.bf16.msra.mxu0 0
    %2105 = vmatprep.subr.bf16.mxu0 0
    %2106 = vmatpush1.bf16.msra.mxu0 0
    %2107 = vmatprep.subr.bf16.mxu0 0
    %2108 = vmatpush1.bf16.msra.mxu0 0
    %2109 = vmatprep.subr.bf16.mxu0 0
    %2110 = vmatpush1.bf16.msra.mxu0 0
    %2111 = vmatprep.subr.bf16.mxu0 0
    %2112 = vmatpush1.bf16.msra.mxu0 0
    %2113 = vmatprep.subr.bf16.mxu0 0
    %2114 = vmatpush1.bf16.msra.mxu0 0
    %2115 = vmatprep.subr.bf16.mxu0 0
    %2116 = vmatpush1.bf16.msra.mxu0 0
    %2117 = vmatprep.subr.bf16.mxu0 0
    %2118 = vmatpush1.bf16.msra.mxu0 0
    %2119 = vmatprep.subr.bf16.mxu0 0
    %2120 = vmatpush1.bf16.msra.mxu0 0
    %2121 = vmatprep.subr.bf16.mxu0 0
    %2122 = vmatpush1.bf16.msra.mxu0 0
    %2123 = vmatprep.subr.bf16.mxu0 0
    %2124 = vmatpush1.bf16.msra.mxu0 0
    %2125 = vmatprep.subr.bf16.mxu0 0
    %2126 = vmatpush1.bf16.msra.mxu0 0
    %2127 = vmatprep.mubr.bf16.mxu0 0
    %2128 = vmatmul.mubr.bf16.gmra.mrb[0].mxu0 %v2053
    %v2129 = vpop.f32.mrb[0].mxu0
    %v2130 = vadd.f32 0.0, %v2129
    %v2131 = vpop.f32.mrb[0].mxu0
    %v2132 = vpop.f32.mrb[0].mxu0
    %v2133 = vpop.f32.mrb[0].mxu0
    %2134 = vdwg.mxu0
    %v2135 = vadd.f32 %v1967, %v2090
    %v2136 = vxor.u32 %v2135, 2147483648
    %v2137 = vmul.f32 %v2136, 1.442695
    %v2138 = vpow.pop %v2137
    %v2139 = vadd.f32 %v2138, 1.0
    %v2140 = vrcp.pop %v2139
    %v2141 = vmul.f32 1.0, %v2140
    %v2142 = vadd.f32 %v2007, %v2130
    %v2143 = vxor.u32 %v2142, 2147483648
    %v2144 = vmul.f32 %v2143, 1.442695
    %v2145 = vpow.pop %v2144
    %v2146 = vadd.f32 %v2145, 1.0
    %v2147 = vrcp.pop %v2146
    %v2148 = vmul.f32 1.0, %v2147
    %2149 = vmatprep.subr.bf16.mxu0 0
    %2150 = vmatpush1.bf16.msra.mxu0 %v891
    %2151 = vmatprep.subr.bf16.mxu0 0
    %2152 = vmatpush1.bf16.msra.mxu0 %v892
    %2153 = vmatprep.subr.bf16.mxu0 0
    %2154 = vmatpush1.bf16.msra.mxu0 0
    %2155 = vmatprep.subr.bf16.mxu0 0
    %2156 = vmatpush1.bf16.msra.mxu0 0
    %2157 = vmatprep.subr.bf16.mxu0 0
    %2158 = vmatpush1.bf16.msra.mxu0 0
    %2159 = vmatprep.subr.bf16.mxu0 0
    %2160 = vmatpush1.bf16.msra.mxu0 0
    %2161 = vmatprep.subr.bf16.mxu0 0
    %2162 = vmatpush1.bf16.msra.mxu0 0
    %2163 = vmatprep.subr.bf16.mxu0 0
    %2164 = vmatpush1.bf16.msra.mxu0 0
    %2165 = vmatprep.subr.bf16.mxu0 0
    %2166 = vmatpush1.bf16.msra.mxu0 0
    %2167 = vmatprep.subr.bf16.mxu0 0
    %2168 = vmatpush1.bf16.msra.mxu0 0
    %2169 = vmatprep.subr.bf16.mxu0 0
    %2170 = vmatpush1.bf16.msra.mxu0 0
    %2171 = vmatprep.subr.bf16.mxu0 0
    %2172 = vmatpush1.bf16.msra.mxu0 0
    %2173 = vmatprep.subr.bf16.mxu0 0
    %2174 = vmatpush1.bf16.msra.mxu0 0
    %2175 = vmatprep.subr.bf16.mxu0 0
    %2176 = vmatpush1.bf16.msra.mxu0 0
    %2177 = vmatprep.subr.bf16.mxu0 0
    %2178 = vmatpush1.bf16.msra.mxu0 0
    %2179 = vmatprep.subr.bf16.mxu0 0
    %2180 = vmatpush1.bf16.msra.mxu0 0
    %2181 = vmatprep.mubr.bf16.mxu0 0
    %2182 = vmatmul.mubr.bf16.gmra.mrb[0].mxu0 %v2053
    %v2183 = vpop.f32.mrb[0].mxu0
    %v2184 = vadd.f32 %v374, %v2183
    %v2185 = vpop.f32.mrb[0].mxu0
    %v2186 = vpop.f32.mrb[0].mxu0
    %v2187 = vpop.f32.mrb[0].mxu0
    %2188 = vdwg.mxu0
    %v2189 = vmul.f32 %v2141, %v2184
    %v2190 = vadd.f32 %v2047, %v2189
    %v2191 = vtanh.pop %v2190
    %v2192 = vsub.f32 1.0, %v2148
    %v2193 = vmul.f32 %v2192, %v2191
    %v2194 = vmul.f32 %v2148, %v1777
    %v2195 = vadd.f32 %v2193, %v2194
    %s2196 = scalar_lea.vmem [#allocation2], 32
    %v2197 = vld [vmem:[%s2196] sm:$0xff]
    %s2198 = sadd.s32 32, 64
    %s2199 = scalar_lea.vmem [#allocation2], %s2198
    %v2200 = vld [vmem:[%s2199] sm:$0xff]
    %s2201 = sadd.s32 32, 128
    %s2202 = scalar_lea.vmem [#allocation2], %s2201
    %v2203 = vld [vmem:[%s2202] sm:$0xff]
    %2204 = vmatprep.subr.bf16.mxu0 0
    %2205 = vmatpush1.bf16.msra.mxu0 %v395
    %2206 = vmatprep.subr.bf16.mxu0 0
    %2207 = vmatpush1.bf16.msra.mxu0 %v396
    %2208 = vmatprep.subr.bf16.mxu0 0
    %2209 = vmatpush1.bf16.msra.mxu0 0
    %2210 = vmatprep.subr.bf16.mxu0 0
    %2211 = vmatpush1.bf16.msra.mxu0 0
    %2212 = vmatprep.subr.bf16.mxu0 0
    %2213 = vmatpush1.bf16.msra.mxu0 0
    %2214 = vmatprep.subr.bf16.mxu0 0
    %2215 = vmatpush1.bf16.msra.mxu0 0
    %2216 = vmatprep.subr.bf16.mxu0 0
    %2217 = vmatpush1.bf16.msra.mxu0 0
    %2218 = vmatprep.subr.bf16.mxu0 0
    %2219 = vmatpush1.bf16.msra.mxu0 0
    %2220 = vmatprep.subr.bf16.mxu0 0
    %2221 = vmatpush1.bf16.msra.mxu0 0
    %2222 = vmatprep.subr.bf16.mxu0 0
    %2223 = vmatpush1.bf16.msra.mxu0 0
    %2224 = vmatprep.subr.bf16.mxu0 0
    %2225 = vmatpush1.bf16.msra.mxu0 0
    %2226 = vmatprep.subr.bf16.mxu0 0
    %2227 = vmatpush1.bf16.msra.mxu0 0
    %2228 = vmatprep.subr.bf16.mxu0 0
    %2229 = vmatpush1.bf16.msra.mxu0 0
    %2230 = vmatprep.subr.bf16.mxu0 0
    %2231 = vmatpush1.bf16.msra.mxu0 0
    %2232 = vmatprep.subr.bf16.mxu0 0
    %2233 = vmatpush1.bf16.msra.mxu0 0
    %2234 = vmatprep.subr.bf16.mxu0 0
    %2235 = vmatpush1.bf16.msra.mxu0 0
    %2236 = vmatprep.mubr.bf16.mxu0 0
    %2237 = vmatmul.mubr.bf16.gmra.mrb[0].mxu0 %v1930
    %v2238 = vpop.f32.mrb[0].mxu0
    %v2239 = vadd.f32 0.0, %v2238
    %v2240 = vpop.f32.mrb[0].mxu0
    %v2241 = vpop.f32.mrb[0].mxu0
    %v2242 = vpop.f32.mrb[0].mxu0
    %2243 = vdwg.mxu0
    %2244 = vmatprep.subr.bf16.mxu0 0
    %2245 = vmatpush1.bf16.msra.mxu0 %v455
    %2246 = vmatprep.subr.bf16.mxu0 0
    %2247 = vmatpush1.bf16.msra.mxu0 %v456
    %2248 = vmatprep.subr.bf16.mxu0 0
    %2249 = vmatpush1.bf16.msra.mxu0 0
    %2250 = vmatprep.subr.bf16.mxu0 0
    %2251 = vmatpush1.bf16.msra.mxu0 0
    %2252 = vmatprep.subr.bf16.mxu0 0
    %2253 = vmatpush1.bf16.msra.mxu0 0
    %2254 = vmatprep.subr.bf16.mxu0 0
    %2255 = vmatpush1.bf16.msra.mxu0 0
    %2256 = vmatprep.subr.bf16.mxu0 0
    %2257 = vmatpush1.bf16.msra.mxu0 0
    %2258 = vmatprep.subr.bf16.mxu0 0
    %2259 = vmatpush1.bf16.msra.mxu0 0
    %2260 = vmatprep.subr.bf16.mxu0 0
    %2261 = vmatpush1.bf16.msra.mxu0 0
    %2262 = vmatprep.subr.bf16.mxu0 0
    %2263 = vmatpush1.bf16.msra.mxu0 0
    %2264 = vmatprep.subr.bf16.mxu0 0
    %2265 = vmatpush1.bf16.msra.mxu0 0
    %2266 = vmatprep.subr.bf16.mxu0 0
    %2267 = vmatpush1.bf16.msra.mxu0 0
    %2268 = vmatprep.subr.bf16.mxu0 0
    %2269 = vmatpush1.bf16.msra.mxu0 0
    %2270 = vmatprep.subr.bf16.mxu0 0
    %2271 = vmatpush1.bf16.msra.mxu0 0
    %2272 = vmatprep.subr.bf16.mxu0 0
    %2273 = vmatpush1.bf16.msra.mxu0 0
    %2274 = vmatprep.subr.bf16.mxu0 0
    %2275 = vmatpush1.bf16.msra.mxu0 0
    %2276 = vmatprep.mubr.bf16.mxu0 0
    %2277 = vmatmul.mubr.bf16.gmra.mrb[0].mxu0 %v1930
    %v2278 = vpop.f32.mrb[0].mxu0
    %v2279 = vadd.f32 0.0, %v2278
    %v2280 = vpop.f32.mrb[0].mxu0
    %v2281 = vpop.f32.mrb[0].mxu0
    %v2282 = vpop.f32.mrb[0].mxu0
    %2283 = vdwg.mxu0
    %v2284 = vadd.f32 %v2197, %v2239
    %v2285 = vxor.u32 %v2284, 2147483648
    %v2286 = vmul.f32 %v2285, 1.442695
    %v2287 = vpow.pop %v2286
    %v2288 = vadd.f32 %v2287, 1.0
    %v2289 = vrcp.pop %v2288
    %v2290 = vmul.f32 1.0, %v2289
    %v2291 = vadd.f32 %v2200, %v2279
    %v2292 = vxor.u32 %v2291, 2147483648
    %v2293 = vmul.f32 %v2292, 1.442695
    %v2294 = vpow.pop %v2293
    %v2295 = vadd.f32 %v2294, 1.0
    %v2296 = vrcp.pop %v2295
    %v2297 = vmul.f32 1.0, %v2296
    %2298 = vmatprep.subr.bf16.mxu0 0
    %2299 = vmatpush1.bf16.msra.mxu0 %v526
    %2300 = vmatprep.subr.bf16.mxu0 0
    %2301 = vmatpush1.bf16.msra.mxu0 %v527
    %2302 = vmatprep.subr.bf16.mxu0 0
    %2303 = vmatpush1.bf16.msra.mxu0 0
    %2304 = vmatprep.subr.bf16.mxu0 0
    %2305 = vmatpush1.bf16.msra.mxu0 0
    %2306 = vmatprep.subr.bf16.mxu0 0
    %2307 = vmatpush1.bf16.msra.mxu0 0
    %2308 = vmatprep.subr.bf16.mxu0 0
    %2309 = vmatpush1.bf16.msra.mxu0 0
    %2310 = vmatprep.subr.bf16.mxu0 0
    %2311 = vmatpush1.bf16.msra.mxu0 0
    %2312 = vmatprep.subr.bf16.mxu0 0
    %2313 = vmatpush1.bf16.msra.mxu0 0
    %2314 = vmatprep.subr.bf16.mxu0 0
    %2315 = vmatpush1.bf16.msra.mxu0 0
    %2316 = vmatprep.subr.bf16.mxu0 0
    %2317 = vmatpush1.bf16.msra.mxu0 0
    %2318 = vmatprep.subr.bf16.mxu0 0
    %2319 = vmatpush1.bf16.msra.mxu0 0
    %2320 = vmatprep.subr.bf16.mxu0 0
    %2321 = vmatpush1.bf16.msra.mxu0 0
    %2322 = vmatprep.subr.bf16.mxu0 0
    %2323 = vmatpush1.bf16.msra.mxu0 0
    %2324 = vmatprep.subr.bf16.mxu0 0
    %2325 = vmatpush1.bf16.msra.mxu0 0
    %2326 = vmatprep.subr.bf16.mxu0 0
    %2327 = vmatpush1.bf16.msra.mxu0 0
    %2328 = vmatprep.subr.bf16.mxu0 0
    %2329 = vmatpush1.bf16.msra.mxu0 0
    %2330 = vmatprep.mubr.bf16.mxu0 0
    %2331 = vmatmul.mubr.bf16.gmra.mrb[0].mxu0 %v1930
    %v2332 = vpop.f32.mrb[0].mxu0
    %v2333 = vadd.f32 %v344, %v2332
    %v2334 = vpop.f32.mrb[0].mxu0
    %v2335 = vpop.f32.mrb[0].mxu0
    %v2336 = vpop.f32.mrb[0].mxu0
    %2337 = vdwg.mxu0
    %v2338 = vmul.f32 %v2290, %v2333
    %v2339 = vadd.f32 %v2203, %v2338
    %v2340 = vtanh.pop %v2339
    %v2341 = vsub.f32 1.0, %v2297
    %v2342 = vmul.f32 %v2341, %v2340
    %v2343 = vmul.f32 %v2297, %v1926
    %v2344 = vadd.f32 %v2342, %v2343
    %v2345 = vpack.c.bf16 %v2195, %v2195
    %v2346 = vpack.c.bf16 %v2344, %v2344
    %v2348 = vsel %vm156, %v2346, 0
    %2350 = vmatprep.subr.bf16.mxu0 0
    %2351 = vmatpush1.bf16.msra.mxu0 %v590
    %2352 = vmatprep.subr.bf16.mxu0 0
    %2353 = vmatpush1.bf16.msra.mxu0 %v591
    %2354 = vmatprep.subr.bf16.mxu0 0
    %2355 = vmatpush1.bf16.msra.mxu0 0
    %2356 = vmatprep.subr.bf16.mxu0 0
    %2357 = vmatpush1.bf16.msra.mxu0 0
    %2358 = vmatprep.subr.bf16.mxu0 0
    %2359 = vmatpush1.bf16.msra.mxu0 0
    %2360 = vmatprep.subr.bf16.mxu0 0
    %2361 = vmatpush1.bf16.msra.mxu0 0
    %2362 = vmatprep.subr.bf16.mxu0 0
    %2363 = vmatpush1.bf16.msra.mxu0 0
    %2364 = vmatprep.subr.bf16.mxu0 0
    %2365 = vmatpush1.bf16.msra.mxu0 0
    %2366 = vmatprep.subr.bf16.mxu0 0
    %2367 = vmatpush1.bf16.msra.mxu0 0
    %2368 = vmatprep.subr.bf16.mxu0 0
    %2369 = vmatpush1.bf16.msra.mxu0 0
    %2370 = vmatprep.subr.bf16.mxu0 0
    %2371 = vmatpush1.bf16.msra.mxu0 0
    %2372 = vmatprep.subr.bf16.mxu0 0
    %2373 = vmatpush1.bf16.msra.mxu0 0
    %2374 = vmatprep.subr.bf16.mxu0 0
    %2375 = vmatpush1.bf16.msra.mxu0 0
    %2376 = vmatprep.subr.bf16.mxu0 0
    %2377 = vmatpush1.bf16.msra.mxu0 0
    %2378 = vmatprep.subr.bf16.mxu0 0
    %2379 = vmatpush1.bf16.msra.mxu0 0
    %2380 = vmatprep.subr.bf16.mxu0 0
    %2381 = vmatpush1.bf16.msra.mxu0 0
    %2382 = vmatprep.mubr.bf16.mxu0 0
    %2383 = vmatmul.mubr.bf16.gmra.mrb[0].mxu0 %v2348
    %v2384 = vpop.f32.mrb[0].mxu0
    %v2385 = vadd.f32 %v351, %v2384
    %v2386 = vpop.f32.mrb[0].mxu0
    %v2387 = vpop.f32.mrb[0].mxu0
    %v2388 = vpop.f32.mrb[0].mxu0
    %2389 = vdwg.mxu0
    %2390 = vmatprep.subr.bf16.mxu0 0
    %2391 = vmatpush1.bf16.msra.mxu0 %v650
    %2392 = vmatprep.subr.bf16.mxu0 0
    %2393 = vmatpush1.bf16.msra.mxu0 %v651
    %2394 = vmatprep.subr.bf16.mxu0 0
    %2395 = vmatpush1.bf16.msra.mxu0 0
    %2396 = vmatprep.subr.bf16.mxu0 0
    %2397 = vmatpush1.bf16.msra.mxu0 0
    %2398 = vmatprep.subr.bf16.mxu0 0
    %2399 = vmatpush1.bf16.msra.mxu0 0
    %2400 = vmatprep.subr.bf16.mxu0 0
    %2401 = vmatpush1.bf16.msra.mxu0 0
    %2402 = vmatprep.subr.bf16.mxu0 0
    %2403 = vmatpush1.bf16.msra.mxu0 0
    %2404 = vmatprep.subr.bf16.mxu0 0
    %2405 = vmatpush1.bf16.msra.mxu0 0
    %2406 = vmatprep.subr.bf16.mxu0 0
    %2407 = vmatpush1.bf16.msra.mxu0 0
    %2408 = vmatprep.subr.bf16.mxu0 0
    %2409 = vmatpush1.bf16.msra.mxu0 0
    %2410 = vmatprep.subr.bf16.mxu0 0
    %2411 = vmatpush1.bf16.msra.mxu0 0
    %2412 = vmatprep.subr.bf16.mxu0 0
    %2413 = vmatpush1.bf16.msra.mxu0 0
    %2414 = vmatprep.subr.bf16.mxu0 0
    %2415 = vmatpush1.bf16.msra.mxu0 0
    %2416 = vmatprep.subr.bf16.mxu0 0
    %2417 = vmatpush1.bf16.msra.mxu0 0
    %2418 = vmatprep.subr.bf16.mxu0 0
    %2419 = vmatpush1.bf16.msra.mxu0 0
    %2420 = vmatprep.subr.bf16.mxu0 0
    %2421 = vmatpush1.bf16.msra.mxu0 0
    %2422 = vmatprep.mubr.bf16.mxu0 0
    %2423 = vmatmul.mubr.bf16.gmra.mrb[0].mxu0 %v2348
    %v2424 = vpop.f32.mrb[0].mxu0
    %v2425 = vadd.f32 %v359, %v2424
    %v2426 = vpop.f32.mrb[0].mxu0
    %v2427 = vpop.f32.mrb[0].mxu0
    %v2428 = vpop.f32.mrb[0].mxu0
    %2429 = vdwg.mxu0
    %2430 = vmatprep.subr.bf16.mxu0 0
    %2431 = vmatpush1.bf16.msra.mxu0 %v707
    %2432 = vmatprep.subr.bf16.mxu0 0
    %2433 = vmatpush1.bf16.msra.mxu0 %v708
    %2434 = vmatprep.subr.bf16.mxu0 0
    %2435 = vmatpush1.bf16.msra.mxu0 0
    %2436 = vmatprep.subr.bf16.mxu0 0
    %2437 = vmatpush1.bf16.msra.mxu0 0
    %2438 = vmatprep.subr.bf16.mxu0 0
    %2439 = vmatpush1.bf16.msra.mxu0 0
    %2440 = vmatprep.subr.bf16.mxu0 0
    %2441 = vmatpush1.bf16.msra.mxu0 0
    %2442 = vmatprep.subr.bf16.mxu0 0
    %2443 = vmatpush1.bf16.msra.mxu0 0
    %2444 = vmatprep.subr.bf16.mxu0 0
    %2445 = vmatpush1.bf16.msra.mxu0 0
    %2446 = vmatprep.subr.bf16.mxu0 0
    %2447 = vmatpush1.bf16.msra.mxu0 0
    %2448 = vmatprep.subr.bf16.mxu0 0
    %2449 = vmatpush1.bf16.msra.mxu0 0
    %2450 = vmatprep.subr.bf16.mxu0 0
    %2451 = vmatpush1.bf16.msra.mxu0 0
    %2452 = vmatprep.subr.bf16.mxu0 0
    %2453 = vmatpush1.bf16.msra.mxu0 0
    %2454 = vmatprep.subr.bf16.mxu0 0
    %2455 = vmatpush1.bf16.msra.mxu0 0
    %2456 = vmatprep.subr.bf16.mxu0 0
    %2457 = vmatpush1.bf16.msra.mxu0 0
    %2458 = vmatprep.subr.bf16.mxu0 0
    %2459 = vmatpush1.bf16.msra.mxu0 0
    %2460 = vmatprep.subr.bf16.mxu0 0
    %2461 = vmatpush1.bf16.msra.mxu0 0
    %2462 = vmatprep.mubr.bf16.mxu0 0
    %2463 = vmatmul.mubr.bf16.gmra.mrb[0].mxu0 %v2348
    %v2464 = vpop.f32.mrb[0].mxu0
    %v2465 = vadd.f32 %v367, %v2464
    %v2466 = vpop.f32.mrb[0].mxu0
    %v2467 = vpop.f32.mrb[0].mxu0
    %v2468 = vpop.f32.mrb[0].mxu0
    %2469 = vdwg.mxu0
    %v2471 = vsel %vm156, %v2345, 0
    %2473 = vmatprep.subr.bf16.mxu0 0
    %2474 = vmatpush1.bf16.msra.mxu0 %v763
    %2475 = vmatprep.subr.bf16.mxu0 0
    %2476 = vmatpush1.bf16.msra.mxu0 %v764
    %2477 = vmatprep.subr.bf16.mxu0 0
    %2478 = vmatpush1.bf16.msra.mxu0 0
    %2479 = vmatprep.subr.bf16.mxu0 0
    %2480 = vmatpush1.bf16.msra.mxu0 0
    %2481 = vmatprep.subr.bf16.mxu0 0
    %2482 = vmatpush1.bf16.msra.mxu0 0
    %2483 = vmatprep.subr.bf16.mxu0 0
    %2484 = vmatpush1.bf16.msra.mxu0 0
    %2485 = vmatprep.subr.bf16.mxu0 0
    %2486 = vmatpush1.bf16.msra.mxu0 0
    %2487 = vmatprep.subr.bf16.mxu0 0
    %2488 = vmatpush1.bf16.msra.mxu0 0
    %2489 = vmatprep.subr.bf16.mxu0 0
    %2490 = vmatpush1.bf16.msra.mxu0 0
    %2491 = vmatprep.subr.bf16.mxu0 0
    %2492 = vmatpush1.bf16.msra.mxu0 0
    %2493 = vmatprep.subr.bf16.mxu0 0
    %2494 = vmatpush1.bf16.msra.mxu0 0
    %2495 = vmatprep.subr.bf16.mxu0 0
    %2496 = vmatpush1.bf16.msra.mxu0 0
    %2497 = vmatprep.subr.bf16.mxu0 0
    %2498 = vmatpush1.bf16.msra.mxu0 0
    %2499 = vmatprep.subr.bf16.mxu0 0
    %2500 = vmatpush1.bf16.msra.mxu0 0
    %2501 = vmatprep.subr.bf16.mxu0 0
    %2502 = vmatpush1.bf16.msra.mxu0 0
    %2503 = vmatprep.subr.bf16.mxu0 0
    %2504 = vmatpush1.bf16.msra.mxu0 0
    %2505 = vmatprep.mubr.bf16.mxu0 0
    %2506 = vmatmul.mubr.bf16.gmra.mrb[0].mxu0 %v2471
    %v2507 = vpop.f32.mrb[0].mxu0
    %v2508 = vadd.f32 0.0, %v2507
    %v2509 = vpop.f32.mrb[0].mxu0
    %v2510 = vpop.f32.mrb[0].mxu0
    %v2511 = vpop.f32.mrb[0].mxu0
    %2512 = vdwg.mxu0
    %2513 = vmatprep.subr.bf16.mxu0 0
    %2514 = vmatpush1.bf16.msra.mxu0 %v820
    %2515 = vmatprep.subr.bf16.mxu0 0
    %2516 = vmatpush1.bf16.msra.mxu0 %v821
    %2517 = vmatprep.subr.bf16.mxu0 0
    %2518 = vmatpush1.bf16.msra.mxu0 0
    %2519 = vmatprep.subr.bf16.mxu0 0
    %2520 = vmatpush1.bf16.msra.mxu0 0
    %2521 = vmatprep.subr.bf16.mxu0 0
    %2522 = vmatpush1.bf16.msra.mxu0 0
    %2523 = vmatprep.subr.bf16.mxu0 0
    %2524 = vmatpush1.bf16.msra.mxu0 0
    %2525 = vmatprep.subr.bf16.mxu0 0
    %2526 = vmatpush1.bf16.msra.mxu0 0
    %2527 = vmatprep.subr.bf16.mxu0 0
    %2528 = vmatpush1.bf16.msra.mxu0 0
    %2529 = vmatprep.subr.bf16.mxu0 0
    %2530 = vmatpush1.bf16.msra.mxu0 0
    %2531 = vmatprep.subr.bf16.mxu0 0
    %2532 = vmatpush1.bf16.msra.mxu0 0
    %2533 = vmatprep.subr.bf16.mxu0 0
    %2534 = vmatpush1.bf16.msra.mxu0 0
    %2535 = vmatprep.subr.bf16.mxu0 0
    %2536 = vmatpush1.bf16.msra.mxu0 0
    %2537 = vmatprep.subr.bf16.mxu0 0
    %2538 = vmatpush1.bf16.msra.mxu0 0
    %2539 = vmatprep.subr.bf16.mxu0 0
    %2540 = vmatpush1.bf16.msra.mxu0 0
    %2541 = vmatprep.subr.bf16.mxu0 0
    %2542 = vmatpush1.bf16.msra.mxu0 0
    %2543 = vmatprep.subr.bf16.mxu0 0
    %2544 = vmatpush1.bf16.msra.mxu0 0
    %2545 = vmatprep.mubr.bf16.mxu0 0
    %2546 = vmatmul.mubr.bf16.gmra.mrb[0].mxu0 %v2471
    %v2547 = vpop.f32.mrb[0].mxu0
    %v2548 = vadd.f32 0.0, %v2547
    %v2549 = vpop.f32.mrb[0].mxu0
    %v2550 = vpop.f32.mrb[0].mxu0
    %v2551 = vpop.f32.mrb[0].mxu0
    %2552 = vdwg.mxu0
    %v2553 = vadd.f32 %v2385, %v2508
    %v2554 = vxor.u32 %v2553, 2147483648
    %v2555 = vmul.f32 %v2554, 1.442695
    %v2556 = vpow.pop %v2555
    %v2557 = vadd.f32 %v2556, 1.0
    %v2558 = vrcp.pop %v2557
    %v2559 = vmul.f32 1.0, %v2558
    %v2560 = vadd.f32 %v2425, %v2548
    %v2561 = vxor.u32 %v2560, 2147483648
    %v2562 = vmul.f32 %v2561, 1.442695
    %v2563 = vpow.pop %v2562
    %v2564 = vadd.f32 %v2563, 1.0
    %v2565 = vrcp.pop %v2564
    %v2566 = vmul.f32 1.0, %v2565
    %2567 = vmatprep.subr.bf16.mxu0 0
    %2568 = vmatpush1.bf16.msra.mxu0 %v891
    %2569 = vmatprep.subr.bf16.mxu0 0
    %2570 = vmatpush1.bf16.msra.mxu0 %v892
    %2571 = vmatprep.subr.bf16.mxu0 0
    %2572 = vmatpush1.bf16.msra.mxu0 0
    %2573 = vmatprep.subr.bf16.mxu0 0
    %2574 = vmatpush1.bf16.msra.mxu0 0
    %2575 = vmatprep.subr.bf16.mxu0 0
    %2576 = vmatpush1.bf16.msra.mxu0 0
    %2577 = vmatprep.subr.bf16.mxu0 0
    %2578 = vmatpush1.bf16.msra.mxu0 0
    %2579 = vmatprep.subr.bf16.mxu0 0
    %2580 = vmatpush1.bf16.msra.mxu0 0
    %2581 = vmatprep.subr.bf16.mxu0 0
    %2582 = vmatpush1.bf16.msra.mxu0 0
    %2583 = vmatprep.subr.bf16.mxu0 0
    %2584 = vmatpush1.bf16.msra.mxu0 0
    %2585 = vmatprep.subr.bf16.mxu0 0
    %2586 = vmatpush1.bf16.msra.mxu0 0
    %2587 = vmatprep.subr.bf16.mxu0 0
    %2588 = vmatpush1.bf16.msra.mxu0 0
    %2589 = vmatprep.subr.bf16.mxu0 0
    %2590 = vmatpush1.bf16.msra.mxu0 0
    %2591 = vmatprep.subr.bf16.mxu0 0
    %2592 = vmatpush1.bf16.msra.mxu0 0
    %2593 = vmatprep.subr.bf16.mxu0 0
    %2594 = vmatpush1.bf16.msra.mxu0 0
    %2595 = vmatprep.subr.bf16.mxu0 0
    %2596 = vmatpush1.bf16.msra.mxu0 0
    %2597 = vmatprep.subr.bf16.mxu0 0
    %2598 = vmatpush1.bf16.msra.mxu0 0
    %2599 = vmatprep.mubr.bf16.mxu0 0
    %2600 = vmatmul.mubr.bf16.gmra.mrb[0].mxu0 %v2471
    %v2601 = vpop.f32.mrb[0].mxu0
    %v2602 = vadd.f32 %v374, %v2601
    %v2603 = vpop.f32.mrb[0].mxu0
    %v2604 = vpop.f32.mrb[0].mxu0
    %v2605 = vpop.f32.mrb[0].mxu0
    %2606 = vdwg.mxu0
    %v2607 = vmul.f32 %v2559, %v2602
    %v2608 = vadd.f32 %v2465, %v2607
    %v2609 = vtanh.pop %v2608
    %v2610 = vsub.f32 1.0, %v2566
    %v2611 = vmul.f32 %v2610, %v2609
    %v2612 = vmul.f32 %v2566, %v2195
    %v2613 = vadd.f32 %v2611, %v2612
    %s2614 = scalar_lea.vmem [#allocation2], 40
    %v2615 = vld [vmem:[%s2614] sm:$0xff]
    %s2616 = sadd.s32 40, 64
    %s2617 = scalar_lea.vmem [#allocation2], %s2616
    %v2618 = vld [vmem:[%s2617] sm:$0xff]
    %s2619 = sadd.s32 40, 128
    %s2620 = scalar_lea.vmem [#allocation2], %s2619
    %v2621 = vld [vmem:[%s2620] sm:$0xff]
    %2622 = vmatprep.subr.bf16.mxu0 0
    %2623 = vmatpush1.bf16.msra.mxu0 %v395
    %2624 = vmatprep.subr.bf16.mxu0 0
    %2625 = vmatpush1.bf16.msra.mxu0 %v396
    %2626 = vmatprep.subr.bf16.mxu0 0
    %2627 = vmatpush1.bf16.msra.mxu0 0
    %2628 = vmatprep.subr.bf16.mxu0 0
    %2629 = vmatpush1.bf16.msra.mxu0 0
    %2630 = vmatprep.subr.bf16.mxu0 0
    %2631 = vmatpush1.bf16.msra.mxu0 0
    %2632 = vmatprep.subr.bf16.mxu0 0
    %2633 = vmatpush1.bf16.msra.mxu0 0
    %2634 = vmatprep.subr.bf16.mxu0 0
    %2635 = vmatpush1.bf16.msra.mxu0 0
    %2636 = vmatprep.subr.bf16.mxu0 0
    %2637 = vmatpush1.bf16.msra.mxu0 0
    %2638 = vmatprep.subr.bf16.mxu0 0
    %2639 = vmatpush1.bf16.msra.mxu0 0
    %2640 = vmatprep.subr.bf16.mxu0 0
    %2641 = vmatpush1.bf16.msra.mxu0 0
    %2642 = vmatprep.subr.bf16.mxu0 0
    %2643 = vmatpush1.bf16.msra.mxu0 0
    %2644 = vmatprep.subr.bf16.mxu0 0
    %2645 = vmatpush1.bf16.msra.mxu0 0
    %2646 = vmatprep.subr.bf16.mxu0 0
    %2647 = vmatpush1.bf16.msra.mxu0 0
    %2648 = vmatprep.subr.bf16.mxu0 0
    %2649 = vmatpush1.bf16.msra.mxu0 0
    %2650 = vmatprep.subr.bf16.mxu0 0
    %2651 = vmatpush1.bf16.msra.mxu0 0
    %2652 = vmatprep.subr.bf16.mxu0 0
    %2653 = vmatpush1.bf16.msra.mxu0 0
    %2654 = vmatprep.mubr.bf16.mxu0 0
    %2655 = vmatmul.mubr.bf16.gmra.mrb[0].mxu0 %v2348
    %v2656 = vpop.f32.mrb[0].mxu0
    %v2657 = vadd.f32 0.0, %v2656
    %v2658 = vpop.f32.mrb[0].mxu0
    %v2659 = vpop.f32.mrb[0].mxu0
    %v2660 = vpop.f32.mrb[0].mxu0
    %2661 = vdwg.mxu0
    %2662 = vmatprep.subr.bf16.mxu0 0
    %2663 = vmatpush1.bf16.msra.mxu0 %v455
    %2664 = vmatprep.subr.bf16.mxu0 0
    %2665 = vmatpush1.bf16.msra.mxu0 %v456
    %2666 = vmatprep.subr.bf16.mxu0 0
    %2667 = vmatpush1.bf16.msra.mxu0 0
    %2668 = vmatprep.subr.bf16.mxu0 0
    %2669 = vmatpush1.bf16.msra.mxu0 0
    %2670 = vmatprep.subr.bf16.mxu0 0
    %2671 = vmatpush1.bf16.msra.mxu0 0
    %2672 = vmatprep.subr.bf16.mxu0 0
    %2673 = vmatpush1.bf16.msra.mxu0 0
    %2674 = vmatprep.subr.bf16.mxu0 0
    %2675 = vmatpush1.bf16.msra.mxu0 0
    %2676 = vmatprep.subr.bf16.mxu0 0
    %2677 = vmatpush1.bf16.msra.mxu0 0
    %2678 = vmatprep.subr.bf16.mxu0 0
    %2679 = vmatpush1.bf16.msra.mxu0 0
    %2680 = vmatprep.subr.bf16.mxu0 0
    %2681 = vmatpush1.bf16.msra.mxu0 0
    %2682 = vmatprep.subr.bf16.mxu0 0
    %2683 = vmatpush1.bf16.msra.mxu0 0
    %2684 = vmatprep.subr.bf16.mxu0 0
    %2685 = vmatpush1.bf16.msra.mxu0 0
    %2686 = vmatprep.subr.bf16.mxu0 0
    %2687 = vmatpush1.bf16.msra.mxu0 0
    %2688 = vmatprep.subr.bf16.mxu0 0
    %2689 = vmatpush1.bf16.msra.mxu0 0
    %2690 = vmatprep.subr.bf16.mxu0 0
    %2691 = vmatpush1.bf16.msra.mxu0 0
    %2692 = vmatprep.subr.bf16.mxu0 0
    %2693 = vmatpush1.bf16.msra.mxu0 0
    %2694 = vmatprep.mubr.bf16.mxu0 0
    %2695 = vmatmul.mubr.bf16.gmra.mrb[0].mxu0 %v2348
    %v2696 = vpop.f32.mrb[0].mxu0
    %v2697 = vadd.f32 0.0, %v2696
    %v2698 = vpop.f32.mrb[0].mxu0
    %v2699 = vpop.f32.mrb[0].mxu0
    %v2700 = vpop.f32.mrb[0].mxu0
    %2701 = vdwg.mxu0
    %v2702 = vadd.f32 %v2615, %v2657
    %v2703 = vxor.u32 %v2702, 2147483648
    %v2704 = vmul.f32 %v2703, 1.442695
    %v2705 = vpow.pop %v2704
    %v2706 = vadd.f32 %v2705, 1.0
    %v2707 = vrcp.pop %v2706
    %v2708 = vmul.f32 1.0, %v2707
    %v2709 = vadd.f32 %v2618, %v2697
    %v2710 = vxor.u32 %v2709, 2147483648
    %v2711 = vmul.f32 %v2710, 1.442695
    %v2712 = vpow.pop %v2711
    %v2713 = vadd.f32 %v2712, 1.0
    %v2714 = vrcp.pop %v2713
    %v2715 = vmul.f32 1.0, %v2714
    %2716 = vmatprep.subr.bf16.mxu0 0
    %2717 = vmatpush1.bf16.msra.mxu0 %v526
    %2718 = vmatprep.subr.bf16.mxu0 0
    %2719 = vmatpush1.bf16.msra.mxu0 %v527
    %2720 = vmatprep.subr.bf16.mxu0 0
    %2721 = vmatpush1.bf16.msra.mxu0 0
    %2722 = vmatprep.subr.bf16.mxu0 0
    %2723 = vmatpush1.bf16.msra.mxu0 0
    %2724 = vmatprep.subr.bf16.mxu0 0
    %2725 = vmatpush1.bf16.msra.mxu0 0
    %2726 = vmatprep.subr.bf16.mxu0 0
    %2727 = vmatpush1.bf16.msra.mxu0 0
    %2728 = vmatprep.subr.bf16.mxu0 0
    %2729 = vmatpush1.bf16.msra.mxu0 0
    %2730 = vmatprep.subr.bf16.mxu0 0
    %2731 = vmatpush1.bf16.msra.mxu0 0
    %2732 = vmatprep.subr.bf16.mxu0 0
    %2733 = vmatpush1.bf16.msra.mxu0 0
    %2734 = vmatprep.subr.bf16.mxu0 0
    %2735 = vmatpush1.bf16.msra.mxu0 0
    %2736 = vmatprep.subr.bf16.mxu0 0
    %2737 = vmatpush1.bf16.msra.mxu0 0
    %2738 = vmatprep.subr.bf16.mxu0 0
    %2739 = vmatpush1.bf16.msra.mxu0 0
    %2740 = vmatprep.subr.bf16.mxu0 0
    %2741 = vmatpush1.bf16.msra.mxu0 0
    %2742 = vmatprep.subr.bf16.mxu0 0
    %2743 = vmatpush1.bf16.msra.mxu0 0
    %2744 = vmatprep.subr.bf16.mxu0 0
    %2745 = vmatpush1.bf16.msra.mxu0 0
    %2746 = vmatprep.subr.bf16.mxu0 0
    %2747 = vmatpush1.bf16.msra.mxu0 0
    %2748 = vmatprep.mubr.bf16.mxu0 0
    %2749 = vmatmul.mubr.bf16.gmra.mrb[0].mxu0 %v2348
    %v2750 = vpop.f32.mrb[0].mxu0
    %v2751 = vadd.f32 %v344, %v2750
    %v2752 = vpop.f32.mrb[0].mxu0
    %v2753 = vpop.f32.mrb[0].mxu0
    %v2754 = vpop.f32.mrb[0].mxu0
    %2755 = vdwg.mxu0
    %v2756 = vmul.f32 %v2708, %v2751
    %v2757 = vadd.f32 %v2621, %v2756
    %v2758 = vtanh.pop %v2757
    %v2759 = vsub.f32 1.0, %v2715
    %v2760 = vmul.f32 %v2759, %v2758
    %v2761 = vmul.f32 %v2715, %v2344
    %v2762 = vadd.f32 %v2760, %v2761
    %v2763 = vpack.c.bf16 %v2613, %v2613
    %v2764 = vpack.c.bf16 %v2762, %v2762
    %v2766 = vsel %vm156, %v2764, 0
    %2768 = vmatprep.subr.bf16.mxu0 0
    %2769 = vmatpush1.bf16.msra.mxu0 %v590
    %2770 = vmatprep.subr.bf16.mxu0 0
    %2771 = vmatpush1.bf16.msra.mxu0 %v591
    %2772 = vmatprep.subr.bf16.mxu0 0
    %2773 = vmatpush1.bf16.msra.mxu0 0
    %2774 = vmatprep.subr.bf16.mxu0 0
    %2775 = vmatpush1.bf16.msra.mxu0 0
    %2776 = vmatprep.subr.bf16.mxu0 0
    %2777 = vmatpush1.bf16.msra.mxu0 0
    %2778 = vmatprep.subr.bf16.mxu0 0
    %2779 = vmatpush1.bf16.msra.mxu0 0
    %2780 = vmatprep.subr.bf16.mxu0 0
    %2781 = vmatpush1.bf16.msra.mxu0 0
    %2782 = vmatprep.subr.bf16.mxu0 0
    %2783 = vmatpush1.bf16.msra.mxu0 0
    %2784 = vmatprep.subr.bf16.mxu0 0
    %2785 = vmatpush1.bf16.msra.mxu0 0
    %2786 = vmatprep.subr.bf16.mxu0 0
    %2787 = vmatpush1.bf16.msra.mxu0 0
    %2788 = vmatprep.subr.bf16.mxu0 0
    %2789 = vmatpush1.bf16.msra.mxu0 0
    %2790 = vmatprep.subr.bf16.mxu0 0
    %2791 = vmatpush1.bf16.msra.mxu0 0
    %2792 = vmatprep.subr.bf16.mxu0 0
    %2793 = vmatpush1.bf16.msra.mxu0 0
    %2794 = vmatprep.subr.bf16.mxu0 0
    %2795 = vmatpush1.bf16.msra.mxu0 0
    %2796 = vmatprep.subr.bf16.mxu0 0
    %2797 = vmatpush1.bf16.msra.mxu0 0
    %2798 = vmatprep.subr.bf16.mxu0 0
    %2799 = vmatpush1.bf16.msra.mxu0 0
    %2800 = vmatprep.mubr.bf16.mxu0 0
    %2801 = vmatmul.mubr.bf16.gmra.mrb[0].mxu0 %v2766
    %v2802 = vpop.f32.mrb[0].mxu0
    %v2803 = vadd.f32 %v351, %v2802
    %v2804 = vpop.f32.mrb[0].mxu0
    %v2805 = vpop.f32.mrb[0].mxu0
    %v2806 = vpop.f32.mrb[0].mxu0
    %2807 = vdwg.mxu0
    %2808 = vmatprep.subr.bf16.mxu0 0
    %2809 = vmatpush1.bf16.msra.mxu0 %v650
    %2810 = vmatprep.subr.bf16.mxu0 0
    %2811 = vmatpush1.bf16.msra.mxu0 %v651
    %2812 = vmatprep.subr.bf16.mxu0 0
    %2813 = vmatpush1.bf16.msra.mxu0 0
    %2814 = vmatprep.subr.bf16.mxu0 0
    %2815 = vmatpush1.bf16.msra.mxu0 0
    %2816 = vmatprep.subr.bf16.mxu0 0
    %2817 = vmatpush1.bf16.msra.mxu0 0
    %2818 = vmatprep.subr.bf16.mxu0 0
    %2819 = vmatpush1.bf16.msra.mxu0 0
    %2820 = vmatprep.subr.bf16.mxu0 0
    %2821 = vmatpush1.bf16.msra.mxu0 0
    %2822 = vmatprep.subr.bf16.mxu0 0
    %2823 = vmatpush1.bf16.msra.mxu0 0
    %2824 = vmatprep.subr.bf16.mxu0 0
    %2825 = vmatpush1.bf16.msra.mxu0 0
    %2826 = vmatprep.subr.bf16.mxu0 0
    %2827 = vmatpush1.bf16.msra.mxu0 0
    %2828 = vmatprep.subr.bf16.mxu0 0
    %2829 = vmatpush1.bf16.msra.mxu0 0
    %2830 = vmatprep.subr.bf16.mxu0 0
    %2831 = vmatpush1.bf16.msra.mxu0 0
    %2832 = vmatprep.subr.bf16.mxu0 0
    %2833 = vmatpush1.bf16.msra.mxu0 0
    %2834 = vmatprep.subr.bf16.mxu0 0
    %2835 = vmatpush1.bf16.msra.mxu0 0
    %2836 = vmatprep.subr.bf16.mxu0 0
    %2837 = vmatpush1.bf16.msra.mxu0 0
    %2838 = vmatprep.subr.bf16.mxu0 0
    %2839 = vmatpush1.bf16.msra.mxu0 0
    %2840 = vmatprep.mubr.bf16.mxu0 0
    %2841 = vmatmul.mubr.bf16.gmra.mrb[0].mxu0 %v2766
    %v2842 = vpop.f32.mrb[0].mxu0
    %v2843 = vadd.f32 %v359, %v2842
    %v2844 = vpop.f32.mrb[0].mxu0
    %v2845 = vpop.f32.mrb[0].mxu0
    %v2846 = vpop.f32.mrb[0].mxu0
    %2847 = vdwg.mxu0
    %2848 = vmatprep.subr.bf16.mxu0 0
    %2849 = vmatpush1.bf16.msra.mxu0 %v707
    %2850 = vmatprep.subr.bf16.mxu0 0
    %2851 = vmatpush1.bf16.msra.mxu0 %v708
    %2852 = vmatprep.subr.bf16.mxu0 0
    %2853 = vmatpush1.bf16.msra.mxu0 0
    %2854 = vmatprep.subr.bf16.mxu0 0
    %2855 = vmatpush1.bf16.msra.mxu0 0
    %2856 = vmatprep.subr.bf16.mxu0 0
    %2857 = vmatpush1.bf16.msra.mxu0 0
    %2858 = vmatprep.subr.bf16.mxu0 0
    %2859 = vmatpush1.bf16.msra.mxu0 0
    %2860 = vmatprep.subr.bf16.mxu0 0
    %2861 = vmatpush1.bf16.msra.mxu0 0
    %2862 = vmatprep.subr.bf16.mxu0 0
    %2863 = vmatpush1.bf16.msra.mxu0 0
    %2864 = vmatprep.subr.bf16.mxu0 0
    %2865 = vmatpush1.bf16.msra.mxu0 0
    %2866 = vmatprep.subr.bf16.mxu0 0
    %2867 = vmatpush1.bf16.msra.mxu0 0
    %2868 = vmatprep.subr.bf16.mxu0 0
    %2869 = vmatpush1.bf16.msra.mxu0 0
    %2870 = vmatprep.subr.bf16.mxu0 0
    %2871 = vmatpush1.bf16.msra.mxu0 0
    %2872 = vmatprep.subr.bf16.mxu0 0
    %2873 = vmatpush1.bf16.msra.mxu0 0
    %2874 = vmatprep.subr.bf16.mxu0 0
    %2875 = vmatpush1.bf16.msra.mxu0 0
    %2876 = vmatprep.subr.bf16.mxu0 0
    %2877 = vmatpush1.bf16.msra.mxu0 0
    %2878 = vmatprep.subr.bf16.mxu0 0
    %2879 = vmatpush1.bf16.msra.mxu0 0
    %2880 = vmatprep.mubr.bf16.mxu0 0
    %2881 = vmatmul.mubr.bf16.gmra.mrb[0].mxu0 %v2766
    %v2882 = vpop.f32.mrb[0].mxu0
    %v2883 = vadd.f32 %v367, %v2882
    %v2884 = vpop.f32.mrb[0].mxu0
    %v2885 = vpop.f32.mrb[0].mxu0
    %v2886 = vpop.f32.mrb[0].mxu0
    %2887 = vdwg.mxu0
    %v2889 = vsel %vm156, %v2763, 0
    %2891 = vmatprep.subr.bf16.mxu0 0
    %2892 = vmatpush1.bf16.msra.mxu0 %v763
    %2893 = vmatprep.subr.bf16.mxu0 0
    %2894 = vmatpush1.bf16.msra.mxu0 %v764
    %2895 = vmatprep.subr.bf16.mxu0 0
    %2896 = vmatpush1.bf16.msra.mxu0 0
    %2897 = vmatprep.subr.bf16.mxu0 0
    %2898 = vmatpush1.bf16.msra.mxu0 0
    %2899 = vmatprep.subr.bf16.mxu0 0
    %2900 = vmatpush1.bf16.msra.mxu0 0
    %2901 = vmatprep.subr.bf16.mxu0 0
    %2902 = vmatpush1.bf16.msra.mxu0 0
    %2903 = vmatprep.subr.bf16.mxu0 0
    %2904 = vmatpush1.bf16.msra.mxu0 0
    %2905 = vmatprep.subr.bf16.mxu0 0
    %2906 = vmatpush1.bf16.msra.mxu0 0
    %2907 = vmatprep.subr.bf16.mxu0 0
    %2908 = vmatpush1.bf16.msra.mxu0 0
    %2909 = vmatprep.subr.bf16.mxu0 0
    %2910 = vmatpush1.bf16.msra.mxu0 0
    %2911 = vmatprep.subr.bf16.mxu0 0
    %2912 = vmatpush1.bf16.msra.mxu0 0
    %2913 = vmatprep.subr.bf16.mxu0 0
    %2914 = vmatpush1.bf16.msra.mxu0 0
    %2915 = vmatprep.subr.bf16.mxu0 0
    %2916 = vmatpush1.bf16.msra.mxu0 0
    %2917 = vmatprep.subr.bf16.mxu0 0
    %2918 = vmatpush1.bf16.msra.mxu0 0
    %2919 = vmatprep.subr.bf16.mxu0 0
    %2920 = vmatpush1.bf16.msra.mxu0 0
    %2921 = vmatprep.subr.bf16.mxu0 0
    %2922 = vmatpush1.bf16.msra.mxu0 0
    %2923 = vmatprep.mubr.bf16.mxu0 0
    %2924 = vmatmul.mubr.bf16.gmra.mrb[0].mxu0 %v2889
    %v2925 = vpop.f32.mrb[0].mxu0
    %v2926 = vadd.f32 0.0, %v2925
    %v2927 = vpop.f32.mrb[0].mxu0
    %v2928 = vpop.f32.mrb[0].mxu0
    %v2929 = vpop.f32.mrb[0].mxu0
    %2930 = vdwg.mxu0
    %2931 = vmatprep.subr.bf16.mxu0 0
    %2932 = vmatpush1.bf16.msra.mxu0 %v820
    %2933 = vmatprep.subr.bf16.mxu0 0
    %2934 = vmatpush1.bf16.msra.mxu0 %v821
    %2935 = vmatprep.subr.bf16.mxu0 0
    %2936 = vmatpush1.bf16.msra.mxu0 0
    %2937 = vmatprep.subr.bf16.mxu0 0
    %2938 = vmatpush1.bf16.msra.mxu0 0
    %2939 = vmatprep.subr.bf16.mxu0 0
    %2940 = vmatpush1.bf16.msra.mxu0 0
    %2941 = vmatprep.subr.bf16.mxu0 0
    %2942 = vmatpush1.bf16.msra.mxu0 0
    %2943 = vmatprep.subr.bf16.mxu0 0
    %2944 = vmatpush1.bf16.msra.mxu0 0
    %2945 = vmatprep.subr.bf16.mxu0 0
    %2946 = vmatpush1.bf16.msra.mxu0 0
    %2947 = vmatprep.subr.bf16.mxu0 0
    %2948 = vmatpush1.bf16.msra.mxu0 0
    %2949 = vmatprep.subr.bf16.mxu0 0
    %2950 = vmatpush1.bf16.msra.mxu0 0
    %2951 = vmatprep.subr.bf16.mxu0 0
    %2952 = vmatpush1.bf16.msra.mxu0 0
    %2953 = vmatprep.subr.bf16.mxu0 0
    %2954 = vmatpush1.bf16.msra.mxu0 0
    %2955 = vmatprep.subr.bf16.mxu0 0
    %2956 = vmatpush1.bf16.msra.mxu0 0
    %2957 = vmatprep.subr.bf16.mxu0 0
    %2958 = vmatpush1.bf16.msra.mxu0 0
    %2959 = vmatprep.subr.bf16.mxu0 0
    %2960 = vmatpush1.bf16.msra.mxu0 0
    %2961 = vmatprep.subr.bf16.mxu0 0
    %2962 = vmatpush1.bf16.msra.mxu0 0
    %2963 = vmatprep.mubr.bf16.mxu0 0
    %2964 = vmatmul.mubr.bf16.gmra.mrb[0].mxu0 %v2889
    %v2965 = vpop.f32.mrb[0].mxu0
    %v2966 = vadd.f32 0.0, %v2965
    %v2967 = vpop.f32.mrb[0].mxu0
    %v2968 = vpop.f32.mrb[0].mxu0
    %v2969 = vpop.f32.mrb[0].mxu0
    %2970 = vdwg.mxu0
    %v2971 = vadd.f32 %v2803, %v2926
    %v2972 = vxor.u32 %v2971, 2147483648
    %v2973 = vmul.f32 %v2972, 1.442695
    %v2974 = vpow.pop %v2973
    %v2975 = vadd.f32 %v2974, 1.0
    %v2976 = vrcp.pop %v2975
    %v2977 = vmul.f32 1.0, %v2976
    %v2978 = vadd.f32 %v2843, %v2966
    %v2979 = vxor.u32 %v2978, 2147483648
    %v2980 = vmul.f32 %v2979, 1.442695
    %v2981 = vpow.pop %v2980
    %v2982 = vadd.f32 %v2981, 1.0
    %v2983 = vrcp.pop %v2982
    %v2984 = vmul.f32 1.0, %v2983
    %2985 = vmatprep.subr.bf16.mxu0 0
    %2986 = vmatpush1.bf16.msra.mxu0 %v891
    %2987 = vmatprep.subr.bf16.mxu0 0
    %2988 = vmatpush1.bf16.msra.mxu0 %v892
    %2989 = vmatprep.subr.bf16.mxu0 0
    %2990 = vmatpush1.bf16.msra.mxu0 0
    %2991 = vmatprep.subr.bf16.mxu0 0
    %2992 = vmatpush1.bf16.msra.mxu0 0
    %2993 = vmatprep.subr.bf16.mxu0 0
    %2994 = vmatpush1.bf16.msra.mxu0 0
    %2995 = vmatprep.subr.bf16.mxu0 0
    %2996 = vmatpush1.bf16.msra.mxu0 0
    %2997 = vmatprep.subr.bf16.mxu0 0
    %2998 = vmatpush1.bf16.msra.mxu0 0
    %2999 = vmatprep.subr.bf16.mxu0 0
    %3000 = vmatpush1.bf16.msra.mxu0 0
    %3001 = vmatprep.subr.bf16.mxu0 0
    %3002 = vmatpush1.bf16.msra.mxu0 0
    %3003 = vmatprep.subr.bf16.mxu0 0
    %3004 = vmatpush1.bf16.msra.mxu0 0
    %3005 = vmatprep.subr.bf16.mxu0 0
    %3006 = vmatpush1.bf16.msra.mxu0 0
    %3007 = vmatprep.subr.bf16.mxu0 0
    %3008 = vmatpush1.bf16.msra.mxu0 0
    %3009 = vmatprep.subr.bf16.mxu0 0
    %3010 = vmatpush1.bf16.msra.mxu0 0
    %3011 = vmatprep.subr.bf16.mxu0 0
    %3012 = vmatpush1.bf16.msra.mxu0 0
    %3013 = vmatprep.subr.bf16.mxu0 0
    %3014 = vmatpush1.bf16.msra.mxu0 0
    %3015 = vmatprep.subr.bf16.mxu0 0
    %3016 = vmatpush1.bf16.msra.mxu0 0
    %3017 = vmatprep.mubr.bf16.mxu0 0
    %3018 = vmatmul.mubr.bf16.gmra.mrb[0].mxu0 %v2889
    %v3019 = vpop.f32.mrb[0].mxu0
    %v3020 = vadd.f32 %v374, %v3019
    %v3021 = vpop.f32.mrb[0].mxu0
    %v3022 = vpop.f32.mrb[0].mxu0
    %v3023 = vpop.f32.mrb[0].mxu0
    %3024 = vdwg.mxu0
    %v3025 = vmul.f32 %v2977, %v3020
    %v3026 = vadd.f32 %v2883, %v3025
    %v3027 = vtanh.pop %v3026
    %v3028 = vsub.f32 1.0, %v2984
    %v3029 = vmul.f32 %v3028, %v3027
    %v3030 = vmul.f32 %v2984, %v2613
    %v3031 = vadd.f32 %v3029, %v3030
    %s3032 = scalar_lea.vmem [#allocation2], 48
    %v3033 = vld [vmem:[%s3032] sm:$0xff]
    %s3034 = sadd.s32 48, 64
    %s3035 = scalar_lea.vmem [#allocation2], %s3034
    %v3036 = vld [vmem:[%s3035] sm:$0xff]
    %s3037 = sadd.s32 48, 128
    %s3038 = scalar_lea.vmem [#allocation2], %s3037
    %v3039 = vld [vmem:[%s3038] sm:$0xff]
    %3040 = vmatprep.subr.bf16.mxu0 0
    %3041 = vmatpush1.bf16.msra.mxu0 %v395
    %3042 = vmatprep.subr.bf16.mxu0 0
    %3043 = vmatpush1.bf16.msra.mxu0 %v396
    %3044 = vmatprep.subr.bf16.mxu0 0
    %3045 = vmatpush1.bf16.msra.mxu0 0
    %3046 = vmatprep.subr.bf16.mxu0 0
    %3047 = vmatpush1.bf16.msra.mxu0 0
    %3048 = vmatprep.subr.bf16.mxu0 0
    %3049 = vmatpush1.bf16.msra.mxu0 0
    %3050 = vmatprep.subr.bf16.mxu0 0
    %3051 = vmatpush1.bf16.msra.mxu0 0
    %3052 = vmatprep.subr.bf16.mxu0 0
    %3053 = vmatpush1.bf16.msra.mxu0 0
    %3054 = vmatprep.subr.bf16.mxu0 0
    %3055 = vmatpush1.bf16.msra.mxu0 0
    %3056 = vmatprep.subr.bf16.mxu0 0
    %3057 = vmatpush1.bf16.msra.mxu0 0
    %3058 = vmatprep.subr.bf16.mxu0 0
    %3059 = vmatpush1.bf16.msra.mxu0 0
    %3060 = vmatprep.subr.bf16.mxu0 0
    %3061 = vmatpush1.bf16.msra.mxu0 0
    %3062 = vmatprep.subr.bf16.mxu0 0
    %3063 = vmatpush1.bf16.msra.mxu0 0
    %3064 = vmatprep.subr.bf16.mxu0 0
    %3065 = vmatpush1.bf16.msra.mxu0 0
    %3066 = vmatprep.subr.bf16.mxu0 0
    %3067 = vmatpush1.bf16.msra.mxu0 0
    %3068 = vmatprep.subr.bf16.mxu0 0
    %3069 = vmatpush1.bf16.msra.mxu0 0
    %3070 = vmatprep.subr.bf16.mxu0 0
    %3071 = vmatpush1.bf16.msra.mxu0 0
    %3072 = vmatprep.mubr.bf16.mxu0 0
    %3073 = vmatmul.mubr.bf16.gmra.mrb[0].mxu0 %v2766
    %v3074 = vpop.f32.mrb[0].mxu0
    %v3075 = vadd.f32 0.0, %v3074
    %v3076 = vpop.f32.mrb[0].mxu0
    %v3077 = vpop.f32.mrb[0].mxu0
    %v3078 = vpop.f32.mrb[0].mxu0
    %3079 = vdwg.mxu0
    %3080 = vmatprep.subr.bf16.mxu0 0
    %3081 = vmatpush1.bf16.msra.mxu0 %v455
    %3082 = vmatprep.subr.bf16.mxu0 0
    %3083 = vmatpush1.bf16.msra.mxu0 %v456
    %3084 = vmatprep.subr.bf16.mxu0 0
    %3085 = vmatpush1.bf16.msra.mxu0 0
    %3086 = vmatprep.subr.bf16.mxu0 0
    %3087 = vmatpush1.bf16.msra.mxu0 0
    %3088 = vmatprep.subr.bf16.mxu0 0
    %3089 = vmatpush1.bf16.msra.mxu0 0
    %3090 = vmatprep.subr.bf16.mxu0 0
    %3091 = vmatpush1.bf16.msra.mxu0 0
    %3092 = vmatprep.subr.bf16.mxu0 0
    %3093 = vmatpush1.bf16.msra.mxu0 0
    %3094 = vmatprep.subr.bf16.mxu0 0
    %3095 = vmatpush1.bf16.msra.mxu0 0
    %3096 = vmatprep.subr.bf16.mxu0 0
    %3097 = vmatpush1.bf16.msra.mxu0 0
    %3098 = vmatprep.subr.bf16.mxu0 0
    %3099 = vmatpush1.bf16.msra.mxu0 0
    %3100 = vmatprep.subr.bf16.mxu0 0
    %3101 = vmatpush1.bf16.msra.mxu0 0
    %3102 = vmatprep.subr.bf16.mxu0 0
    %3103 = vmatpush1.bf16.msra.mxu0 0
    %3104 = vmatprep.subr.bf16.mxu0 0
    %3105 = vmatpush1.bf16.msra.mxu0 0
    %3106 = vmatprep.subr.bf16.mxu0 0
    %3107 = vmatpush1.bf16.msra.mxu0 0
    %3108 = vmatprep.subr.bf16.mxu0 0
    %3109 = vmatpush1.bf16.msra.mxu0 0
    %3110 = vmatprep.subr.bf16.mxu0 0
    %3111 = vmatpush1.bf16.msra.mxu0 0
    %3112 = vmatprep.mubr.bf16.mxu0 0
    %3113 = vmatmul.mubr.bf16.gmra.mrb[0].mxu0 %v2766
    %v3114 = vpop.f32.mrb[0].mxu0
    %v3115 = vadd.f32 0.0, %v3114
    %v3116 = vpop.f32.mrb[0].mxu0
    %v3117 = vpop.f32.mrb[0].mxu0
    %v3118 = vpop.f32.mrb[0].mxu0
    %3119 = vdwg.mxu0
    %v3120 = vadd.f32 %v3033, %v3075
    %v3121 = vxor.u32 %v3120, 2147483648
    %v3122 = vmul.f32 %v3121, 1.442695
    %v3123 = vpow.pop %v3122
    %v3124 = vadd.f32 %v3123, 1.0
    %v3125 = vrcp.pop %v3124
    %v3126 = vmul.f32 1.0, %v3125
    %v3127 = vadd.f32 %v3036, %v3115
    %v3128 = vxor.u32 %v3127, 2147483648
    %v3129 = vmul.f32 %v3128, 1.442695
    %v3130 = vpow.pop %v3129
    %v3131 = vadd.f32 %v3130, 1.0
    %v3132 = vrcp.pop %v3131
    %v3133 = vmul.f32 1.0, %v3132
    %3134 = vmatprep.subr.bf16.mxu0 0
    %3135 = vmatpush1.bf16.msra.mxu0 %v526
    %3136 = vmatprep.subr.bf16.mxu0 0
    %3137 = vmatpush1.bf16.msra.mxu0 %v527
    %3138 = vmatprep.subr.bf16.mxu0 0
    %3139 = vmatpush1.bf16.msra.mxu0 0
    %3140 = vmatprep.subr.bf16.mxu0 0
    %3141 = vmatpush1.bf16.msra.mxu0 0
    %3142 = vmatprep.subr.bf16.mxu0 0
    %3143 = vmatpush1.bf16.msra.mxu0 0
    %3144 = vmatprep.subr.bf16.mxu0 0
    %3145 = vmatpush1.bf16.msra.mxu0 0
    %3146 = vmatprep.subr.bf16.mxu0 0
    %3147 = vmatpush1.bf16.msra.mxu0 0
    %3148 = vmatprep.subr.bf16.mxu0 0
    %3149 = vmatpush1.bf16.msra.mxu0 0
    %3150 = vmatprep.subr.bf16.mxu0 0
    %3151 = vmatpush1.bf16.msra.mxu0 0
    %3152 = vmatprep.subr.bf16.mxu0 0
    %3153 = vmatpush1.bf16.msra.mxu0 0
    %3154 = vmatprep.subr.bf16.mxu0 0
    %3155 = vmatpush1.bf16.msra.mxu0 0
    %3156 = vmatprep.subr.bf16.mxu0 0
    %3157 = vmatpush1.bf16.msra.mxu0 0
    %3158 = vmatprep.subr.bf16.mxu0 0
    %3159 = vmatpush1.bf16.msra.mxu0 0
    %3160 = vmatprep.subr.bf16.mxu0 0
    %3161 = vmatpush1.bf16.msra.mxu0 0
    %3162 = vmatprep.subr.bf16.mxu0 0
    %3163 = vmatpush1.bf16.msra.mxu0 0
    %3164 = vmatprep.subr.bf16.mxu0 0
    %3165 = vmatpush1.bf16.msra.mxu0 0
    %3166 = vmatprep.mubr.bf16.mxu0 0
    %3167 = vmatmul.mubr.bf16.gmra.mrb[0].mxu0 %v2766
    %v3168 = vpop.f32.mrb[0].mxu0
    %v3169 = vadd.f32 %v344, %v3168
    %v3170 = vpop.f32.mrb[0].mxu0
    %v3171 = vpop.f32.mrb[0].mxu0
    %v3172 = vpop.f32.mrb[0].mxu0
    %3173 = vdwg.mxu0
    %v3174 = vmul.f32 %v3126, %v3169
    %v3175 = vadd.f32 %v3039, %v3174
    %v3176 = vtanh.pop %v3175
    %v3177 = vsub.f32 1.0, %v3133
    %v3178 = vmul.f32 %v3177, %v3176
    %v3179 = vmul.f32 %v3133, %v2762
    %v3180 = vadd.f32 %v3178, %v3179
    %v3181 = vpack.c.bf16 %v3031, %v3031
    %v3182 = vpack.c.bf16 %v3180, %v3180
    %v3184 = vsel %vm156, %v3182, 0
    %3186 = vmatprep.subr.bf16.mxu0 0
    %3187 = vmatpush1.bf16.msra.mxu0 %v590
    %3188 = vmatprep.subr.bf16.mxu0 0
    %3189 = vmatpush1.bf16.msra.mxu0 %v591
    %3190 = vmatprep.subr.bf16.mxu0 0
    %3191 = vmatpush1.bf16.msra.mxu0 0
    %3192 = vmatprep.subr.bf16.mxu0 0
    %3193 = vmatpush1.bf16.msra.mxu0 0
    %3194 = vmatprep.subr.bf16.mxu0 0
    %3195 = vmatpush1.bf16.msra.mxu0 0
    %3196 = vmatprep.subr.bf16.mxu0 0
    %3197 = vmatpush1.bf16.msra.mxu0 0
    %3198 = vmatprep.subr.bf16.mxu0 0
    %3199 = vmatpush1.bf16.msra.mxu0 0
    %3200 = vmatprep.subr.bf16.mxu0 0
    %3201 = vmatpush1.bf16.msra.mxu0 0
    %3202 = vmatprep.subr.bf16.mxu0 0
    %3203 = vmatpush1.bf16.msra.mxu0 0
    %3204 = vmatprep.subr.bf16.mxu0 0
    %3205 = vmatpush1.bf16.msra.mxu0 0
    %3206 = vmatprep.subr.bf16.mxu0 0
    %3207 = vmatpush1.bf16.msra.mxu0 0
    %3208 = vmatprep.subr.bf16.mxu0 0
    %3209 = vmatpush1.bf16.msra.mxu0 0
    %3210 = vmatprep.subr.bf16.mxu0 0
    %3211 = vmatpush1.bf16.msra.mxu0 0
    %3212 = vmatprep.subr.bf16.mxu0 0
    %3213 = vmatpush1.bf16.msra.mxu0 0
    %3214 = vmatprep.subr.bf16.mxu0 0
    %3215 = vmatpush1.bf16.msra.mxu0 0
    %3216 = vmatprep.subr.bf16.mxu0 0
    %3217 = vmatpush1.bf16.msra.mxu0 0
    %3218 = vmatprep.mubr.bf16.mxu0 0
    %3219 = vmatmul.mubr.bf16.gmra.mrb[0].mxu0 %v3184
    %v3220 = vpop.f32.mrb[0].mxu0
    %v3221 = vadd.f32 %v351, %v3220
    %v3222 = vpop.f32.mrb[0].mxu0
    %v3223 = vpop.f32.mrb[0].mxu0
    %v3224 = vpop.f32.mrb[0].mxu0
    %3225 = vdwg.mxu0
    %3226 = vmatprep.subr.bf16.mxu0 0
    %3227 = vmatpush1.bf16.msra.mxu0 %v650
    %3228 = vmatprep.subr.bf16.mxu0 0
    %3229 = vmatpush1.bf16.msra.mxu0 %v651
    %3230 = vmatprep.subr.bf16.mxu0 0
    %3231 = vmatpush1.bf16.msra.mxu0 0
    %3232 = vmatprep.subr.bf16.mxu0 0
    %3233 = vmatpush1.bf16.msra.mxu0 0
    %3234 = vmatprep.subr.bf16.mxu0 0
    %3235 = vmatpush1.bf16.msra.mxu0 0
    %3236 = vmatprep.subr.bf16.mxu0 0
    %3237 = vmatpush1.bf16.msra.mxu0 0
    %3238 = vmatprep.subr.bf16.mxu0 0
    %3239 = vmatpush1.bf16.msra.mxu0 0
    %3240 = vmatprep.subr.bf16.mxu0 0
    %3241 = vmatpush1.bf16.msra.mxu0 0
    %3242 = vmatprep.subr.bf16.mxu0 0
    %3243 = vmatpush1.bf16.msra.mxu0 0
    %3244 = vmatprep.subr.bf16.mxu0 0
    %3245 = vmatpush1.bf16.msra.mxu0 0
    %3246 = vmatprep.subr.bf16.mxu0 0
    %3247 = vmatpush1.bf16.msra.mxu0 0
    %3248 = vmatprep.subr.bf16.mxu0 0
    %3249 = vmatpush1.bf16.msra.mxu0 0
    %3250 = vmatprep.subr.bf16.mxu0 0
    %3251 = vmatpush1.bf16.msra.mxu0 0
    %3252 = vmatprep.subr.bf16.mxu0 0
    %3253 = vmatpush1.bf16.msra.mxu0 0
    %3254 = vmatprep.subr.bf16.mxu0 0
    %3255 = vmatpush1.bf16.msra.mxu0 0
    %3256 = vmatprep.subr.bf16.mxu0 0
    %3257 = vmatpush1.bf16.msra.mxu0 0
    %3258 = vmatprep.mubr.bf16.mxu0 0
    %3259 = vmatmul.mubr.bf16.gmra.mrb[0].mxu0 %v3184
    %v3260 = vpop.f32.mrb[0].mxu0
    %v3261 = vadd.f32 %v359, %v3260
    %v3262 = vpop.f32.mrb[0].mxu0
    %v3263 = vpop.f32.mrb[0].mxu0
    %v3264 = vpop.f32.mrb[0].mxu0
    %3265 = vdwg.mxu0
    %3266 = vmatprep.subr.bf16.mxu0 0
    %3267 = vmatpush1.bf16.msra.mxu0 %v707
    %3268 = vmatprep.subr.bf16.mxu0 0
    %3269 = vmatpush1.bf16.msra.mxu0 %v708
    %3270 = vmatprep.subr.bf16.mxu0 0
    %3271 = vmatpush1.bf16.msra.mxu0 0
    %3272 = vmatprep.subr.bf16.mxu0 0
    %3273 = vmatpush1.bf16.msra.mxu0 0
    %3274 = vmatprep.subr.bf16.mxu0 0
    %3275 = vmatpush1.bf16.msra.mxu0 0
    %3276 = vmatprep.subr.bf16.mxu0 0
    %3277 = vmatpush1.bf16.msra.mxu0 0
    %3278 = vmatprep.subr.bf16.mxu0 0
    %3279 = vmatpush1.bf16.msra.mxu0 0
    %3280 = vmatprep.subr.bf16.mxu0 0
    %3281 = vmatpush1.bf16.msra.mxu0 0
    %3282 = vmatprep.subr.bf16.mxu0 0
    %3283 = vmatpush1.bf16.msra.mxu0 0
    %3284 = vmatprep.subr.bf16.mxu0 0
    %3285 = vmatpush1.bf16.msra.mxu0 0
    %3286 = vmatprep.subr.bf16.mxu0 0
    %3287 = vmatpush1.bf16.msra.mxu0 0
    %3288 = vmatprep.subr.bf16.mxu0 0
    %3289 = vmatpush1.bf16.msra.mxu0 0
    %3290 = vmatprep.subr.bf16.mxu0 0
    %3291 = vmatpush1.bf16.msra.mxu0 0
    %3292 = vmatprep.subr.bf16.mxu0 0
    %3293 = vmatpush1.bf16.msra.mxu0 0
    %3294 = vmatprep.subr.bf16.mxu0 0
    %3295 = vmatpush1.bf16.msra.mxu0 0
    %3296 = vmatprep.subr.bf16.mxu0 0
    %3297 = vmatpush1.bf16.msra.mxu0 0
    %3298 = vmatprep.mubr.bf16.mxu0 0
    %3299 = vmatmul.mubr.bf16.gmra.mrb[0].mxu0 %v3184
    %v3300 = vpop.f32.mrb[0].mxu0
    %v3301 = vadd.f32 %v367, %v3300
    %v3302 = vpop.f32.mrb[0].mxu0
    %v3303 = vpop.f32.mrb[0].mxu0
    %v3304 = vpop.f32.mrb[0].mxu0
    %3305 = vdwg.mxu0
    %v3307 = vsel %vm156, %v3181, 0
    %3309 = vmatprep.subr.bf16.mxu0 0
    %3310 = vmatpush1.bf16.msra.mxu0 %v763
    %3311 = vmatprep.subr.bf16.mxu0 0
    %3312 = vmatpush1.bf16.msra.mxu0 %v764
    %3313 = vmatprep.subr.bf16.mxu0 0
    %3314 = vmatpush1.bf16.msra.mxu0 0
    %3315 = vmatprep.subr.bf16.mxu0 0
    %3316 = vmatpush1.bf16.msra.mxu0 0
    %3317 = vmatprep.subr.bf16.mxu0 0
    %3318 = vmatpush1.bf16.msra.mxu0 0
    %3319 = vmatprep.subr.bf16.mxu0 0
    %3320 = vmatpush1.bf16.msra.mxu0 0
    %3321 = vmatprep.subr.bf16.mxu0 0
    %3322 = vmatpush1.bf16.msra.mxu0 0
    %3323 = vmatprep.subr.bf16.mxu0 0
    %3324 = vmatpush1.bf16.msra.mxu0 0
    %3325 = vmatprep.subr.bf16.mxu0 0
    %3326 = vmatpush1.bf16.msra.mxu0 0
    %3327 = vmatprep.subr.bf16.mxu0 0
    %3328 = vmatpush1.bf16.msra.mxu0 0
    %3329 = vmatprep.subr.bf16.mxu0 0
    %3330 = vmatpush1.bf16.msra.mxu0 0
    %3331 = vmatprep.subr.bf16.mxu0 0
    %3332 = vmatpush1.bf16.msra.mxu0 0
    %3333 = vmatprep.subr.bf16.mxu0 0
    %3334 = vmatpush1.bf16.msra.mxu0 0
    %3335 = vmatprep.subr.bf16.mxu0 0
    %3336 = vmatpush1.bf16.msra.mxu0 0
    %3337 = vmatprep.subr.bf16.mxu0 0
    %3338 = vmatpush1.bf16.msra.mxu0 0
    %3339 = vmatprep.subr.bf16.mxu0 0
    %3340 = vmatpush1.bf16.msra.mxu0 0
    %3341 = vmatprep.mubr.bf16.mxu0 0
    %3342 = vmatmul.mubr.bf16.gmra.mrb[0].mxu0 %v3307
    %v3343 = vpop.f32.mrb[0].mxu0
    %v3344 = vadd.f32 0.0, %v3343
    %v3345 = vpop.f32.mrb[0].mxu0
    %v3346 = vpop.f32.mrb[0].mxu0
    %v3347 = vpop.f32.mrb[0].mxu0
    %3348 = vdwg.mxu0
    %3349 = vmatprep.subr.bf16.mxu0 0
    %3350 = vmatpush1.bf16.msra.mxu0 %v820
    %3351 = vmatprep.subr.bf16.mxu0 0
    %3352 = vmatpush1.bf16.msra.mxu0 %v821
    %3353 = vmatprep.subr.bf16.mxu0 0
    %3354 = vmatpush1.bf16.msra.mxu0 0
    %3355 = vmatprep.subr.bf16.mxu0 0
    %3356 = vmatpush1.bf16.msra.mxu0 0
    %3357 = vmatprep.subr.bf16.mxu0 0
    %3358 = vmatpush1.bf16.msra.mxu0 0
    %3359 = vmatprep.subr.bf16.mxu0 0
    %3360 = vmatpush1.bf16.msra.mxu0 0
    %3361 = vmatprep.subr.bf16.mxu0 0
    %3362 = vmatpush1.bf16.msra.mxu0 0
    %3363 = vmatprep.subr.bf16.mxu0 0
    %3364 = vmatpush1.bf16.msra.mxu0 0
    %3365 = vmatprep.subr.bf16.mxu0 0
    %3366 = vmatpush1.bf16.msra.mxu0 0
    %3367 = vmatprep.subr.bf16.mxu0 0
    %3368 = vmatpush1.bf16.msra.mxu0 0
    %3369 = vmatprep.subr.bf16.mxu0 0
    %3370 = vmatpush1.bf16.msra.mxu0 0
    %3371 = vmatprep.subr.bf16.mxu0 0
    %3372 = vmatpush1.bf16.msra.mxu0 0
    %3373 = vmatprep.subr.bf16.mxu0 0
    %3374 = vmatpush1.bf16.msra.mxu0 0
    %3375 = vmatprep.subr.bf16.mxu0 0
    %3376 = vmatpush1.bf16.msra.mxu0 0
    %3377 = vmatprep.subr.bf16.mxu0 0
    %3378 = vmatpush1.bf16.msra.mxu0 0
    %3379 = vmatprep.subr.bf16.mxu0 0
    %3380 = vmatpush1.bf16.msra.mxu0 0
    %3381 = vmatprep.mubr.bf16.mxu0 0
    %3382 = vmatmul.mubr.bf16.gmra.mrb[0].mxu0 %v3307
    %v3383 = vpop.f32.mrb[0].mxu0
    %v3384 = vadd.f32 0.0, %v3383
    %v3385 = vpop.f32.mrb[0].mxu0
    %v3386 = vpop.f32.mrb[0].mxu0
    %v3387 = vpop.f32.mrb[0].mxu0
    %3388 = vdwg.mxu0
    %v3389 = vadd.f32 %v3221, %v3344
    %v3390 = vxor.u32 %v3389, 2147483648
    %v3391 = vmul.f32 %v3390, 1.442695
    %v3392 = vpow.pop %v3391
    %v3393 = vadd.f32 %v3392, 1.0
    %v3394 = vrcp.pop %v3393
    %v3395 = vmul.f32 1.0, %v3394
    %v3396 = vadd.f32 %v3261, %v3384
    %v3397 = vxor.u32 %v3396, 2147483648
    %v3398 = vmul.f32 %v3397, 1.442695
    %v3399 = vpow.pop %v3398
    %v3400 = vadd.f32 %v3399, 1.0
    %v3401 = vrcp.pop %v3400
    %v3402 = vmul.f32 1.0, %v3401
    %3403 = vmatprep.subr.bf16.mxu0 0
    %3404 = vmatpush1.bf16.msra.mxu0 %v891
    %3405 = vmatprep.subr.bf16.mxu0 0
    %3406 = vmatpush1.bf16.msra.mxu0 %v892
    %3407 = vmatprep.subr.bf16.mxu0 0
    %3408 = vmatpush1.bf16.msra.mxu0 0
    %3409 = vmatprep.subr.bf16.mxu0 0
    %3410 = vmatpush1.bf16.msra.mxu0 0
    %3411 = vmatprep.subr.bf16.mxu0 0
    %3412 = vmatpush1.bf16.msra.mxu0 0
    %3413 = vmatprep.subr.bf16.mxu0 0
    %3414 = vmatpush1.bf16.msra.mxu0 0
    %3415 = vmatprep.subr.bf16.mxu0 0
    %3416 = vmatpush1.bf16.msra.mxu0 0
    %3417 = vmatprep.subr.bf16.mxu0 0
    %3418 = vmatpush1.bf16.msra.mxu0 0
    %3419 = vmatprep.subr.bf16.mxu0 0
    %3420 = vmatpush1.bf16.msra.mxu0 0
    %3421 = vmatprep.subr.bf16.mxu0 0
    %3422 = vmatpush1.bf16.msra.mxu0 0
    %3423 = vmatprep.subr.bf16.mxu0 0
    %3424 = vmatpush1.bf16.msra.mxu0 0
    %3425 = vmatprep.subr.bf16.mxu0 0
    %3426 = vmatpush1.bf16.msra.mxu0 0
    %3427 = vmatprep.subr.bf16.mxu0 0
    %3428 = vmatpush1.bf16.msra.mxu0 0
    %3429 = vmatprep.subr.bf16.mxu0 0
    %3430 = vmatpush1.bf16.msra.mxu0 0
    %3431 = vmatprep.subr.bf16.mxu0 0
    %3432 = vmatpush1.bf16.msra.mxu0 0
    %3433 = vmatprep.subr.bf16.mxu0 0
    %3434 = vmatpush1.bf16.msra.mxu0 0
    %3435 = vmatprep.mubr.bf16.mxu0 0
    %3436 = vmatmul.mubr.bf16.gmra.mrb[0].mxu0 %v3307
    %v3437 = vpop.f32.mrb[0].mxu0
    %v3438 = vadd.f32 %v374, %v3437
    %v3439 = vpop.f32.mrb[0].mxu0
    %v3440 = vpop.f32.mrb[0].mxu0
    %v3441 = vpop.f32.mrb[0].mxu0
    %3442 = vdwg.mxu0
    %v3443 = vmul.f32 %v3395, %v3438
    %v3444 = vadd.f32 %v3301, %v3443
    %v3445 = vtanh.pop %v3444
    %v3446 = vsub.f32 1.0, %v3402
    %v3447 = vmul.f32 %v3446, %v3445
    %v3448 = vmul.f32 %v3402, %v3031
    %v3449 = vadd.f32 %v3447, %v3448
    %s3450 = scalar_lea.vmem [#allocation2], 56
    %v3451 = vld [vmem:[%s3450] sm:$0xff]
    %s3452 = sadd.s32 56, 64
    %s3453 = scalar_lea.vmem [#allocation2], %s3452
    %v3454 = vld [vmem:[%s3453] sm:$0xff]
    %s3455 = sadd.s32 56, 128
    %s3456 = scalar_lea.vmem [#allocation2], %s3455
    %v3457 = vld [vmem:[%s3456] sm:$0xff]
    %3458 = vmatprep.subr.bf16.mxu0 0
    %3459 = vmatpush1.bf16.msra.mxu0 %v395
    %3460 = vmatprep.subr.bf16.mxu0 0
    %3461 = vmatpush1.bf16.msra.mxu0 %v396
    %3462 = vmatprep.subr.bf16.mxu0 0
    %3463 = vmatpush1.bf16.msra.mxu0 0
    %3464 = vmatprep.subr.bf16.mxu0 0
    %3465 = vmatpush1.bf16.msra.mxu0 0
    %3466 = vmatprep.subr.bf16.mxu0 0
    %3467 = vmatpush1.bf16.msra.mxu0 0
    %3468 = vmatprep.subr.bf16.mxu0 0
    %3469 = vmatpush1.bf16.msra.mxu0 0
    %3470 = vmatprep.subr.bf16.mxu0 0
    %3471 = vmatpush1.bf16.msra.mxu0 0
    %3472 = vmatprep.subr.bf16.mxu0 0
    %3473 = vmatpush1.bf16.msra.mxu0 0
    %3474 = vmatprep.subr.bf16.mxu0 0
    %3475 = vmatpush1.bf16.msra.mxu0 0
    %3476 = vmatprep.subr.bf16.mxu0 0
    %3477 = vmatpush1.bf16.msra.mxu0 0
    %3478 = vmatprep.subr.bf16.mxu0 0
    %3479 = vmatpush1.bf16.msra.mxu0 0
    %3480 = vmatprep.subr.bf16.mxu0 0
    %3481 = vmatpush1.bf16.msra.mxu0 0
    %3482 = vmatprep.subr.bf16.mxu0 0
    %3483 = vmatpush1.bf16.msra.mxu0 0
    %3484 = vmatprep.subr.bf16.mxu0 0
    %3485 = vmatpush1.bf16.msra.mxu0 0
    %3486 = vmatprep.subr.bf16.mxu0 0
    %3487 = vmatpush1.bf16.msra.mxu0 0
    %3488 = vmatprep.subr.bf16.mxu0 0
    %3489 = vmatpush1.bf16.msra.mxu0 0
    %3490 = vmatprep.mubr.bf16.mxu0 0
    %3491 = vmatmul.mubr.bf16.gmra.mrb[0].mxu0 %v3184
    %v3492 = vpop.f32.mrb[0].mxu0
    %v3493 = vadd.f32 0.0, %v3492
    %v3494 = vpop.f32.mrb[0].mxu0
    %v3495 = vpop.f32.mrb[0].mxu0
    %v3496 = vpop.f32.mrb[0].mxu0
    %3497 = vdwg.mxu0
    %3498 = vmatprep.subr.bf16.mxu0 0
    %3499 = vmatpush1.bf16.msra.mxu0 %v455
    %3500 = vmatprep.subr.bf16.mxu0 0
    %3501 = vmatpush1.bf16.msra.mxu0 %v456
    %3502 = vmatprep.subr.bf16.mxu0 0
    %3503 = vmatpush1.bf16.msra.mxu0 0
    %3504 = vmatprep.subr.bf16.mxu0 0
    %3505 = vmatpush1.bf16.msra.mxu0 0
    %3506 = vmatprep.subr.bf16.mxu0 0
    %3507 = vmatpush1.bf16.msra.mxu0 0
    %3508 = vmatprep.subr.bf16.mxu0 0
    %3509 = vmatpush1.bf16.msra.mxu0 0
    %3510 = vmatprep.subr.bf16.mxu0 0
    %3511 = vmatpush1.bf16.msra.mxu0 0
    %3512 = vmatprep.subr.bf16.mxu0 0
    %3513 = vmatpush1.bf16.msra.mxu0 0
    %3514 = vmatprep.subr.bf16.mxu0 0
    %3515 = vmatpush1.bf16.msra.mxu0 0
    %3516 = vmatprep.subr.bf16.mxu0 0
    %3517 = vmatpush1.bf16.msra.mxu0 0
    %3518 = vmatprep.subr.bf16.mxu0 0
    %3519 = vmatpush1.bf16.msra.mxu0 0
    %3520 = vmatprep.subr.bf16.mxu0 0
    %3521 = vmatpush1.bf16.msra.mxu0 0
    %3522 = vmatprep.subr.bf16.mxu0 0
    %3523 = vmatpush1.bf16.msra.mxu0 0
    %3524 = vmatprep.subr.bf16.mxu0 0
    %3525 = vmatpush1.bf16.msra.mxu0 0
    %3526 = vmatprep.subr.bf16.mxu0 0
    %3527 = vmatpush1.bf16.msra.mxu0 0
    %3528 = vmatprep.subr.bf16.mxu0 0
    %3529 = vmatpush1.bf16.msra.mxu0 0
    %3530 = vmatprep.mubr.bf16.mxu0 0
    %3531 = vmatmul.mubr.bf16.gmra.mrb[0].mxu0 %v3184
    %v3532 = vpop.f32.mrb[0].mxu0
    %v3533 = vadd.f32 0.0, %v3532
    %v3534 = vpop.f32.mrb[0].mxu0
    %v3535 = vpop.f32.mrb[0].mxu0
    %v3536 = vpop.f32.mrb[0].mxu0
    %3537 = vdwg.mxu0
    %v3538 = vadd.f32 %v3451, %v3493
    %v3539 = vxor.u32 %v3538, 2147483648
    %v3540 = vmul.f32 %v3539, 1.442695
    %v3541 = vpow.pop %v3540
    %v3542 = vadd.f32 %v3541, 1.0
    %v3543 = vrcp.pop %v3542
    %v3544 = vmul.f32 1.0, %v3543
    %v3545 = vadd.f32 %v3454, %v3533
    %v3546 = vxor.u32 %v3545, 2147483648
    %v3547 = vmul.f32 %v3546, 1.442695
    %v3548 = vpow.pop %v3547
    %v3549 = vadd.f32 %v3548, 1.0
    %v3550 = vrcp.pop %v3549
    %v3551 = vmul.f32 1.0, %v3550
    %3552 = vmatprep.subr.bf16.mxu0 0
    %3553 = vmatpush1.bf16.msra.mxu0 %v526
    %3554 = vmatprep.subr.bf16.mxu0 0
    %3555 = vmatpush1.bf16.msra.mxu0 %v527
    %3556 = vmatprep.subr.bf16.mxu0 0
    %3557 = vmatpush1.bf16.msra.mxu0 0
    %3558 = vmatprep.subr.bf16.mxu0 0
    %3559 = vmatpush1.bf16.msra.mxu0 0
    %3560 = vmatprep.subr.bf16.mxu0 0
    %3561 = vmatpush1.bf16.msra.mxu0 0
    %3562 = vmatprep.subr.bf16.mxu0 0
    %3563 = vmatpush1.bf16.msra.mxu0 0
    %3564 = vmatprep.subr.bf16.mxu0 0
    %3565 = vmatpush1.bf16.msra.mxu0 0
    %3566 = vmatprep.subr.bf16.mxu0 0
    %3567 = vmatpush1.bf16.msra.mxu0 0
    %3568 = vmatprep.subr.bf16.mxu0 0
    %3569 = vmatpush1.bf16.msra.mxu0 0
    %3570 = vmatprep.subr.bf16.mxu0 0
    %3571 = vmatpush1.bf16.msra.mxu0 0
    %3572 = vmatprep.subr.bf16.mxu0 0
    %3573 = vmatpush1.bf16.msra.mxu0 0
    %3574 = vmatprep.subr.bf16.mxu0 0
    %3575 = vmatpush1.bf16.msra.mxu0 0
    %3576 = vmatprep.subr.bf16.mxu0 0
    %3577 = vmatpush1.bf16.msra.mxu0 0
    %3578 = vmatprep.subr.bf16.mxu0 0
    %3579 = vmatpush1.bf16.msra.mxu0 0
    %3580 = vmatprep.subr.bf16.mxu0 0
    %3581 = vmatpush1.bf16.msra.mxu0 0
    %3582 = vmatprep.subr.bf16.mxu0 0
    %3583 = vmatpush1.bf16.msra.mxu0 0
    %3584 = vmatprep.mubr.bf16.mxu0 0
    %3585 = vmatmul.mubr.bf16.gmra.mrb[0].mxu0 %v3184
    %v3586 = vpop.f32.mrb[0].mxu0
    %v3587 = vadd.f32 %v344, %v3586
    %v3588 = vpop.f32.mrb[0].mxu0
    %v3589 = vpop.f32.mrb[0].mxu0
    %v3590 = vpop.f32.mrb[0].mxu0
    %3591 = vdwg.mxu0
    %v3592 = vmul.f32 %v3544, %v3587
    %v3593 = vadd.f32 %v3457, %v3592
    %v3594 = vtanh.pop %v3593
    %v3595 = vsub.f32 1.0, %v3551
    %v3596 = vmul.f32 %v3595, %v3594
    %v3597 = vmul.f32 %v3551, %v3180
    %v3598 = vadd.f32 %v3596, %v3597
    %v3599 = vpack.c.bf16 %v3449, %v3449
    %v3600 = vpack.c.bf16 %v3598, %v3598
    %v3602 = vsel %vm156, %v3600, 0
    %3604 = vmatprep.subr.bf16.mxu0 0
    %3605 = vmatpush1.bf16.msra.mxu0 %v590
    %3606 = vmatprep.subr.bf16.mxu0 0
    %3607 = vmatpush1.bf16.msra.mxu0 %v591
    %3608 = vmatprep.subr.bf16.mxu0 0
    %3609 = vmatpush1.bf16.msra.mxu0 0
    %3610 = vmatprep.subr.bf16.mxu0 0
    %3611 = vmatpush1.bf16.msra.mxu0 0
    %3612 = vmatprep.subr.bf16.mxu0 0
    %3613 = vmatpush1.bf16.msra.mxu0 0
    %3614 = vmatprep.subr.bf16.mxu0 0
    %3615 = vmatpush1.bf16.msra.mxu0 0
    %3616 = vmatprep.subr.bf16.mxu0 0
    %3617 = vmatpush1.bf16.msra.mxu0 0
    %3618 = vmatprep.subr.bf16.mxu0 0
    %3619 = vmatpush1.bf16.msra.mxu0 0
    %3620 = vmatprep.subr.bf16.mxu0 0
    %3621 = vmatpush1.bf16.msra.mxu0 0
    %3622 = vmatprep.subr.bf16.mxu0 0
    %3623 = vmatpush1.bf16.msra.mxu0 0
    %3624 = vmatprep.subr.bf16.mxu0 0
    %3625 = vmatpush1.bf16.msra.mxu0 0
    %3626 = vmatprep.subr.bf16.mxu0 0
    %3627 = vmatpush1.bf16.msra.mxu0 0
    %3628 = vmatprep.subr.bf16.mxu0 0
    %3629 = vmatpush1.bf16.msra.mxu0 0
    %3630 = vmatprep.subr.bf16.mxu0 0
    %3631 = vmatpush1.bf16.msra.mxu0 0
    %3632 = vmatprep.subr.bf16.mxu0 0
    %3633 = vmatpush1.bf16.msra.mxu0 0
    %3634 = vmatprep.subr.bf16.mxu0 0
    %3635 = vmatpush1.bf16.msra.mxu0 0
    %3636 = vmatprep.mubr.bf16.mxu0 0
    %3637 = vmatmul.mubr.bf16.gmra.mrb[0].mxu0 %v3602
    %v3638 = vpop.f32.mrb[0].mxu0
    %v3639 = vadd.f32 %v351, %v3638
    %v3640 = vpop.f32.mrb[0].mxu0
    %v3641 = vpop.f32.mrb[0].mxu0
    %v3642 = vpop.f32.mrb[0].mxu0
    %3643 = vdwg.mxu0
    %3644 = vmatprep.subr.bf16.mxu0 0
    %3645 = vmatpush1.bf16.msra.mxu0 %v650
    %3646 = vmatprep.subr.bf16.mxu0 0
    %3647 = vmatpush1.bf16.msra.mxu0 %v651
    %3648 = vmatprep.subr.bf16.mxu0 0
    %3649 = vmatpush1.bf16.msra.mxu0 0
    %3650 = vmatprep.subr.bf16.mxu0 0
    %3651 = vmatpush1.bf16.msra.mxu0 0
    %3652 = vmatprep.subr.bf16.mxu0 0
    %3653 = vmatpush1.bf16.msra.mxu0 0
    %3654 = vmatprep.subr.bf16.mxu0 0
    %3655 = vmatpush1.bf16.msra.mxu0 0
    %3656 = vmatprep.subr.bf16.mxu0 0
    %3657 = vmatpush1.bf16.msra.mxu0 0
    %3658 = vmatprep.subr.bf16.mxu0 0
    %3659 = vmatpush1.bf16.msra.mxu0 0
    %3660 = vmatprep.subr.bf16.mxu0 0
    %3661 = vmatpush1.bf16.msra.mxu0 0
    %3662 = vmatprep.subr.bf16.mxu0 0
    %3663 = vmatpush1.bf16.msra.mxu0 0
    %3664 = vmatprep.subr.bf16.mxu0 0
    %3665 = vmatpush1.bf16.msra.mxu0 0
    %3666 = vmatprep.subr.bf16.mxu0 0
    %3667 = vmatpush1.bf16.msra.mxu0 0
    %3668 = vmatprep.subr.bf16.mxu0 0
    %3669 = vmatpush1.bf16.msra.mxu0 0
    %3670 = vmatprep.subr.bf16.mxu0 0
    %3671 = vmatpush1.bf16.msra.mxu0 0
    %3672 = vmatprep.subr.bf16.mxu0 0
    %3673 = vmatpush1.bf16.msra.mxu0 0
    %3674 = vmatprep.subr.bf16.mxu0 0
    %3675 = vmatpush1.bf16.msra.mxu0 0
    %3676 = vmatprep.mubr.bf16.mxu0 0
    %3677 = vmatmul.mubr.bf16.gmra.mrb[0].mxu0 %v3602
    %v3678 = vpop.f32.mrb[0].mxu0
    %v3679 = vadd.f32 %v359, %v3678
    %v3680 = vpop.f32.mrb[0].mxu0
    %v3681 = vpop.f32.mrb[0].mxu0
    %v3682 = vpop.f32.mrb[0].mxu0
    %3683 = vdwg.mxu0
    %3684 = vmatprep.subr.bf16.mxu0 0
    %3685 = vmatpush1.bf16.msra.mxu0 %v707
    %3686 = vmatprep.subr.bf16.mxu0 0
    %3687 = vmatpush1.bf16.msra.mxu0 %v708
    %3688 = vmatprep.subr.bf16.mxu0 0
    %3689 = vmatpush1.bf16.msra.mxu0 0
    %3690 = vmatprep.subr.bf16.mxu0 0
    %3691 = vmatpush1.bf16.msra.mxu0 0
    %3692 = vmatprep.subr.bf16.mxu0 0
    %3693 = vmatpush1.bf16.msra.mxu0 0
    %3694 = vmatprep.subr.bf16.mxu0 0
    %3695 = vmatpush1.bf16.msra.mxu0 0
    %3696 = vmatprep.subr.bf16.mxu0 0
    %3697 = vmatpush1.bf16.msra.mxu0 0
    %3698 = vmatprep.subr.bf16.mxu0 0
    %3699 = vmatpush1.bf16.msra.mxu0 0
    %3700 = vmatprep.subr.bf16.mxu0 0
    %3701 = vmatpush1.bf16.msra.mxu0 0
    %3702 = vmatprep.subr.bf16.mxu0 0
    %3703 = vmatpush1.bf16.msra.mxu0 0
    %3704 = vmatprep.subr.bf16.mxu0 0
    %3705 = vmatpush1.bf16.msra.mxu0 0
    %3706 = vmatprep.subr.bf16.mxu0 0
    %3707 = vmatpush1.bf16.msra.mxu0 0
    %3708 = vmatprep.subr.bf16.mxu0 0
    %3709 = vmatpush1.bf16.msra.mxu0 0
    %3710 = vmatprep.subr.bf16.mxu0 0
    %3711 = vmatpush1.bf16.msra.mxu0 0
    %3712 = vmatprep.subr.bf16.mxu0 0
    %3713 = vmatpush1.bf16.msra.mxu0 0
    %3714 = vmatprep.subr.bf16.mxu0 0
    %3715 = vmatpush1.bf16.msra.mxu0 0
    %3716 = vmatprep.mubr.bf16.mxu0 0
    %3717 = vmatmul.mubr.bf16.gmra.mrb[0].mxu0 %v3602
    %v3718 = vpop.f32.mrb[0].mxu0
    %v3719 = vadd.f32 %v367, %v3718
    %v3720 = vpop.f32.mrb[0].mxu0
    %v3721 = vpop.f32.mrb[0].mxu0
    %v3722 = vpop.f32.mrb[0].mxu0
    %3723 = vdwg.mxu0
    %v3725 = vsel %vm156, %v3599, 0
    %3727 = vmatprep.subr.bf16.mxu0 0
    %3728 = vmatpush1.bf16.msra.mxu0 %v763
    %3729 = vmatprep.subr.bf16.mxu0 0
    %3730 = vmatpush1.bf16.msra.mxu0 %v764
    %3731 = vmatprep.subr.bf16.mxu0 0
    %3732 = vmatpush1.bf16.msra.mxu0 0
    %3733 = vmatprep.subr.bf16.mxu0 0
    %3734 = vmatpush1.bf16.msra.mxu0 0
    %3735 = vmatprep.subr.bf16.mxu0 0
    %3736 = vmatpush1.bf16.msra.mxu0 0
    %3737 = vmatprep.subr.bf16.mxu0 0
    %3738 = vmatpush1.bf16.msra.mxu0 0
    %3739 = vmatprep.subr.bf16.mxu0 0
    %3740 = vmatpush1.bf16.msra.mxu0 0
    %3741 = vmatprep.subr.bf16.mxu0 0
    %3742 = vmatpush1.bf16.msra.mxu0 0
    %3743 = vmatprep.subr.bf16.mxu0 0
    %3744 = vmatpush1.bf16.msra.mxu0 0
    %3745 = vmatprep.subr.bf16.mxu0 0
    %3746 = vmatpush1.bf16.msra.mxu0 0
    %3747 = vmatprep.subr.bf16.mxu0 0
    %3748 = vmatpush1.bf16.msra.mxu0 0
    %3749 = vmatprep.subr.bf16.mxu0 0
    %3750 = vmatpush1.bf16.msra.mxu0 0
    %3751 = vmatprep.subr.bf16.mxu0 0
    %3752 = vmatpush1.bf16.msra.mxu0 0
    %3753 = vmatprep.subr.bf16.mxu0 0
    %3754 = vmatpush1.bf16.msra.mxu0 0
    %3755 = vmatprep.subr.bf16.mxu0 0
    %3756 = vmatpush1.bf16.msra.mxu0 0
    %3757 = vmatprep.subr.bf16.mxu0 0
    %3758 = vmatpush1.bf16.msra.mxu0 0
    %3759 = vmatprep.mubr.bf16.mxu0 0
    %3760 = vmatmul.mubr.bf16.gmra.mrb[0].mxu0 %v3725
    %v3761 = vpop.f32.mrb[0].mxu0
    %v3762 = vadd.f32 0.0, %v3761
    %v3763 = vpop.f32.mrb[0].mxu0
    %v3764 = vpop.f32.mrb[0].mxu0
    %v3765 = vpop.f32.mrb[0].mxu0
    %3766 = vdwg.mxu0
    %3767 = vmatprep.subr.bf16.mxu0 0
    %3768 = vmatpush1.bf16.msra.mxu0 %v820
    %3769 = vmatprep.subr.bf16.mxu0 0
    %3770 = vmatpush1.bf16.msra.mxu0 %v821
    %3771 = vmatprep.subr.bf16.mxu0 0
    %3772 = vmatpush1.bf16.msra.mxu0 0
    %3773 = vmatprep.subr.bf16.mxu0 0
    %3774 = vmatpush1.bf16.msra.mxu0 0
    %3775 = vmatprep.subr.bf16.mxu0 0
    %3776 = vmatpush1.bf16.msra.mxu0 0
    %3777 = vmatprep.subr.bf16.mxu0 0
    %3778 = vmatpush1.bf16.msra.mxu0 0
    %3779 = vmatprep.subr.bf16.mxu0 0
    %3780 = vmatpush1.bf16.msra.mxu0 0
    %3781 = vmatprep.subr.bf16.mxu0 0
    %3782 = vmatpush1.bf16.msra.mxu0 0
    %3783 = vmatprep.subr.bf16.mxu0 0
    %3784 = vmatpush1.bf16.msra.mxu0 0
    %3785 = vmatprep.subr.bf16.mxu0 0
    %3786 = vmatpush1.bf16.msra.mxu0 0
    %3787 = vmatprep.subr.bf16.mxu0 0
    %3788 = vmatpush1.bf16.msra.mxu0 0
    %3789 = vmatprep.subr.bf16.mxu0 0
    %3790 = vmatpush1.bf16.msra.mxu0 0
    %3791 = vmatprep.subr.bf16.mxu0 0
    %3792 = vmatpush1.bf16.msra.mxu0 0
    %3793 = vmatprep.subr.bf16.mxu0 0
    %3794 = vmatpush1.bf16.msra.mxu0 0
    %3795 = vmatprep.subr.bf16.mxu0 0
    %3796 = vmatpush1.bf16.msra.mxu0 0
    %3797 = vmatprep.subr.bf16.mxu0 0
    %3798 = vmatpush1.bf16.msra.mxu0 0
    %3799 = vmatprep.mubr.bf16.mxu0 0
    %3800 = vmatmul.mubr.bf16.gmra.mrb[0].mxu0 %v3725
    %v3801 = vpop.f32.mrb[0].mxu0
    %v3802 = vadd.f32 0.0, %v3801
    %v3803 = vpop.f32.mrb[0].mxu0
    %v3804 = vpop.f32.mrb[0].mxu0
    %v3805 = vpop.f32.mrb[0].mxu0
    %3806 = vdwg.mxu0
    %v3807 = vadd.f32 %v3639, %v3762
    %v3808 = vxor.u32 %v3807, 2147483648
    %v3809 = vmul.f32 %v3808, 1.442695
    %v3810 = vpow.pop %v3809
    %v3811 = vadd.f32 %v3810, 1.0
    %v3812 = vrcp.pop %v3811
    %v3813 = vmul.f32 1.0, %v3812
    %v3814 = vadd.f32 %v3679, %v3802
    %v3815 = vxor.u32 %v3814, 2147483648
    %v3816 = vmul.f32 %v3815, 1.442695
    %v3817 = vpow.pop %v3816
    %v3818 = vadd.f32 %v3817, 1.0
    %v3819 = vrcp.pop %v3818
    %v3820 = vmul.f32 1.0, %v3819
    %3821 = vmatprep.subr.bf16.mxu0 0
    %3822 = vmatpush1.bf16.msra.mxu0 %v891
    %3823 = vmatprep.subr.bf16.mxu0 0
    %3824 = vmatpush1.bf16.msra.mxu0 %v892
    %3825 = vmatprep.subr.bf16.mxu0 0
    %3826 = vmatpush1.bf16.msra.mxu0 0
    %3827 = vmatprep.subr.bf16.mxu0 0
    %3828 = vmatpush1.bf16.msra.mxu0 0
    %3829 = vmatprep.subr.bf16.mxu0 0
    %3830 = vmatpush1.bf16.msra.mxu0 0
    %3831 = vmatprep.subr.bf16.mxu0 0
    %3832 = vmatpush1.bf16.msra.mxu0 0
    %3833 = vmatprep.subr.bf16.mxu0 0
    %3834 = vmatpush1.bf16.msra.mxu0 0
    %3835 = vmatprep.subr.bf16.mxu0 0
    %3836 = vmatpush1.bf16.msra.mxu0 0
    %3837 = vmatprep.subr.bf16.mxu0 0
    %3838 = vmatpush1.bf16.msra.mxu0 0
    %3839 = vmatprep.subr.bf16.mxu0 0
    %3840 = vmatpush1.bf16.msra.mxu0 0
    %3841 = vmatprep.subr.bf16.mxu0 0
    %3842 = vmatpush1.bf16.msra.mxu0 0
    %3843 = vmatprep.subr.bf16.mxu0 0
    %3844 = vmatpush1.bf16.msra.mxu0 0
    %3845 = vmatprep.subr.bf16.mxu0 0
    %3846 = vmatpush1.bf16.msra.mxu0 0
    %3847 = vmatprep.subr.bf16.mxu0 0
    %3848 = vmatpush1.bf16.msra.mxu0 0
    %3849 = vmatprep.subr.bf16.mxu0 0
    %3850 = vmatpush1.bf16.msra.mxu0 0
    %3851 = vmatprep.subr.bf16.mxu0 0
    %3852 = vmatpush1.bf16.msra.mxu0 0
    %3853 = vmatprep.mubr.bf16.mxu0 0
    %3854 = vmatmul.mubr.bf16.gmra.mrb[0].mxu0 %v3725
    %v3855 = vpop.f32.mrb[0].mxu0
    %v3856 = vadd.f32 %v374, %v3855
    %v3857 = vpop.f32.mrb[0].mxu0
    %v3858 = vpop.f32.mrb[0].mxu0
    %v3859 = vpop.f32.mrb[0].mxu0
    %3860 = vdwg.mxu0
    %v3861 = vmul.f32 %v3813, %v3856
    %v3862 = vadd.f32 %v3719, %v3861
    %v3863 = vtanh.pop %v3862
    %v3864 = vsub.f32 1.0, %v3820
    %v3865 = vmul.f32 %v3864, %v3863
    %v3866 = vmul.f32 %v3820, %v3449
    %v3867 = vadd.f32 %v3865, %v3866
    %v3868 = vpack.c.bf16 %v3867, %v3867
    %v3869 = vld [vmem:[%s9] sm:$0xf]
    %v3870 = vld [vmem:[%s9 + $0x4] sm:$0xf]
    %v3871 = vld [vmem:[%s9 + $0x8] sm:$0xf]
    %v3872 = vld [vmem:[%s9 + $0xc] sm:$0xf]
    %v3873 = vld [vmem:[%s10] sm:$0x1]
    %v3875 = vlaneseq
    %v3876 = vshrl.u32 %v3875, 7
    %v3877 = vsub.s32 0, %v3876
    %v3878 = vrot.slane %v3873, %v3877
    %v3884 = vunpack.c.l.b16 %v3869
    %v3885 = vunpack.c.l.b16 %v3870
    %v3886 = vunpack.c.l.b16 %v3871
    %v3887 = vunpack.c.l.b16 %v3872
    %v3888 = vpack.c.b16 %v3885, %v3884
    %v3889 = vpack.c.b16 %v3887, %v3886
    %v3893 = vsel %vm156, %v3868, 0
    %3895 = vmatprep.subr.bf16.mxu0 0
    %3896 = vmatpush1.bf16.msra.mxu0 %v3888
    %3897 = vmatprep.subr.bf16.mxu0 0
    %3898 = vmatpush1.bf16.msra.mxu0 %v3889
    %3899 = vmatprep.subr.bf16.mxu0 0
    %3900 = vmatpush1.bf16.msra.mxu0 0
    %3901 = vmatprep.subr.bf16.mxu0 0
    %3902 = vmatpush1.bf16.msra.mxu0 0
    %3903 = vmatprep.subr.bf16.mxu0 0
    %3904 = vmatpush1.bf16.msra.mxu0 0
    %3905 = vmatprep.subr.bf16.mxu0 0
    %3906 = vmatpush1.bf16.msra.mxu0 0
    %3907 = vmatprep.subr.bf16.mxu0 0
    %3908 = vmatpush1.bf16.msra.mxu0 0
    %3909 = vmatprep.subr.bf16.mxu0 0
    %3910 = vmatpush1.bf16.msra.mxu0 0
    %3911 = vmatprep.subr.bf16.mxu0 0
    %3912 = vmatpush1.bf16.msra.mxu0 0
    %3913 = vmatprep.subr.bf16.mxu0 0
    %3914 = vmatpush1.bf16.msra.mxu0 0
    %3915 = vmatprep.subr.bf16.mxu0 0
    %3916 = vmatpush1.bf16.msra.mxu0 0
    %3917 = vmatprep.subr.bf16.mxu0 0
    %3918 = vmatpush1.bf16.msra.mxu0 0
    %3919 = vmatprep.subr.bf16.mxu0 0
    %3920 = vmatpush1.bf16.msra.mxu0 0
    %3921 = vmatprep.subr.bf16.mxu0 0
    %3922 = vmatpush1.bf16.msra.mxu0 0
    %3923 = vmatprep.subr.bf16.mxu0 0
    %3924 = vmatpush1.bf16.msra.mxu0 0
    %3925 = vmatprep.subr.bf16.mxu0 0
    %3926 = vmatpush1.bf16.msra.mxu0 0
    %3927 = vmatprep.mubr.bf16.mxu0 0
    %3928 = vmatmul.mubr.bf16.gmra.mrb[0].mxu0 %v3893
    %v3929 = vpop.f32.mrb[0].mxu0
    %v3930 = vadd.f32 %v3878, %v3929
    %v3931 = vpop.f32.mrb[0].mxu0
    %v3932 = vpop.f32.mrb[0].mxu0
    %v3933 = vpop.f32.mrb[0].mxu0
    %3934 = vdwg.mxu0
    %vm3935 = vcmask 17408
    %3936 = vst.msk [vmem:[#allocation6] sm:$0x3] %vm3935, %v3930
    // Predicated region
    $region50: #{gru_forward.1} parent=1 // pred_check
      _
    $region51: #{gru_forward.1} parent=1 // pred_check_branch
      %3938 = sbr.rel (0) target = $region53
    $region52: #{gru_forward.1} parent=1 // pred_region
      %s3940 = ssub.s32 32, 32
      %3941 = vsyncadd [#allocation5], %s3940
      %s3943 = sshll.u32 [#allocation6], 4
      %s3944 = int_to_ptr.vmem [resolvable:$true] %s3943
      %3946 = dma.vmem_to_hbm [thread:$0]  %s3944, 32, %s11, [#allocation5]
    $region53: #{gru_forward.1} parent=1 // pred_fallthru
      _
    // Predicated region
    $region54: #{gru_forward.1} parent=1 // pred_check
      _
    $region55: #{gru_forward.1} parent=1 // pred_check_branch
      %3948 = sbr.rel (0) target = $region57
    $region56: #{gru_forward.1} parent=1 // pred_region
      %3949 = dma.done [#allocation5], 32
    $region57: #{gru_forward.1} parent=1 // pred_fallthru
      _
    %3950 = vsyncpa [#allocation4], 1
    %3951 = vsyncpa [#allocation5], 1

</llo_original>
